<compile_context>
chip_gen: v5e
topology: v5e:2x2
jax: 0.10.0
libtpu: 0.0.40
codegen_flags: <defaults>
</compile_context>

<pallas_src>
import jax
import jax.numpy as jnp
from jax.experimental import pallas as pl
from jax.experimental.pallas import tpu as pltpu

# The reference file uses module-level constants LATENT_H / LATENT_W.
LATENT_H = 4
LATENT_W = 4


def _hardswish(x):
    # PyTorch hardswish: x * relu6(x + 3) / 6
    return x * jnp.clip(x + 3.0, 0.0, 6.0) * (1.0 / 6.0)


# ----------------------------------------------------------------------------
# Kernel 1: fused pointwise chain (all conv-transpose / 1x1 / BN stages).
# ----------------------------------------------------------------------------
def _pointwise_chain_kernel(*refs):
    x_ref, *wb_refs, o_ref = refs
    v = x_ref[0]                                          # (H0*W0, Cin) bf16
    for i in range(0, len(wb_refs), 2):
        w_ref, b_ref = wb_refs[i], wb_refs[i + 1]
        acc = jnp.dot(v, w_ref[...], preferred_element_type=jnp.float32)
        v = _hardswish(acc + b_ref[...]).astype(jnp.bfloat16)
    o_ref[0] = v                                          # lane-dense store


def _pointwise_chain_call(x, weights, biases):
    n, m, c_in = x.shape
    n_out = weights[-1].shape[1]

    def full_spec(a):
        return pl.BlockSpec(a.shape, lambda b: (0,) * a.ndim)

    in_specs = [pl.BlockSpec((1, m, c_in), lambda b: (b, 0, 0))]
    args = [x]
    for w, bias in zip(weights, biases):
        in_specs += [full_spec(w), full_spec(bias)]
        args += [w, bias]

    flops = 2 * n * m * sum(int(w.shape[0]) * int(w.shape[1]) for w in weights)
    bytes_accessed = sum(int(a.size) * a.dtype.itemsize for a in args)
    bytes_accessed += n * m * n_out * 2

    return pl.pallas_call(
        _pointwise_chain_kernel,
        out_shape=jax.ShapeDtypeStruct((n, m, n_out), jnp.bfloat16),
        grid=(n,),
        in_specs=in_specs,
        out_specs=pl.BlockSpec((1, m, n_out), lambda b: (b, 0, 0)),
        compiler_params=pltpu.CompilerParams(dimension_semantics=("parallel",)),
        cost_estimate=pl.CostEstimate(flops=int(flops), transcendentals=0,
                                      bytes_accessed=int(bytes_accessed)),
    )(*args)


# ----------------------------------------------------------------------------
# Kernel 2: fused head  Conv3x3(pad 1) + hardswish + Conv3x3(pad 1).
#   Activations live in an (H, W*C) layout.  w{1,2}_ref[kh] are block-Toeplitz
#   matrices folding the kw taps + zero padding in W; s_ref[kh] are 0/1 row
#   selection matrices implementing the kh shift + zero padding in H.
# ----------------------------------------------------------------------------
def _head_kernel(x_ref, s_ref, w1_ref, b1_ref, w2_ref, b2_ref, o_ref):
    def conv3x3(v, w_ref, b_ref):
        acc = None
        for kh in range(3):
            vs = jnp.dot(s_ref[kh], v, preferred_element_type=jnp.float32)
            vs = vs.astype(jnp.bfloat16)   # exact: 0/1 selection of bf16 rows
            t = jnp.dot(vs, w_ref[kh], preferred_element_type=jnp.float32)
            acc = t if acc is None else acc + t
        return acc + b_ref[...]

    x = x_ref[0]                                           # (H, W*Cin) bf16
    h = _hardswish(conv3x3(x, w1_ref, b1_ref)).astype(jnp.bfloat16)
    o_ref[0] = conv3x3(h, w2_ref, b2_ref).astype(o_ref.dtype)


def _head_call(x, s_mats, w1, b1, w2, b2):
    n, hh, wc = x.shape
    n_mid = w1.shape[-1]
    n_out = w2.shape[-1]

    def full_spec(a):
        return pl.BlockSpec(a.shape, lambda b: (0,) * a.ndim)

    flops = 2 * n * 3 * (hh * hh * wc + hh * wc * n_mid
                         + hh * hh * n_mid + hh * n_mid * n_out)
    bytes_accessed = sum(int(a.size) * a.dtype.itemsize
                         for a in (x, s_mats, w1, b1, w2, b2))
    bytes_accessed += n * hh * n_out * 4

    return pl.pallas_call(
        _head_kernel,
        out_shape=jax.ShapeDtypeStruct((n, hh, n_out), jnp.float32),
        grid=(n,),
        in_specs=[pl.BlockSpec((1, hh, wc), lambda b: (b, 0, 0)),
                  full_spec(s_mats), full_spec(w1), full_spec(b1),
                  full_spec(w2), full_spec(b2)],
        out_specs=pl.BlockSpec((1, hh, n_out), lambda b: (b, 0, 0)),
        compiler_params=pltpu.CompilerParams(dimension_semantics=("parallel",)),
        cost_estimate=pl.CostEstimate(flops=int(flops), transcendentals=0,
                                      bytes_accessed=int(bytes_accessed)),
    )(x, s_mats, w1, b1, w2, b2)


# ----------------------------------------------------------------------------
# Trace-time weight packing helpers (operate on tiny parameter tensors).
# ----------------------------------------------------------------------------
def _convt_tap_weight(w_t):
    """ConvTranspose2d(k=2,s=2) weight (Cin, Cout, 2, 2) -> (Cin, 4*Cout).
    Output column order (kh, kw, cout), cout fastest."""
    cin, cout = w_t.shape[0], w_t.shape[1]
    return jnp.transpose(w_t, (0, 2, 3, 1)).reshape(cin, 4 * cout)


def _band_weights(w_conv, width, cout_pad):
    """Conv2d(k=3,p=1) weight (Cout, Cin, 3, 3) -> (3, width*Cin, width*cout_pad)
    block-Toeplitz matrices; tap kh multiplies the activation rows shifted by
    kh-1, the kw taps and W-boundary zero padding live in the band structure."""
    cout, cin = w_conv.shape[0], w_conv.shape[1]
    mats = []
    for kh in range(3):
        mat = jnp.zeros((width * cin, width * cout_pad), jnp.float32)
        for kw in range(3):
            blk = jnp.pad(w_conv[:, :, kh, kw].T, ((0, 0), (0, cout_pad - cout)))
            shift = jnp.eye(width, k=1 - kw, dtype=jnp.float32)  # [w+kw-1, w] = 1
            mat = mat + jnp.kron(shift, blk)
        mats.append(mat)
    return jnp.stack(mats)


# ----------------------------------------------------------------------------
# Deterministic parameter initialization (mirrors __init__ / _reset_parameters).
# Note: bound = sqrt(6/fan_in) "he_uniform"; PyTorch's kaiming_uniform_(a=sqrt(5))
# default would use a smaller bound — forward math is unaffected.
# ----------------------------------------------------------------------------
def _he_uniform(key, shape, fan_in):
    bound = (6.0 / fan_in) ** 0.5
    return jax.random.uniform(key, shape, jnp.float32, -bound, bound)


def init_decoder_params(key, img_channels, latent_dim, up_channels):
    keys = jax.random.split(key, 4 + len(up_channels))
    p = {}
    # projection: ConvTranspose2d(latent, latent, k=2, s=2), bias -> ones_
    p["proj_ct_w"] = _he_uniform(keys[0], (latent_dim, latent_dim, 2, 2), latent_dim * 4)
    p["proj_ct_b"] = jnp.ones((latent_dim,), jnp.float32)
    # Conv2d(latent, latent, k=1, bias=False)
    p["proj_conv1_w"] = _he_uniform(keys[1], (latent_dim, latent_dim, 1, 1), latent_dim)
    # BatchNorm2d(latent) eval-mode with fresh stats: gamma=1, beta=0, mean=0, var=1
    eps = 1e-5
    p["bn_scale"] = jnp.full((latent_dim,), 1.0 / (1.0 + eps) ** 0.5, jnp.float32)
    p["bn_shift"] = jnp.zeros((latent_dim,), jnp.float32)
    # Up stages
    up = []
    cin = latent_dim
    for i, cout in enumerate(up_channels):
        up.append({"w": _he_uniform(keys[2 + i], (cin, cout, 2, 2), cout * 4),
                   "b": jnp.zeros((cout,), jnp.float32)})
        cin = cout
    p["up"] = up
    # head: Conv3x3(c,c) bias->ones_, hardswish, Conv3x3(c,img) bias->zeros_
    c = up_channels[-1]
    p["head0_w"] = _he_uniform(keys[-2], (c, c, 3, 3), c * 9)
    p["head0_b"] = jnp.ones((c,), jnp.float32)
    p["head2_w"] = _he_uniform(keys[-1], (img_channels, c, 3, 3), c * 9)
    p["head2_b"] = jnp.zeros((img_channels,), jnp.float32)
    return p


# ----------------------------------------------------------------------------
# Forward pass (input/output NCHW, like the PyTorch module).
# ----------------------------------------------------------------------------
def decoder_forward(params, x_nchw):
    n, c_lat, h0, w0 = x_nchw.shape
    m = h0 * w0
    up = params["up"]
    n_ct = 1 + len(up)                       # projection ConvT + one per UpBlock
    c_last = up[-1]["b"].shape[0]
    c_img = params["head2_b"].shape[0]
    bf16 = jnp.bfloat16

    # ---- build fused block-diagonal weights for the pointwise chain ----------
    chain = []
    chain.append((_convt_tap_weight(params["proj_ct_w"]),
                  jnp.tile(params["proj_ct_b"], 4)))
    taps = 4
    w1x1 = params["proj_conv1_w"].reshape(c_lat, c_lat).T * params["bn_scale"][None, :]
    chain.append((jnp.kron(jnp.eye(taps, dtype=jnp.float32), w1x1),
                  jnp.tile(params["bn_shift"], taps)))
    # TODO(synk): UpBlock (inverted-residual upsample with expand_factor/dropout)
    # is defined outside base_ae.py; stand-in = ConvTranspose2d(k=2, s=2) + hardswish
    # with matching channels and the same 2x spatial upsampling.
    for blk in up:
        chain.append((jnp.kron(jnp.eye(taps, dtype=jnp.float32),
                               _convt_tap_weight(blk["w"])),
                      jnp.tile(blk["b"], 4 * taps)))
        taps *= 4

    weights = [w.astype(bf16) for w, _ in chain]
    biases = [b.reshape(1, -1).astype(jnp.float32) for _, b in chain]

    # kernel 1: whole pointwise chain fused (taps carried as channel groups)
    x = jnp.transpose(x_nchw, (0, 2, 3, 1)).reshape(n, m, c_lat).astype(bf16)
    y = _pointwise_chain_call(x, weights, biases)          # (n, m, taps*c_last)

    # ---- de-interleave ConvT taps into spatial NHWC (tiny XLA shuffle) -------
    hh, ww, rest = h0, w0, taps * c_last
    y = y.reshape(n, hh, ww, rest)
    for _ in range(n_ct):
        rest //= 4
        y = y.reshape(n, hh, ww, 2, 2, rest)
        y = jnp.transpose(y, (0, 1, 3, 2, 4, 5))
        hh, ww = hh * 2, ww * 2
        y = y.reshape(n, hh, ww, rest)
    y = y.reshape(n, hh, ww * c_last)                      # (n, H, W*C) bf16

    # ---- kernel 2: fused head (two 3x3 convs), lane-padded output ------------
    c_pad = ((c_img + 3) // 4) * 4                         # 32*c_pad -> 128 lanes
    w_h1 = _band_weights(params["head0_w"], ww, c_last).astype(bf16)
    b_h1 = jnp.tile(params["head0_b"], ww).reshape(1, -1).astype(jnp.float32)
    w_h2 = _band_weights(params["head2_w"], ww, c_pad).astype(bf16)
    b_h2 = jnp.tile(jnp.pad(params["head2_b"], (0, c_pad - c_img)),
                    ww).reshape(1, -1).astype(jnp.float32)
    s_mats = jnp.stack([jnp.eye(hh, k=kh - 1, dtype=jnp.float32)
                        for kh in range(3)]).astype(bf16)

    out = _head_call(y, s_mats, w_h1, b_h1, w_h2, b_h2)    # (n, H, W*c_pad) f32
    out = out.reshape(n, hh, ww, c_pad)[..., :c_img]
    return jnp.transpose(out, (0, 3, 1, 2))                # NHWC -> NCHW


if __name__ == "__main__":
    img_channels = 3
    latent_dim = 8
    up_channels = (16, 8)

    key = jax.random.PRNGKey(0)
    kx, kp = jax.random.split(key)
    x = jax.random.normal(kx, (2, latent_dim, LATENT_H, LATENT_W), jnp.float32)
    params = init_decoder_params(kp, img_channels, latent_dim, up_channels)

    out = jax.jit(decoder_forward)(params, x)
    jax.block_until_ready(out)

    upscale = 2 ** (1 + len(up_channels))   # projection ConvT + one per UpBlock
    expected = (2, img_channels, LATENT_H * upscale, LATENT_W * upscale)
    assert out.shape == expected, (out.shape, expected)
    assert jnp.all(jnp.isfinite(out))
    print("KERNEL_OK")
</pallas_src>

<mosaic_0001>
module attributes {stable_mosaic.version = 11 : i64} {
  func.func @_pointwise_chain_kernel(%arg0: i32, %arg1: memref<1x16x8xbf16, #tpu.memory_space<vmem>>, %arg2: memref<8x32xbf16, #tpu.memory_space<vmem>>, %arg3: memref<1x32xf32, #tpu.memory_space<vmem>>, %arg4: memref<32x32xbf16, #tpu.memory_space<vmem>>, %arg5: memref<1x32xf32, #tpu.memory_space<vmem>>, %arg6: memref<32x256xbf16, #tpu.memory_space<vmem>>, %arg7: memref<1x256xf32, #tpu.memory_space<vmem>>, %arg8: memref<256x512xbf16, #tpu.memory_space<vmem>>, %arg9: memref<1x512xf32, #tpu.memory_space<vmem>>, %arg10: memref<1x16x512xbf16, #tpu.memory_space<vmem>>) attributes {dimension_semantics = [#tpu.dimension_semantics<parallel>], iteration_bounds = array<i64: 2>, scalar_prefetch = 0 : i64, scratch_operands = 0 : i64, tpu.core_type = #tpu.core_type<tc>, window_params = [{transform_indices = @transform_0, window_bounds = array<i64: 1, 16, 8>}, {pipeline_mode = #tpu.pipeline_mode<synchronous>, transform_indices = @transform_1, window_bounds = array<i64: 8, 32>}, {pipeline_mode = #tpu.pipeline_mode<synchronous>, transform_indices = @transform_2, window_bounds = array<i64: 1, 32>}, {pipeline_mode = #tpu.pipeline_mode<synchronous>, transform_indices = @transform_3, window_bounds = array<i64: 32, 32>}, {pipeline_mode = #tpu.pipeline_mode<synchronous>, transform_indices = @transform_4, window_bounds = array<i64: 1, 32>}, {pipeline_mode = #tpu.pipeline_mode<synchronous>, transform_indices = @transform_5, window_bounds = array<i64: 32, 256>}, {pipeline_mode = #tpu.pipeline_mode<synchronous>, transform_indices = @transform_6, window_bounds = array<i64: 1, 256>}, {pipeline_mode = #tpu.pipeline_mode<synchronous>, transform_indices = @transform_7, window_bounds = array<i64: 256, 512>}, {pipeline_mode = #tpu.pipeline_mode<synchronous>, transform_indices = @transform_8, window_bounds = array<i64: 1, 512>}, {transform_indices = @transform_9, window_bounds = array<i64: 1, 16, 512>}]} {
    %c0 = arith.constant 0 : index
    %c0_0 = arith.constant 0 : index
    %c0_1 = arith.constant 0 : index
    %0 = vector.load %arg1[%c0, %c0_0, %c0_1] : memref<1x16x8xbf16, #tpu.memory_space<vmem>>, vector<1x16x8xbf16>
    %1 = vector.shape_cast %0 : vector<1x16x8xbf16> to vector<16x8xbf16>
    %c0_2 = arith.constant 0 : index
    %c0_3 = arith.constant 0 : index
    %2 = vector.load %arg2[%c0_2, %c0_3] : memref<8x32xbf16, #tpu.memory_space<vmem>>, vector<8x32xbf16>
    %cst = arith.constant dense<0.000000e+00> : vector<16x32xf32>
    %3 = tpu.matmul %1, %2, %cst {dimension_numbers = #tpu.dot_dimension_numbers<[1], [0], [0], [1], [0, 0, 1, 1], [], []>} : vector<16x8xbf16>, vector<8x32xbf16>, vector<16x32xf32> -> vector<16x32xf32>
    %c0_4 = arith.constant 0 : index
    %c0_5 = arith.constant 0 : index
    %4 = vector.load %arg3[%c0_4, %c0_5] : memref<1x32xf32, #tpu.memory_space<vmem>>, vector<1x32xf32>
    %5 = vector.broadcast %4 : vector<1x32xf32> to vector<16x32xf32>
    %6 = arith.addf %3, %5 : vector<16x32xf32>
    %cst_6 = arith.constant 3.000000e+00 : f32
    %7 = vector.broadcast %cst_6 : f32 to vector<16x32xf32>
    %8 = arith.addf %6, %7 : vector<16x32xf32>
    %cst_7 = arith.constant 0.000000e+00 : f32
    %cst_8 = arith.constant 6.000000e+00 : f32
    %9 = vector.broadcast %cst_7 : f32 to vector<16x32xf32>
    %10 = arith.maximumf %9, %8 : vector<16x32xf32>
    %11 = vector.broadcast %cst_8 : f32 to vector<16x32xf32>
    %12 = arith.minimumf %11, %10 : vector<16x32xf32>
    %13 = arith.mulf %6, %12 : vector<16x32xf32>
    %cst_9 = arith.constant 0.166666672 : f32
    %14 = vector.broadcast %cst_9 : f32 to vector<16x32xf32>
    %15 = arith.mulf %13, %14 : vector<16x32xf32>
    %16 = arith.truncf %15 : vector<16x32xf32> to vector<16x32xbf16>
    %c0_10 = arith.constant 0 : index
    %c0_11 = arith.constant 0 : index
    %17 = vector.load %arg4[%c0_10, %c0_11] : memref<32x32xbf16, #tpu.memory_space<vmem>>, vector<32x32xbf16>
    %cst_12 = arith.constant dense<0.000000e+00> : vector<16x32xf32>
    %18 = tpu.matmul %16, %17, %cst_12 {dimension_numbers = #tpu.dot_dimension_numbers<[1], [0], [0], [1], [0, 0, 1, 1], [], []>} : vector<16x32xbf16>, vector<32x32xbf16>, vector<16x32xf32> -> vector<16x32xf32>
    %c0_13 = arith.constant 0 : index
    %c0_14 = arith.constant 0 : index
    %19 = vector.load %arg5[%c0_13, %c0_14] : memref<1x32xf32, #tpu.memory_space<vmem>>, vector<1x32xf32>
    %20 = vector.broadcast %19 : vector<1x32xf32> to vector<16x32xf32>
    %21 = arith.addf %18, %20 : vector<16x32xf32>
    %cst_15 = arith.constant 3.000000e+00 : f32
    %22 = vector.broadcast %cst_15 : f32 to vector<16x32xf32>
    %23 = arith.addf %21, %22 : vector<16x32xf32>
    %cst_16 = arith.constant 0.000000e+00 : f32
    %cst_17 = arith.constant 6.000000e+00 : f32
    %24 = vector.broadcast %cst_16 : f32 to vector<16x32xf32>
    %25 = arith.maximumf %24, %23 : vector<16x32xf32>
    %26 = vector.broadcast %cst_17 : f32 to vector<16x32xf32>
    %27 = arith.minimumf %26, %25 : vector<16x32xf32>
    %28 = arith.mulf %21, %27 : vector<16x32xf32>
    %cst_18 = arith.constant 0.166666672 : f32
    %29 = vector.broadcast %cst_18 : f32 to vector<16x32xf32>
    %30 = arith.mulf %28, %29 : vector<16x32xf32>
    %31 = arith.truncf %30 : vector<16x32xf32> to vector<16x32xbf16>
    %c0_19 = arith.constant 0 : index
    %c0_20 = arith.constant 0 : index
    %32 = vector.load %arg6[%c0_19, %c0_20] : memref<32x256xbf16, #tpu.memory_space<vmem>>, vector<32x256xbf16>
    %cst_21 = arith.constant dense<0.000000e+00> : vector<16x256xf32>
    %33 = tpu.matmul %31, %32, %cst_21 {dimension_numbers = #tpu.dot_dimension_numbers<[1], [0], [0], [1], [0, 0, 1, 1], [], []>} : vector<16x32xbf16>, vector<32x256xbf16>, vector<16x256xf32> -> vector<16x256xf32>
    %c0_22 = arith.constant 0 : index
    %c0_23 = arith.constant 0 : index
    %34 = vector.load %arg7[%c0_22, %c0_23] : memref<1x256xf32, #tpu.memory_space<vmem>>, vector<1x256xf32>
    %35 = vector.broadcast %34 : vector<1x256xf32> to vector<16x256xf32>
    %36 = arith.addf %33, %35 : vector<16x256xf32>
    %cst_24 = arith.constant 3.000000e+00 : f32
    %37 = vector.broadcast %cst_24 : f32 to vector<16x256xf32>
    %38 = arith.addf %36, %37 : vector<16x256xf32>
    %cst_25 = arith.constant 0.000000e+00 : f32
    %cst_26 = arith.constant 6.000000e+00 : f32
    %39 = vector.broadcast %cst_25 : f32 to vector<16x256xf32>
    %40 = arith.maximumf %39, %38 : vector<16x256xf32>
    %41 = vector.broadcast %cst_26 : f32 to vector<16x256xf32>
    %42 = arith.minimumf %41, %40 : vector<16x256xf32>
    %43 = arith.mulf %36, %42 : vector<16x256xf32>
    %cst_27 = arith.constant 0.166666672 : f32
    %44 = vector.broadcast %cst_27 : f32 to vector<16x256xf32>
    %45 = arith.mulf %43, %44 : vector<16x256xf32>
    %46 = arith.truncf %45 : vector<16x256xf32> to vector<16x256xbf16>
    %c0_28 = arith.constant 0 : index
    %c0_29 = arith.constant 0 : index
    %47 = vector.load %arg8[%c0_28, %c0_29] : memref<256x512xbf16, #tpu.memory_space<vmem>>, vector<256x512xbf16>
    %cst_30 = arith.constant dense<0.000000e+00> : vector<16x512xf32>
    %48 = tpu.matmul %46, %47, %cst_30 {dimension_numbers = #tpu.dot_dimension_numbers<[1], [0], [0], [1], [0, 0, 1, 1], [], []>} : vector<16x256xbf16>, vector<256x512xbf16>, vector<16x512xf32> -> vector<16x512xf32>
    %c0_31 = arith.constant 0 : index
    %c0_32 = arith.constant 0 : index
    %49 = vector.load %arg9[%c0_31, %c0_32] : memref<1x512xf32, #tpu.memory_space<vmem>>, vector<1x512xf32>
    %50 = vector.broadcast %49 : vector<1x512xf32> to vector<16x512xf32>
    %51 = arith.addf %48, %50 : vector<16x512xf32>
    %cst_33 = arith.constant 3.000000e+00 : f32
    %52 = vector.broadcast %cst_33 : f32 to vector<16x512xf32>
    %53 = arith.addf %51, %52 : vector<16x512xf32>
    %cst_34 = arith.constant 0.000000e+00 : f32
    %cst_35 = arith.constant 6.000000e+00 : f32
    %54 = vector.broadcast %cst_34 : f32 to vector<16x512xf32>
    %55 = arith.maximumf %54, %53 : vector<16x512xf32>
    %56 = vector.broadcast %cst_35 : f32 to vector<16x512xf32>
    %57 = arith.minimumf %56, %55 : vector<16x512xf32>
    %58 = arith.mulf %51, %57 : vector<16x512xf32>
    %cst_36 = arith.constant 0.166666672 : f32
    %59 = vector.broadcast %cst_36 : f32 to vector<16x512xf32>
    %60 = arith.mulf %58, %59 : vector<16x512xf32>
    %61 = arith.truncf %60 : vector<16x512xf32> to vector<16x512xbf16>
    %c0_37 = arith.constant 0 : index
    %c0_38 = arith.constant 0 : index
    %c0_39 = arith.constant 0 : index
    %62 = vector.load %arg10[%c0_37, %c0_38, %c0_39] : memref<1x16x512xbf16, #tpu.memory_space<vmem>>, vector<1x16x512xbf16>
    %63 = vector.shape_cast %62 : vector<1x16x512xbf16> to vector<16x512xbf16>
    %64 = vector.shape_cast %61 : vector<16x512xbf16> to vector<1x16x512xbf16>
    tpu.vector_store %arg10[%c0_37, %c0_38, %c0_39], %64 {strides = array<i32>} : memref<1x16x512xbf16, #tpu.memory_space<vmem>>, vector<1x16x512xbf16>,
    return
  }
  func.func @transform_0(%arg0: i32) -> (i32, i32, i32) {
    %c0_i32 = arith.constant 0 : i32
    %c0_i32_0 = arith.constant 0 : i32
    %c0_i32_1 = arith.constant 0 : i32
    return %arg0, %c0_i32, %c0_i32_0 : i32, i32, i32
  }
  func.func @transform_1(%arg0: i32) -> (i32, i32) {
    %c0_i32 = arith.constant 0 : i32
    %c0_i32_0 = arith.constant 0 : i32
    %c0_i32_1 = arith.constant 0 : i32
    return %c0_i32, %c0_i32_0 : i32, i32
  }
  func.func @transform_2(%arg0: i32) -> (i32, i32) {
    %c0_i32 = arith.constant 0 : i32
    %c0_i32_0 = arith.constant 0 : i32
    %c0_i32_1 = arith.constant 0 : i32
    return %c0_i32, %c0_i32_0 : i32, i32
  }
  func.func @transform_3(%arg0: i32) -> (i32, i32) {
    %c0_i32 = arith.constant 0 : i32
    %c0_i32_0 = arith.constant 0 : i32
    %c0_i32_1 = arith.constant 0 : i32
    return %c0_i32, %c0_i32_0 : i32, i32
  }
  func.func @transform_4(%arg0: i32) -> (i32, i32) {
    %c0_i32 = arith.constant 0 : i32
    %c0_i32_0 = arith.constant 0 : i32
    %c0_i32_1 = arith.constant 0 : i32
    return %c0_i32, %c0_i32_0 : i32, i32
  }
  func.func @transform_5(%arg0: i32) -> (i32, i32) {
    %c0_i32 = arith.constant 0 : i32
    %c0_i32_0 = arith.constant 0 : i32
    %c0_i32_1 = arith.constant 0 : i32
    return %c0_i32, %c0_i32_0 : i32, i32
  }
  func.func @transform_6(%arg0: i32) -> (i32, i32) {
    %c0_i32 = arith.constant 0 : i32
    %c0_i32_0 = arith.constant 0 : i32
    %c0_i32_1 = arith.constant 0 : i32
    return %c0_i32, %c0_i32_0 : i32, i32
  }
  func.func @transform_7(%arg0: i32) -> (i32, i32) {
    %c0_i32 = arith.constant 0 : i32
    %c0_i32_0 = arith.constant 0 : i32
    %c0_i32_1 = arith.constant 0 : i32
    return %c0_i32, %c0_i32_0 : i32, i32
  }
  func.func @transform_8(%arg0: i32) -> (i32, i32) {
    %c0_i32 = arith.constant 0 : i32
    %c0_i32_0 = arith.constant 0 : i32
    %c0_i32_1 = arith.constant 0 : i32
    return %c0_i32, %c0_i32_0 : i32, i32
  }
  func.func @transform_9(%arg0: i32) -> (i32, i32, i32) {
    %c0_i32 = arith.constant 0 : i32
    %c0_i32_0 = arith.constant 0 : i32
    %c0_i32_1 = arith.constant 0 : i32
    return %arg0, %c0_i32, %c0_i32_0 : i32, i32, i32
  }
}

module attributes {stable_mosaic.version = 11 : i64} {
  func.func @_head_kernel(%arg0: i32, %arg1: memref<1x32x256xbf16, #tpu.memory_space<vmem>>, %arg2: memref<3x32x32xbf16, #tpu.memory_space<vmem>>, %arg3: memref<3x256x256xbf16, #tpu.memory_space<vmem>>, %arg4: memref<1x256xf32, #tpu.memory_space<vmem>>, %arg5: memref<3x256x128xbf16, #tpu.memory_space<vmem>>, %arg6: memref<1x128xf32, #tpu.memory_space<vmem>>, %arg7: memref<1x32x128xf32, #tpu.memory_space<vmem>>) attributes {dimension_semantics = [#tpu.dimension_semantics<parallel>], iteration_bounds = array<i64: 2>, scalar_prefetch = 0 : i64, scratch_operands = 0 : i64, tpu.core_type = #tpu.core_type<tc>, window_params = [{transform_indices = @transform_0, window_bounds = array<i64: 1, 32, 256>}, {pipeline_mode = #tpu.pipeline_mode<synchronous>, transform_indices = @transform_1, window_bounds = array<i64: 3, 32, 32>}, {pipeline_mode = #tpu.pipeline_mode<synchronous>, transform_indices = @transform_2, window_bounds = array<i64: 3, 256, 256>}, {pipeline_mode = #tpu.pipeline_mode<synchronous>, transform_indices = @transform_3, window_bounds = array<i64: 1, 256>}, {pipeline_mode = #tpu.pipeline_mode<synchronous>, transform_indices = @transform_4, window_bounds = array<i64: 3, 256, 128>}, {pipeline_mode = #tpu.pipeline_mode<synchronous>, transform_indices = @transform_5, window_bounds = array<i64: 1, 128>}, {transform_indices = @transform_6, window_bounds = array<i64: 1, 32, 128>}]} {
    %c0 = arith.constant 0 : index
    %c0_0 = arith.constant 0 : index
    %c0_1 = arith.constant 0 : index
    %0 = vector.load %arg1[%c0, %c0_0, %c0_1] : memref<1x32x256xbf16, #tpu.memory_space<vmem>>, vector<1x32x256xbf16>
    %1 = vector.shape_cast %0 : vector<1x32x256xbf16> to vector<32x256xbf16>
    %c0_2 = arith.constant 0 : index
    %c0_3 = arith.constant 0 : index
    %c0_4 = arith.constant 0 : index
    %2 = vector.load %arg2[%c0_2, %c0_3, %c0_4] : memref<3x32x32xbf16, #tpu.memory_space<vmem>>, vector<1x32x32xbf16>
    %3 = vector.shape_cast %2 : vector<1x32x32xbf16> to vector<32x32xbf16>
    %cst = arith.constant dense<0.000000e+00> : vector<32x256xf32>
    %4 = tpu.matmul %3, %1, %cst {dimension_numbers = #tpu.dot_dimension_numbers<[1], [0], [0], [1], [0, 0, 1, 1], [], []>} : vector<32x32xbf16>, vector<32x256xbf16>, vector<32x256xf32> -> vector<32x256xf32>
    %5 = arith.truncf %4 : vector<32x256xf32> to vector<32x256xbf16>
    %c0_5 = arith.constant 0 : index
    %c0_6 = arith.constant 0 : index
    %c0_7 = arith.constant 0 : index
    %6 = vector.load %arg3[%c0_5, %c0_6, %c0_7] : memref<3x256x256xbf16, #tpu.memory_space<vmem>>, vector<1x256x256xbf16>
    %7 = vector.shape_cast %6 : vector<1x256x256xbf16> to vector<256x256xbf16>
    %cst_8 = arith.constant dense<0.000000e+00> : vector<32x256xf32>
    %8 = tpu.matmul %5, %7, %cst_8 {dimension_numbers = #tpu.dot_dimension_numbers<[1], [0], [0], [1], [0, 0, 1, 1], [], []>} : vector<32x256xbf16>, vector<256x256xbf16>, vector<32x256xf32> -> vector<32x256xf32>
    %c1 = arith.constant 1 : index
    %c0_9 = arith.constant 0 : index
    %c0_10 = arith.constant 0 : index
    %9 = vector.load %arg2[%c1, %c0_9, %c0_10] : memref<3x32x32xbf16, #tpu.memory_space<vmem>>, vector<1x32x32xbf16>
    %10 = vector.shape_cast %9 : vector<1x32x32xbf16> to vector<32x32xbf16>
    %cst_11 = arith.constant dense<0.000000e+00> : vector<32x256xf32>
    %11 = tpu.matmul %10, %1, %cst_11 {dimension_numbers = #tpu.dot_dimension_numbers<[1], [0], [0], [1], [0, 0, 1, 1], [], []>} : vector<32x32xbf16>, vector<32x256xbf16>, vector<32x256xf32> -> vector<32x256xf32>
    %12 = arith.truncf %11 : vector<32x256xf32> to vector<32x256xbf16>
    %c1_12 = arith.constant 1 : index
    %c0_13 = arith.constant 0 : index
    %c0_14 = arith.constant 0 : index
    %13 = vector.load %arg3[%c1_12, %c0_13, %c0_14] : memref<3x256x256xbf16, #tpu.memory_space<vmem>>, vector<1x256x256xbf16>
    %14 = vector.shape_cast %13 : vector<1x256x256xbf16> to vector<256x256xbf16>
    %cst_15 = arith.constant dense<0.000000e+00> : vector<32x256xf32>
    %15 = tpu.matmul %12, %14, %cst_15 {dimension_numbers = #tpu.dot_dimension_numbers<[1], [0], [0], [1], [0, 0, 1, 1], [], []>} : vector<32x256xbf16>, vector<256x256xbf16>, vector<32x256xf32> -> vector<32x256xf32>
    %16 = arith.addf %8, %15 : vector<32x256xf32>
    %c2 = arith.constant 2 : index
    %c0_16 = arith.constant 0 : index
    %c0_17 = arith.constant 0 : index
    %17 = vector.load %arg2[%c2, %c0_16, %c0_17] : memref<3x32x32xbf16, #tpu.memory_space<vmem>>, vector<1x32x32xbf16>
    %18 = vector.shape_cast %17 : vector<1x32x32xbf16> to vector<32x32xbf16>
    %cst_18 = arith.constant dense<0.000000e+00> : vector<32x256xf32>
    %19 = tpu.matmul %18, %1, %cst_18 {dimension_numbers = #tpu.dot_dimension_numbers<[1], [0], [0], [1], [0, 0, 1, 1], [], []>} : vector<32x32xbf16>, vector<32x256xbf16>, vector<32x256xf32> -> vector<32x256xf32>
    %20 = arith.truncf %19 : vector<32x256xf32> to vector<32x256xbf16>
    %c2_19 = arith.constant 2 : index
    %c0_20 = arith.constant 0 : index
    %c0_21 = arith.constant 0 : index
    %21 = vector.load %arg3[%c2_19, %c0_20, %c0_21] : memref<3x256x256xbf16, #tpu.memory_space<vmem>>, vector<1x256x256xbf16>
    %22 = vector.shape_cast %21 : vector<1x256x256xbf16> to vector<256x256xbf16>
    %cst_22 = arith.constant dense<0.000000e+00> : vector<32x256xf32>
    %23 = tpu.matmul %20, %22, %cst_22 {dimension_numbers = #tpu.dot_dimension_numbers<[1], [0], [0], [1], [0, 0, 1, 1], [], []>} : vector<32x256xbf16>, vector<256x256xbf16>, vector<32x256xf32> -> vector<32x256xf32>
    %24 = arith.addf %16, %23 : vector<32x256xf32>
    %c0_23 = arith.constant 0 : index
    %c0_24 = arith.constant 0 : index
    %25 = vector.load %arg4[%c0_23, %c0_24] : memref<1x256xf32, #tpu.memory_space<vmem>>, vector<1x256xf32>
    %26 = vector.broadcast %25 : vector<1x256xf32> to vector<32x256xf32>
    %27 = arith.addf %24, %26 : vector<32x256xf32>
    %cst_25 = arith.constant 3.000000e+00 : f32
    %28 = vector.broadcast %cst_25 : f32 to vector<32x256xf32>
    %29 = arith.addf %27, %28 : vector<32x256xf32>
    %cst_26 = arith.constant 0.000000e+00 : f32
    %cst_27 = arith.constant 6.000000e+00 : f32
    %30 = vector.broadcast %cst_26 : f32 to vector<32x256xf32>
    %31 = arith.maximumf %30, %29 : vector<32x256xf32>
    %32 = vector.broadcast %cst_27 : f32 to vector<32x256xf32>
    %33 = arith.minimumf %32, %31 : vector<32x256xf32>
    %34 = arith.mulf %27, %33 : vector<32x256xf32>
    %cst_28 = arith.constant 0.166666672 : f32
    %35 = vector.broadcast %cst_28 : f32 to vector<32x256xf32>
    %36 = arith.mulf %34, %35 : vector<32x256xf32>
    %37 = arith.truncf %36 : vector<32x256xf32> to vector<32x256xbf16>
    %c0_29 = arith.constant 0 : index
    %c0_30 = arith.constant 0 : index
    %c0_31 = arith.constant 0 : index
    %38 = vector.load %arg2[%c0_29, %c0_30, %c0_31] : memref<3x32x32xbf16, #tpu.memory_space<vmem>>, vector<1x32x32xbf16>
    %39 = vector.shape_cast %38 : vector<1x32x32xbf16> to vector<32x32xbf16>
    %cst_32 = arith.constant dense<0.000000e+00> : vector<32x256xf32>
    %40 = tpu.matmul %39, %37, %cst_32 {dimension_numbers = #tpu.dot_dimension_numbers<[1], [0], [0], [1], [0, 0, 1, 1], [], []>} : vector<32x32xbf16>, vector<32x256xbf16>, vector<32x256xf32> -> vector<32x256xf32>
    %41 = arith.truncf %40 : vector<32x256xf32> to vector<32x256xbf16>
    %c0_33 = arith.constant 0 : index
    %c0_34 = arith.constant 0 : index
    %c0_35 = arith.constant 0 : index
    %42 = vector.load %arg5[%c0_33, %c0_34, %c0_35] : memref<3x256x128xbf16, #tpu.memory_space<vmem>>, vector<1x256x128xbf16>
    %43 = vector.shape_cast %42 : vector<1x256x128xbf16> to vector<256x128xbf16>
    %cst_36 = arith.constant dense<0.000000e+00> : vector<32x128xf32>
    %44 = tpu.matmul %41, %43, %cst_36 {dimension_numbers = #tpu.dot_dimension_numbers<[1], [0], [0], [1], [0, 0, 1, 1], [], []>} : vector<32x256xbf16>, vector<256x128xbf16>, vector<32x128xf32> -> vector<32x128xf32>
    %c1_37 = arith.constant 1 : index
    %c0_38 = arith.constant 0 : index
    %c0_39 = arith.constant 0 : index
    %45 = vector.load %arg2[%c1_37, %c0_38, %c0_39] : memref<3x32x32xbf16, #tpu.memory_space<vmem>>, vector<1x32x32xbf16>
    %46 = vector.shape_cast %45 : vector<1x32x32xbf16> to vector<32x32xbf16>
    %cst_40 = arith.constant dense<0.000000e+00> : vector<32x256xf32>
    %47 = tpu.matmul %46, %37, %cst_40 {dimension_numbers = #tpu.dot_dimension_numbers<[1], [0], [0], [1], [0, 0, 1, 1], [], []>} : vector<32x32xbf16>, vector<32x256xbf16>, vector<32x256xf32> -> vector<32x256xf32>
    %48 = arith.truncf %47 : vector<32x256xf32> to vector<32x256xbf16>
    %c1_41 = arith.constant 1 : index
    %c0_42 = arith.constant 0 : index
    %c0_43 = arith.constant 0 : index
    %49 = vector.load %arg5[%c1_41, %c0_42, %c0_43] : memref<3x256x128xbf16, #tpu.memory_space<vmem>>, vector<1x256x128xbf16>
    %50 = vector.shape_cast %49 : vector<1x256x128xbf16> to vector<256x128xbf16>
    %cst_44 = arith.constant dense<0.000000e+00> : vector<32x128xf32>
    %51 = tpu.matmul %48, %50, %cst_44 {dimension_numbers = #tpu.dot_dimension_numbers<[1], [0], [0], [1], [0, 0, 1, 1], [], []>} : vector<32x256xbf16>, vector<256x128xbf16>, vector<32x128xf32> -> vector<32x128xf32>
    %52 = arith.addf %44, %51 : vector<32x128xf32>
    %c2_45 = arith.constant 2 : index
    %c0_46 = arith.constant 0 : index
    %c0_47 = arith.constant 0 : index
    %53 = vector.load %arg2[%c2_45, %c0_46, %c0_47] : memref<3x32x32xbf16, #tpu.memory_space<vmem>>, vector<1x32x32xbf16>
    %54 = vector.shape_cast %53 : vector<1x32x32xbf16> to vector<32x32xbf16>
    %cst_48 = arith.constant dense<0.000000e+00> : vector<32x256xf32>
    %55 = tpu.matmul %54, %37, %cst_48 {dimension_numbers = #tpu.dot_dimension_numbers<[1], [0], [0], [1], [0, 0, 1, 1], [], []>} : vector<32x32xbf16>, vector<32x256xbf16>, vector<32x256xf32> -> vector<32x256xf32>
    %56 = arith.truncf %55 : vector<32x256xf32> to vector<32x256xbf16>
    %c2_49 = arith.constant 2 : index
    %c0_50 = arith.constant 0 : index
    %c0_51 = arith.constant 0 : index
    %57 = vector.load %arg5[%c2_49, %c0_50, %c0_51] : memref<3x256x128xbf16, #tpu.memory_space<vmem>>, vector<1x256x128xbf16>
    %58 = vector.shape_cast %57 : vector<1x256x128xbf16> to vector<256x128xbf16>
    %cst_52 = arith.constant dense<0.000000e+00> : vector<32x128xf32>
    %59 = tpu.matmul %56, %58, %cst_52 {dimension_numbers = #tpu.dot_dimension_numbers<[1], [0], [0], [1], [0, 0, 1, 1], [], []>} : vector<32x256xbf16>, vector<256x128xbf16>, vector<32x128xf32> -> vector<32x128xf32>
    %60 = arith.addf %52, %59 : vector<32x128xf32>
    %c0_53 = arith.constant 0 : index
    %c0_54 = arith.constant 0 : index
    %61 = vector.load %arg6[%c0_53, %c0_54] : memref<1x128xf32, #tpu.memory_space<vmem>>, vector<1x128xf32>
    %62 = vector.broadcast %61 : vector<1x128xf32> to vector<32x128xf32>
    %63 = arith.addf %60, %62 : vector<32x128xf32>
    %c0_55 = arith.constant 0 : index
    %c0_56 = arith.constant 0 : index
    %c0_57 = arith.constant 0 : index
    %64 = vector.load %arg7[%c0_55, %c0_56, %c0_57] : memref<1x32x128xf32, #tpu.memory_space<vmem>>, vector<1x32x128xf32>
    %65 = vector.shape_cast %64 : vector<1x32x128xf32> to vector<32x128xf32>
    %66 = vector.shape_cast %63 : vector<32x128xf32> to vector<1x32x128xf32>
    tpu.vector_store %arg7[%c0_55, %c0_56, %c0_57], %66 {strides = array<i32>} : memref<1x32x128xf32, #tpu.memory_space<vmem>>, vector<1x32x128xf32>,
    return
  }
  func.func @transform_0(%arg0: i32) -> (i32, i32, i32) {
    %c0_i32 = arith.constant 0 : i32
    %c0_i32_0 = arith.constant 0 : i32
    %c0_i32_1 = arith.constant 0 : i32
    return %arg0, %c0_i32, %c0_i32_0 : i32, i32, i32
  }
  func.func @transform_1(%arg0: i32) -> (i32, i32, i32) {
    %c0_i32 = arith.constant 0 : i32
    %c0_i32_0 = arith.constant 0 : i32
    %c0_i32_1 = arith.constant 0 : i32
    %c0_i32_2 = arith.constant 0 : i32
    return %c0_i32, %c0_i32_0, %c0_i32_1 : i32, i32, i32
  }
  func.func @transform_2(%arg0: i32) -> (i32, i32, i32) {
    %c0_i32 = arith.constant 0 : i32
    %c0_i32_0 = arith.constant 0 : i32
    %c0_i32_1 = arith.constant 0 : i32
    %c0_i32_2 = arith.constant 0 : i32
    return %c0_i32, %c0_i32_0, %c0_i32_1 : i32, i32, i32
  }
  func.func @transform_3(%arg0: i32) -> (i32, i32) {
    %c0_i32 = arith.constant 0 : i32
    %c0_i32_0 = arith.constant 0 : i32
    %c0_i32_1 = arith.constant 0 : i32
    return %c0_i32, %c0_i32_0 : i32, i32
  }
  func.func @transform_4(%arg0: i32) -> (i32, i32, i32) {
    %c0_i32 = arith.constant 0 : i32
    %c0_i32_0 = arith.constant 0 : i32
    %c0_i32_1 = arith.constant 0 : i32
    %c0_i32_2 = arith.constant 0 : i32
    return %c0_i32, %c0_i32_0, %c0_i32_1 : i32, i32, i32
  }
  func.func @transform_5(%arg0: i32) -> (i32, i32) {
    %c0_i32 = arith.constant 0 : i32
    %c0_i32_0 = arith.constant 0 : i32
    %c0_i32_1 = arith.constant 0 : i32
    return %c0_i32, %c0_i32_0 : i32, i32
  }
  func.func @transform_6(%arg0: i32) -> (i32, i32, i32) {
    %c0_i32 = arith.constant 0 : i32
    %c0_i32_0 = arith.constant 0 : i32
    %c0_i32_1 = arith.constant 0 : i32
    return %arg0, %c0_i32, %c0_i32_0 : i32, i32, i32
  }
}

</mosaic_0001>

<llo_original>
// kernel: tile.33
$region0: #{tile.33}
  #allocation2 [shape = 's32[1]{0}', space=sflag, size = 0x4, scoped, tag = 'scoped memory for tile.33']
  %s0 = inlined_call_operand.hbm [shape: f32[8], index: 0, kind: input, shape index: {}]
  %s1 = inlined_call_operand.vmem [shape: f32[4,8], index: 1, kind: output, shape index: {}]
  $region1: #{tile.33} parent=0
    #allocation0 [shape = 'u8[512]{0}', space=vmem, size = 0x400, scoped, tag = 'operand span for operand 0']
    #allocation1 [shape = 's32[1]{0}', space=sflag, size = 0x4, scoped, tag = 'scoped memory for tile.33']
    %2 = vsyncpa [#allocation1], 0
    // Predicated region
    $region2: #{tile.33} parent=1 // pred_check
      _
    $region3: #{tile.33} parent=1 // pred_check_branch
      %4 = sbr.rel (0) target = $region5
    $region4: #{tile.33} parent=1 // pred_region
      %6 = vsyncadd [#allocation1], 0
      %s8 = sshll.u32 %s0, 4
      %s9 = int_to_ptr.hbm [resolvable:$true] %s8
      %s10 = sshll.u32 [#allocation0], 4
      %s11 = int_to_ptr.vmem [resolvable:$true] %s10
      %13 = dma.hbm_to_vmem [thread:$0]  %s9, 16, %s11, [#allocation1]
    $region5: #{tile.33} parent=1 // pred_fallthru
      _
    // Predicated region
    $region6: #{tile.33} parent=1 // pred_check
      _
    $region7: #{tile.33} parent=1 // pred_check_branch
      %15 = sbr.rel (0) target = $region9
    $region8: #{tile.33} parent=1 // pred_region
      %17 = dma.done [#allocation1], 16
    $region9: #{tile.33} parent=1 // pred_fallthru
      _
    %v18 = vld [vmem:[#allocation0] ss:$0 sm:$0xff]
    %19 = vst [vmem:[%s1] sm:$0xf] %v18
    %20 = vsyncpa [#allocation1], 1

// kernel: tile.46
$region0: #{tile.46}
  %s0 = inlined_call_operand.vmem [shape: f32[4,8], index: 0, kind: input, shape index: {}]
  %s1 = inlined_call_operand.vmem [shape: f32[1,32], index: 1, kind: output, shape index: {}]
  $region1: #{tile.46} parent=0
    #allocation0 [shape = 'u8[4096]{0}', space=vmem, size = 0x1000, scoped, tag = 'scoped mem for output reshape']
    #allocation1 [shape = 'u8[4096]{0}', space=vmem, size = 0x1000, scoped, tag = 'scoped mem for input reshape']
    %s3 = ssub.s32 16, 1
    %v4 = vld [vmem:[%s0] sm:%s3]
    %5 = vst [vmem:[#allocation1] sm:%s3] %v4
    %v6 = vld [vmem:[#allocation1] sm:$0x1]
    %vm7 = vcmask 64512
    %8 = vst.msk [vmem:[#allocation0] sm:$0x1] %vm7, %v6
    %s9 = scalar_lea.vmem [#allocation1], 3
    %v10 = vld [vmem:[%s9] sm:$0x1]
    %11 = vrot.lane.b32.xlu0 %v10, 24
    %v12 = vpop.permute.xlu0 %11
    %vm13 = vcmask 261312
    %14 = vst.msk [vmem:[#allocation0] sm:$0x1] %vm13, %v12
    %s15 = scalar_lea.vmem [#allocation1], 2
    %v16 = vld [vmem:[%s15] sm:$0x1]
    %17 = vrot.lane.b32.xlu0 %v16, 16
    %v18 = vpop.permute.xlu0 %17
    %vm19 = vcmask 195712
    %20 = vst.msk [vmem:[#allocation0] sm:$0x1] %vm19, %v18
    %s21 = scalar_lea.vmem [#allocation1], 1
    %v22 = vld [vmem:[%s21] sm:$0x1]
    %23 = vrot.lane.b32.xlu0 %v22, 8
    %v24 = vpop.permute.xlu0 %23
    %vm25 = vcmask 130112
    %26 = vst.msk [vmem:[#allocation0] sm:$0x1] %vm25, %v24
    %s28 = ssub.s32 2, 1
    %v29 = vld [vmem:[#allocation0] sm:%s28]
    %s31 = ssub.s32 2, 1
    %32 = vst [vmem:[%s1] sm:%s31] %v29

// kernel: mul.18
$region0: #{mul.18}
  %s0 = inlined_call_operand.hbm [shape: f32[8,2,2,16], index: 0, kind: input, shape index: {}]
  %s1 = inlined_call_operand.vmem [shape: f32[8,64], index: 1, kind: output, shape index: {}]
  $region1: #{mul.18} parent=0
    #allocation0 [shape = 'u8[16384]{0}', space=vmem, size = 0x4000, scoped, tag = 'operand span for operand 0']
    #allocation1 [shape = 's32[1]{0}', space=sflag, size = 0x4, scoped, tag = 'scoped memory for mul.18']
    #allocation2 [shape = 'u8[65536]{0}', space=vmem, size = 0x10000, scoped, tag = 'scoped mem for input reshape']
    %2 = vsyncpa [#allocation1], 0
    %4 = vsyncadd [#allocation1], 0
    %s6 = sshll.u32 %s0, 4
    %s7 = int_to_ptr.hbm [resolvable:$true] %s6
    %s8 = sshll.u32 [#allocation0], 4
    %s9 = int_to_ptr.vmem [resolvable:$true] %s8
    %11 = dma.hbm_to_vmem [thread:$0]  %s7, 512, %s9, [#allocation1]
    %13 = dma.done [#allocation1], 512
    %s15 = ssub.s32 4, 1
    %s16 = scalar_lea.vmem [#allocation0], 30
    %v17 = vld [vmem:[%s16] sm:%s15]
    %s18 = scalar_lea.vmem [#allocation2], 120
    %19 = vst [vmem:[%s18] sm:%s15] %v17
    %s20 = scalar_lea.vmem [#allocation0], 28
    %v21 = vld [vmem:[%s20] sm:%s15]
    %s22 = scalar_lea.vmem [#allocation2], 112
    %23 = vst [vmem:[%s22] sm:%s15] %v21
    %s24 = scalar_lea.vmem [#allocation0], 26
    %v25 = vld [vmem:[%s24] sm:%s15]
    %s26 = scalar_lea.vmem [#allocation2], 104
    %27 = vst [vmem:[%s26] sm:%s15] %v25
    %s28 = scalar_lea.vmem [#allocation0], 24
    %v29 = vld [vmem:[%s28] sm:%s15]
    %s30 = scalar_lea.vmem [#allocation2], 96
    %31 = vst [vmem:[%s30] sm:%s15] %v29
    %s32 = scalar_lea.vmem [#allocation0], 22
    %v33 = vld [vmem:[%s32] sm:%s15]
    %s34 = scalar_lea.vmem [#allocation2], 88
    %35 = vst [vmem:[%s34] sm:%s15] %v33
    %s36 = scalar_lea.vmem [#allocation0], 20
    %v37 = vld [vmem:[%s36] sm:%s15]
    %s38 = scalar_lea.vmem [#allocation2], 80
    %39 = vst [vmem:[%s38] sm:%s15] %v37
    %s40 = scalar_lea.vmem [#allocation0], 18
    %v41 = vld [vmem:[%s40] sm:%s15]
    %s42 = scalar_lea.vmem [#allocation2], 72
    %43 = vst [vmem:[%s42] sm:%s15] %v41
    %s44 = scalar_lea.vmem [#allocation0], 16
    %v45 = vld [vmem:[%s44] sm:%s15]
    %s46 = scalar_lea.vmem [#allocation2], 64
    %47 = vst [vmem:[%s46] sm:%s15] %v45
    %s48 = scalar_lea.vmem [#allocation0], 14
    %v49 = vld [vmem:[%s48] sm:%s15]
    %s50 = scalar_lea.vmem [#allocation2], 56
    %51 = vst [vmem:[%s50] sm:%s15] %v49
    %s52 = scalar_lea.vmem [#allocation0], 12
    %v53 = vld [vmem:[%s52] sm:%s15]
    %s54 = scalar_lea.vmem [#allocation2], 48
    %55 = vst [vmem:[%s54] sm:%s15] %v53
    %s56 = scalar_lea.vmem [#allocation0], 10
    %v57 = vld [vmem:[%s56] sm:%s15]
    %s58 = scalar_lea.vmem [#allocation2], 40
    %59 = vst [vmem:[%s58] sm:%s15] %v57
    %s60 = scalar_lea.vmem [#allocation0], 8
    %v61 = vld [vmem:[%s60] sm:%s15]
    %s62 = scalar_lea.vmem [#allocation2], 32
    %63 = vst [vmem:[%s62] sm:%s15] %v61
    %s64 = scalar_lea.vmem [#allocation0], 6
    %v65 = vld [vmem:[%s64] sm:%s15]
    %s66 = scalar_lea.vmem [#allocation2], 24
    %67 = vst [vmem:[%s66] sm:%s15] %v65
    %s68 = scalar_lea.vmem [#allocation0], 4
    %v69 = vld [vmem:[%s68] sm:%s15]
    %s70 = scalar_lea.vmem [#allocation2], 16
    %71 = vst [vmem:[%s70] sm:%s15] %v69
    %s72 = scalar_lea.vmem [#allocation0], 2
    %v73 = vld [vmem:[%s72] sm:%s15]
    %s74 = scalar_lea.vmem [#allocation2], 8
    %75 = vst [vmem:[%s74] sm:%s15] %v73
    %v76 = vld [vmem:[#allocation0] sm:%s15]
    %77 = vst [vmem:[#allocation2] sm:%s15] %v76
    %s78 = smov 3
    %v79 = vld [vmem:[#allocation2] ss:$16 sm:%s78]
    %s80 = smov 12
    %v81 = vld [vmem:[#allocation2] ss:$16 sm:%s80]
    %vm82 = vcmask 1043458
    %v83 = vsel %vm82, %v81, %v79
    %s84 = smov 48
    %v85 = vld [vmem:[#allocation2] ss:$16 sm:%s84]
    %vm86 = vcmask 1045508
    %v87 = vsel %vm86, %v85, %v83
    %s88 = smov 192
    %v89 = vld [vmem:[#allocation2] ss:$16 sm:%s88]
    %vm90 = vcmask 1047558
    %v91 = vsel %vm90, %v89, %v87
    %vm92 = vcmask 130048
    %93 = vst.msk [vmem:[%s1] sm:$0xff] %vm92, %v91
    %s94 = scalar_lea.vmem [#allocation2], 9
    %s95 = smov 3
    %v96 = vld [vmem:[%s94] ss:$16 sm:%s95]
    %s97 = scalar_lea.vmem [#allocation2], 9
    %s98 = smov 12
    %v99 = vld [vmem:[%s97] ss:$16 sm:%s98]
    %vm100 = vcmask 1043458
    %v101 = vsel %vm100, %v99, %v96
    %s102 = scalar_lea.vmem [#allocation2], 9
    %s103 = smov 48
    %v104 = vld [vmem:[%s102] ss:$16 sm:%s103]
    %vm105 = vcmask 1045508
    %v106 = vsel %vm105, %v104, %v101
    %s107 = scalar_lea.vmem [#allocation2], 9
    %s108 = smov 192
    %v109 = vld [vmem:[%s107] ss:$16 sm:%s108]
    %vm110 = vcmask 1047558
    %v111 = vsel %vm110, %v109, %v106
    %112 = vrot.lane.b32.xlu0 %v111, 48
    %v113 = vpop.permute.xlu0 %112
    %vm114 = vcmask 523648
    %115 = vst.msk [vmem:[%s1] sm:$0xff] %vm114, %v113
    %s116 = scalar_lea.vmem [#allocation2], 8
    %s117 = smov 3
    %v118 = vld [vmem:[%s116] ss:$16 sm:%s117]
    %s119 = scalar_lea.vmem [#allocation2], 8
    %s120 = smov 12
    %v121 = vld [vmem:[%s119] ss:$16 sm:%s120]
    %vm122 = vcmask 1043458
    %v123 = vsel %vm122, %v121, %v118
    %s124 = scalar_lea.vmem [#allocation2], 8
    %s125 = smov 48
    %v126 = vld [vmem:[%s124] ss:$16 sm:%s125]
    %vm127 = vcmask 1045508
    %v128 = vsel %vm127, %v126, %v123
    %s129 = scalar_lea.vmem [#allocation2], 8
    %s130 = smov 192
    %v131 = vld [vmem:[%s129] ss:$16 sm:%s130]
    %vm132 = vcmask 1047558
    %v133 = vsel %vm132, %v131, %v128
    %134 = vrot.lane.b32.xlu0 %v133, 32
    %v135 = vpop.permute.xlu0 %134
    %vm136 = vcmask 392448
    %137 = vst.msk [vmem:[%s1] sm:$0xff] %vm136, %v135
    %s138 = scalar_lea.vmem [#allocation2], 1
    %s139 = smov 3
    %v140 = vld [vmem:[%s138] ss:$16 sm:%s139]
    %s141 = scalar_lea.vmem [#allocation2], 1
    %s142 = smov 12
    %v143 = vld [vmem:[%s141] ss:$16 sm:%s142]
    %vm144 = vcmask 1043458
    %v145 = vsel %vm144, %v143, %v140
    %s146 = scalar_lea.vmem [#allocation2], 1
    %s147 = smov 48
    %v148 = vld [vmem:[%s146] ss:$16 sm:%s147]
    %vm149 = vcmask 1045508
    %v150 = vsel %vm149, %v148, %v145
    %s151 = scalar_lea.vmem [#allocation2], 1
    %s152 = smov 192
    %v153 = vld [vmem:[%s151] ss:$16 sm:%s152]
    %vm154 = vcmask 1047558
    %v155 = vsel %vm154, %v153, %v150
    %156 = vrot.lane.b32.xlu0 %v155, 16
    %v157 = vpop.permute.xlu0 %156
    %vm158 = vcmask 261248
    %159 = vst.msk [vmem:[%s1] sm:$0xff] %vm158, %v157
    %160 = vsyncpa [#allocation1], 1

// kernel: tile.48
$region0: #{tile.48}
  %s0 = inlined_call_operand.vmem [shape: f32[16,16], index: 0, kind: input, shape index: {}]
  %s1 = inlined_call_operand.vmem [shape: f32[1,256], index: 1, kind: output, shape index: {}]
  $region1: #{tile.48} parent=0
    #allocation0 [shape = 'u8[8192]{0}', space=vmem, size = 0x2000, scoped, tag = 'scoped mem for output reshape']
    %s2 = smov 3
    %v3 = vld [vmem:[%s0] ss:$8 sm:%s2]
    %vm4 = vcmask 130048
    %5 = vst.msk [vmem:[#allocation0] ss:$8 sm:$0x3] %vm4, %v3
    %s6 = scalar_lea.vmem %s0, 7
    %s7 = smov 3
    %v8 = vld [vmem:[%s6] ss:$8 sm:%s7]
    %9 = vrot.lane.b32.xlu0 %v8, 112
    %v10 = vpop.permute.xlu0 %9
    %vm11 = vcmask 1048448
    %12 = vst.msk [vmem:[#allocation0] ss:$8 sm:$0x3] %vm11, %v10
    %s13 = scalar_lea.vmem %s0, 6
    %s14 = smov 3
    %v15 = vld [vmem:[%s13] ss:$8 sm:%s14]
    %16 = vrot.lane.b32.xlu0 %v15, 96
    %v17 = vpop.permute.xlu0 %16
    %vm18 = vcmask 917248
    %19 = vst.msk [vmem:[#allocation0] ss:$8 sm:$0x3] %vm18, %v17
    %s20 = scalar_lea.vmem %s0, 5
    %s21 = smov 3
    %v22 = vld [vmem:[%s20] ss:$8 sm:%s21]
    %23 = vrot.lane.b32.xlu0 %v22, 80
    %v24 = vpop.permute.xlu0 %23
    %vm25 = vcmask 786048
    %26 = vst.msk [vmem:[#allocation0] ss:$8 sm:$0x3] %vm25, %v24
    %s27 = scalar_lea.vmem %s0, 4
    %s28 = smov 3
    %v29 = vld [vmem:[%s27] ss:$8 sm:%s28]
    %30 = vrot.lane.b32.xlu0 %v29, 64
    %v31 = vpop.permute.xlu0 %30
    %vm32 = vcmask 654848
    %33 = vst.msk [vmem:[#allocation0] ss:$8 sm:$0x3] %vm32, %v31
    %s34 = scalar_lea.vmem %s0, 3
    %s35 = smov 3
    %v36 = vld [vmem:[%s34] ss:$8 sm:%s35]
    %37 = vrot.lane.b32.xlu0 %v36, 48
    %v38 = vpop.permute.xlu0 %37
    %vm39 = vcmask 523648
    %40 = vst.msk [vmem:[#allocation0] ss:$8 sm:$0x3] %vm39, %v38
    %s41 = scalar_lea.vmem %s0, 2
    %s42 = smov 3
    %v43 = vld [vmem:[%s41] ss:$8 sm:%s42]
    %44 = vrot.lane.b32.xlu0 %v43, 32
    %v45 = vpop.permute.xlu0 %44
    %vm46 = vcmask 392448
    %47 = vst.msk [vmem:[#allocation0] ss:$8 sm:$0x3] %vm46, %v45
    %s48 = scalar_lea.vmem %s0, 1
    %s49 = smov 3
    %v50 = vld [vmem:[%s48] ss:$8 sm:%s49]
    %51 = vrot.lane.b32.xlu0 %v50, 16
    %v52 = vpop.permute.xlu0 %51
    %vm53 = vcmask 261248
    %54 = vst.msk [vmem:[#allocation0] ss:$8 sm:$0x3] %vm53, %v52
    %s56 = ssub.s32 2, 1
    %v57 = vld [vmem:[#allocation0] sm:%s56]
    %s59 = ssub.s32 2, 1
    %60 = vst [vmem:[%s1] sm:%s59] %v57
    %s61 = scalar_lea.vmem [#allocation0], 8
    %v62 = vld [vmem:[%s61] sm:%s56]
    %s64 = ssub.s32 2, 1
    %s65 = scalar_lea.vmem %s1, 1
    %66 = vst [vmem:[%s65] sm:%s64] %v62

// kernel: tile.41
$region0: #{tile.41}
  #allocation2 [shape = 's32[1]{0}', space=sflag, size = 0x4, scoped, tag = 'scoped memory for tile.41']
  %s0 = inlined_call_operand.hbm [shape: f32[16], index: 0, kind: input, shape index: {}]
  %s1 = inlined_call_operand.vmem [shape: f32[16,16], index: 1, kind: output, shape index: {}]
  $region1: #{tile.41} parent=0
    #allocation0 [shape = 'u8[512]{0}', space=vmem, size = 0x400, scoped, tag = 'operand span for operand 0']
    #allocation1 [shape = 's32[1]{0}', space=sflag, size = 0x4, scoped, tag = 'scoped memory for tile.41']
    %2 = vsyncpa [#allocation1], 0
    // Predicated region
    $region2: #{tile.41} parent=1 // pred_check
      _
    $region3: #{tile.41} parent=1 // pred_check_branch
      %4 = sbr.rel (0) target = $region5
    $region4: #{tile.41} parent=1 // pred_region
      %6 = vsyncadd [#allocation1], 0
      %s8 = sshll.u32 %s0, 4
      %s9 = int_to_ptr.hbm [resolvable:$true] %s8
      %s10 = sshll.u32 [#allocation0], 4
      %s11 = int_to_ptr.vmem [resolvable:$true] %s10
      %13 = dma.hbm_to_vmem [thread:$0]  %s9, 16, %s11, [#allocation1]
    $region5: #{tile.41} parent=1 // pred_fallthru
      _
    // Predicated region
    $region6: #{tile.41} parent=1 // pred_check
      _
    $region7: #{tile.41} parent=1 // pred_check_branch
      %15 = sbr.rel (0) target = $region9
    $region8: #{tile.41} parent=1 // pred_region
      %17 = dma.done [#allocation1], 16
    $region9: #{tile.41} parent=1 // pred_fallthru
      _
    %v18 = vld [vmem:[#allocation0] ss:$0 sm:$0xff]
    %19 = vst [vmem:[%s1] sm:$0xff] %v18
    %s20 = scalar_lea.vmem %s1, 8
    %21 = vst [vmem:[%s20] sm:$0xff] %v18
    %22 = vsyncpa [#allocation1], 1

// kernel: tile.45
$region0: #{tile.45}
  #allocation0 [shape = 's32[1]{0}', space=sflag, size = 0x4, scoped, tag = 'scoped memory for tile.45']
  %s0 = inlined_call_operand.vmem [shape: f32[8], index: 0, kind: input, shape index: {}]
  %s1 = inlined_call_operand.vmem [shape: f32[64,8], index: 1, kind: output, shape index: {}]
  // Predicated region
  $region2: #{tile.45} parent=0 // pred_check
    _
  $region3: #{tile.45} parent=0 // pred_check_branch
    %3 = sbr.rel (0) target = $region5
  $region4: #{tile.45} parent=0 // pred_region
    _
  $region5: #{tile.45} parent=0 // pred_fallthru
    _
  %v4 = vld [vmem:[%s0] ss:$0 sm:$0xff]
  %5 = vst [vmem:[%s1] sm:$0xff] %v4
  %s6 = scalar_lea.vmem %s1, 8
  %7 = vst [vmem:[%s6] sm:$0xff] %v4
  %s8 = scalar_lea.vmem %s1, 16
  %9 = vst [vmem:[%s8] sm:$0xff] %v4
  %s10 = scalar_lea.vmem %s1, 24
  %11 = vst [vmem:[%s10] sm:$0xff] %v4
  %s12 = scalar_lea.vmem %s1, 32
  %13 = vst [vmem:[%s12] sm:$0xff] %v4
  %s14 = scalar_lea.vmem %s1, 40
  %15 = vst [vmem:[%s14] sm:$0xff] %v4
  %s16 = scalar_lea.vmem %s1, 48
  %17 = vst [vmem:[%s16] sm:$0xff] %v4
  %s18 = scalar_lea.vmem %s1, 56
  %19 = vst [vmem:[%s18] sm:$0xff] %v4

// kernel: tile.49
$region0: #{tile.49}
  %s0 = inlined_call_operand.vmem [shape: f32[64,8], index: 0, kind: input, shape index: {}]
  %s1 = inlined_call_operand.vmem [shape: f32[1,512], index: 1, kind: output, shape index: {}]
  $region1: #{tile.49} parent=0
    #allocation0 [shape = 'u8[16384]{0}', space=vmem, size = 0x4000, scoped, tag = 'scoped mem for output reshape']
    %s2 = smov 3
    %v3 = vld [vmem:[%s0] ss:$16 sm:%s2]
    %s4 = smov 12
    %v5 = vld [vmem:[%s0] ss:$16 sm:%s4]
    %vm6 = vcmask 1043458
    %v7 = vsel %vm6, %v5, %v3
    %vm8 = vcmask 64512
    %9 = vst.msk [vmem:[#allocation0] ss:$8 sm:$0xf] %vm8, %v7
    %s10 = scalar_lea.vmem %s0, 15
    %s11 = smov 3
    %v12 = vld [vmem:[%s10] ss:$16 sm:%s11]
    %s13 = scalar_lea.vmem %s0, 15
    %s14 = smov 12
    %v15 = vld [vmem:[%s13] ss:$16 sm:%s14]
    %vm16 = vcmask 1043458
    %v17 = vsel %vm16, %v15, %v12
    %18 = vrot.lane.b32.xlu0 %v17, 120
    %v19 = vpop.permute.xlu0 %18
    %vm20 = vcmask 1048512
    %21 = vst.msk [vmem:[#allocation0] ss:$8 sm:$0xf] %vm20, %v19
    %s22 = scalar_lea.vmem %s0, 14
    %s23 = smov 3
    %v24 = vld [vmem:[%s22] ss:$16 sm:%s23]
    %s25 = scalar_lea.vmem %s0, 14
    %s26 = smov 12
    %v27 = vld [vmem:[%s25] ss:$16 sm:%s26]
    %vm28 = vcmask 1043458
    %v29 = vsel %vm28, %v27, %v24
    %30 = vrot.lane.b32.xlu0 %v29, 112
    %v31 = vpop.permute.xlu0 %30
    %vm32 = vcmask 982912
    %33 = vst.msk [vmem:[#allocation0] ss:$8 sm:$0xf] %vm32, %v31
    %s34 = scalar_lea.vmem %s0, 13
    %s35 = smov 3
    %v36 = vld [vmem:[%s34] ss:$16 sm:%s35]
    %s37 = scalar_lea.vmem %s0, 13
    %s38 = smov 12
    %v39 = vld [vmem:[%s37] ss:$16 sm:%s38]
    %vm40 = vcmask 1043458
    %v41 = vsel %vm40, %v39, %v36
    %42 = vrot.lane.b32.xlu0 %v41, 104
    %v43 = vpop.permute.xlu0 %42
    %vm44 = vcmask 917312
    %45 = vst.msk [vmem:[#allocation0] ss:$8 sm:$0xf] %vm44, %v43
    %s46 = scalar_lea.vmem %s0, 12
    %s47 = smov 3
    %v48 = vld [vmem:[%s46] ss:$16 sm:%s47]
    %s49 = scalar_lea.vmem %s0, 12
    %s50 = smov 12
    %v51 = vld [vmem:[%s49] ss:$16 sm:%s50]
    %vm52 = vcmask 1043458
    %v53 = vsel %vm52, %v51, %v48
    %54 = vrot.lane.b32.xlu0 %v53, 96
    %v55 = vpop.permute.xlu0 %54
    %vm56 = vcmask 851712
    %57 = vst.msk [vmem:[#allocation0] ss:$8 sm:$0xf] %vm56, %v55
    %s58 = scalar_lea.vmem %s0, 11
    %s59 = smov 3
    %v60 = vld [vmem:[%s58] ss:$16 sm:%s59]
    %s61 = scalar_lea.vmem %s0, 11
    %s62 = smov 12
    %v63 = vld [vmem:[%s61] ss:$16 sm:%s62]
    %vm64 = vcmask 1043458
    %v65 = vsel %vm64, %v63, %v60
    %66 = vrot.lane.b32.xlu0 %v65, 88
    %v67 = vpop.permute.xlu0 %66
    %vm68 = vcmask 786112
    %69 = vst.msk [vmem:[#allocation0] ss:$8 sm:$0xf] %vm68, %v67
    %s70 = scalar_lea.vmem %s0, 10
    %s71 = smov 3
    %v72 = vld [vmem:[%s70] ss:$16 sm:%s71]
    %s73 = scalar_lea.vmem %s0, 10
    %s74 = smov 12
    %v75 = vld [vmem:[%s73] ss:$16 sm:%s74]
    %vm76 = vcmask 1043458
    %v77 = vsel %vm76, %v75, %v72
    %78 = vrot.lane.b32.xlu0 %v77, 80
    %v79 = vpop.permute.xlu0 %78
    %vm80 = vcmask 720512
    %81 = vst.msk [vmem:[#allocation0] ss:$8 sm:$0xf] %vm80, %v79
    %s82 = scalar_lea.vmem %s0, 9
    %s83 = smov 3
    %v84 = vld [vmem:[%s82] ss:$16 sm:%s83]
    %s85 = scalar_lea.vmem %s0, 9
    %s86 = smov 12
    %v87 = vld [vmem:[%s85] ss:$16 sm:%s86]
    %vm88 = vcmask 1043458
    %v89 = vsel %vm88, %v87, %v84
    %90 = vrot.lane.b32.xlu0 %v89, 72
    %v91 = vpop.permute.xlu0 %90
    %vm92 = vcmask 654912
    %93 = vst.msk [vmem:[#allocation0] ss:$8 sm:$0xf] %vm92, %v91
    %s94 = scalar_lea.vmem %s0, 8
    %s95 = smov 3
    %v96 = vld [vmem:[%s94] ss:$16 sm:%s95]
    %s97 = scalar_lea.vmem %s0, 8
    %s98 = smov 12
    %v99 = vld [vmem:[%s97] ss:$16 sm:%s98]
    %vm100 = vcmask 1043458
    %v101 = vsel %vm100, %v99, %v96
    %102 = vrot.lane.b32.xlu0 %v101, 64
    %v103 = vpop.permute.xlu0 %102
    %vm104 = vcmask 589312
    %105 = vst.msk [vmem:[#allocation0] ss:$8 sm:$0xf] %vm104, %v103
    %s106 = scalar_lea.vmem %s0, 7
    %s107 = smov 3
    %v108 = vld [vmem:[%s106] ss:$16 sm:%s107]
    %s109 = scalar_lea.vmem %s0, 7
    %s110 = smov 12
    %v111 = vld [vmem:[%s109] ss:$16 sm:%s110]
    %vm112 = vcmask 1043458
    %v113 = vsel %vm112, %v111, %v108
    %114 = vrot.lane.b32.xlu0 %v113, 56
    %v115 = vpop.permute.xlu0 %114
    %vm116 = vcmask 523712
    %117 = vst.msk [vmem:[#allocation0] ss:$8 sm:$0xf] %vm116, %v115
    %s118 = scalar_lea.vmem %s0, 6
    %s119 = smov 3
    %v120 = vld [vmem:[%s118] ss:$16 sm:%s119]
    %s121 = scalar_lea.vmem %s0, 6
    %s122 = smov 12
    %v123 = vld [vmem:[%s121] ss:$16 sm:%s122]
    %vm124 = vcmask 1043458
    %v125 = vsel %vm124, %v123, %v120
    %126 = vrot.lane.b32.xlu0 %v125, 48
    %v127 = vpop.permute.xlu0 %126
    %vm128 = vcmask 458112
    %129 = vst.msk [vmem:[#allocation0] ss:$8 sm:$0xf] %vm128, %v127
    %s130 = scalar_lea.vmem %s0, 5
    %s131 = smov 3
    %v132 = vld [vmem:[%s130] ss:$16 sm:%s131]
    %s133 = scalar_lea.vmem %s0, 5
    %s134 = smov 12
    %v135 = vld [vmem:[%s133] ss:$16 sm:%s134]
    %vm136 = vcmask 1043458
    %v137 = vsel %vm136, %v135, %v132
    %138 = vrot.lane.b32.xlu0 %v137, 40
    %v139 = vpop.permute.xlu0 %138
    %vm140 = vcmask 392512
    %141 = vst.msk [vmem:[#allocation0] ss:$8 sm:$0xf] %vm140, %v139
    %s142 = scalar_lea.vmem %s0, 4
    %s143 = smov 3
    %v144 = vld [vmem:[%s142] ss:$16 sm:%s143]
    %s145 = scalar_lea.vmem %s0, 4
    %s146 = smov 12
    %v147 = vld [vmem:[%s145] ss:$16 sm:%s146]
    %vm148 = vcmask 1043458
    %v149 = vsel %vm148, %v147, %v144
    %150 = vrot.lane.b32.xlu0 %v149, 32
    %v151 = vpop.permute.xlu0 %150
    %vm152 = vcmask 326912
    %153 = vst.msk [vmem:[#allocation0] ss:$8 sm:$0xf] %vm152, %v151
    %s154 = scalar_lea.vmem %s0, 3
    %s155 = smov 3
    %v156 = vld [vmem:[%s154] ss:$16 sm:%s155]
    %s157 = scalar_lea.vmem %s0, 3
    %s158 = smov 12
    %v159 = vld [vmem:[%s157] ss:$16 sm:%s158]
    %vm160 = vcmask 1043458
    %v161 = vsel %vm160, %v159, %v156
    %162 = vrot.lane.b32.xlu0 %v161, 24
    %v163 = vpop.permute.xlu0 %162
    %vm164 = vcmask 261312
    %165 = vst.msk [vmem:[#allocation0] ss:$8 sm:$0xf] %vm164, %v163
    %s166 = scalar_lea.vmem %s0, 2
    %s167 = smov 3
    %v168 = vld [vmem:[%s166] ss:$16 sm:%s167]
    %s169 = scalar_lea.vmem %s0, 2
    %s170 = smov 12
    %v171 = vld [vmem:[%s169] ss:$16 sm:%s170]
    %vm172 = vcmask 1043458
    %v173 = vsel %vm172, %v171, %v168
    %174 = vrot.lane.b32.xlu0 %v173, 16
    %v175 = vpop.permute.xlu0 %174
    %vm176 = vcmask 195712
    %177 = vst.msk [vmem:[#allocation0] ss:$8 sm:$0xf] %vm176, %v175
    %s178 = scalar_lea.vmem %s0, 1
    %s179 = smov 3
    %v180 = vld [vmem:[%s178] ss:$16 sm:%s179]
    %s181 = scalar_lea.vmem %s0, 1
    %s182 = smov 12
    %v183 = vld [vmem:[%s181] ss:$16 sm:%s182]
    %vm184 = vcmask 1043458
    %v185 = vsel %vm184, %v183, %v180
    %186 = vrot.lane.b32.xlu0 %v185, 8
    %v187 = vpop.permute.xlu0 %186
    %vm188 = vcmask 130112
    %189 = vst.msk [vmem:[#allocation0] ss:$8 sm:$0xf] %vm188, %v187
    %s191 = ssub.s32 2, 1
    %v192 = vld [vmem:[#allocation0] sm:%s191]
    %s194 = ssub.s32 2, 1
    %195 = vst [vmem:[%s1] sm:%s194] %v192
    %s196 = scalar_lea.vmem [#allocation0], 8
    %v197 = vld [vmem:[%s196] sm:%s191]
    %s199 = ssub.s32 2, 1
    %s200 = scalar_lea.vmem %s1, 1
    %201 = vst [vmem:[%s200] sm:%s199] %v197
    %s202 = scalar_lea.vmem [#allocation0], 16
    %v203 = vld [vmem:[%s202] sm:%s191]
    %s205 = ssub.s32 2, 1
    %s206 = scalar_lea.vmem %s1, 2
    %207 = vst [vmem:[%s206] sm:%s205] %v203
    %s208 = scalar_lea.vmem [#allocation0], 24
    %v209 = vld [vmem:[%s208] sm:%s191]
    %s211 = ssub.s32 2, 1
    %s212 = scalar_lea.vmem %s1, 3
    %213 = vst [vmem:[%s212] sm:%s211] %v209

// kernel: decoder_forward.2
$region0: #{decoder_forward.2}
  #allocation0 [shape = 'u32[]', space=smem, size = 0x4, offset = 0x4, fixed_abs, tag = 'smem constant byte address 0x4 - core index']
  #allocation1 [shape = 'u32[72,128]{1,0:T(1,128)}', space=vmem, size = 0x9000, scoped, tag = 'internal scratch']
  %s0 = inlined_call_operand.vmem [shape: bf16[2,16,8], index: 0, kind: input, shape index: {}]
  %s1 = inlined_call_operand.vmem [shape: bf16[8,32], index: 1, kind: input, shape index: {}]
  %s2 = inlined_call_operand.vmem [shape: f32[1,32], index: 2, kind: input, shape index: {}]
  %s3 = inlined_call_operand.vmem [shape: bf16[32,32], index: 3, kind: input, shape index: {}]
  %s4 = inlined_call_operand.vmem [shape: f32[1,32], index: 4, kind: input, shape index: {}]
  %s5 = inlined_call_operand.vmem [shape: bf16[32,256], index: 5, kind: input, shape index: {}]
  %s6 = inlined_call_operand.vmem [shape: f32[1,256], index: 6, kind: input, shape index: {}]
  %s7 = inlined_call_operand.vmem [shape: bf16[256,512], index: 7, kind: input, shape index: {}]
  %s8 = inlined_call_operand.vmem [shape: f32[1,512], index: 8, kind: input, shape index: {}]
  %s9 = inlined_call_operand.vmem [shape: bf16[2,16,512], index: 9, kind: output, shape index: {}]
  %s10 = sld [smem:[#allocation0]]
  $region69: #{decoder_forward.2} parent=0
    _
  %s12 = ssub.s32 1, %s10
  %s13 = scalar_select 0, %s12, %s10
  loop: start=0, step=1, limit=4
  $region2: #{decoder_forward.2} parent=0 // loop_pre_header
    _
  $region3: #{decoder_forward.2} parent=0 // loop_header
    %s15 = sphi 0, %s19
    %p16 = scmp.ge.s32.totalorder %s15, 4
    %s25 = sphi 0, %s27
    %s28 = sphi 0, %s25
    %s29 = sphi 0, %s28
    %s45 = sphi 0, %s29
    %s49 = sphi 0, %s49
    %s51 = sphi 0, %s49
    %s52 = sphi 0, %s51
    %s66 = sphi 0, %s52
    %s70 = sphi 0, %s70
    %s72 = sphi 0, %s70
    %s73 = sphi 0, %s72
    %s87 = sphi 0, %s73
    %s91 = sphi 0, %s91
    %s93 = sphi 0, %s91
    %s94 = sphi 0, %s93
    %s108 = sphi 0, %s94
    %s112 = sphi 0, %s112
    %s114 = sphi 0, %s112
    %s115 = sphi 0, %s114
    %s129 = sphi 0, %s115
    %s133 = sphi 0, %s133
    %s135 = sphi 0, %s133
    %s136 = sphi 0, %s135
    %s150 = sphi 0, %s136
    %s154 = sphi 0, %s154
    %s156 = sphi 0, %s154
    %s157 = sphi 0, %s156
    %s171 = sphi 0, %s157
    %s175 = sphi 0, %s175
    %s177 = sphi 0, %s175
    %s178 = sphi 0, %s177
    %s192 = sphi 0, %s178
    %s196 = sphi 0, %s196
    %s198 = sphi 0, %s196
    %s199 = sphi 0, %s198
    %s213 = sphi 0, %s199
    %s219 = sphi 0, %s221
    %s222 = sphi 0, %s219
    %s223 = sphi 0, %s222
    %s239 = sphi 0, %s223
  $region4: #{decoder_forward.2} parent=0 // loop_header_branch
    %18 = sbr.rel (%p16) target = $region8
  $region5: #{decoder_forward.2} parent=0 // loop_body
    %s20 = ssub.s32 %s15, 1
    %s21 = ssub.s32 %s15, 2
    %s22 = sadd.s32 %s15, 1
    %s23 = ssub.s32 %s15, %s22
    %p24 = scmp.eq.s32.totalorder %s23, 0
    %s26 = sadd.s32 %s25, 1
    %s27 = scalar_select %p24, %s25, %s26
    %p30 = pneg %p24
    %p31 = scmp.eq.s32.totalorder %s15, 1
    %p32 = por %p30, %p31
    %p33 = scmp.ne.s32.totalorder %s25, %s28
    %p34 = scmp.eq.s32.totalorder %s15, 0
    %p35 = por %p33, %p34
    %p36 = scmp.ne.s32.totalorder %s25, %s28
    %p37 = scmp.eq.s32.totalorder %s20, 1
    %p38 = por %p36, %p37
    %p39 = scmp.ne.s32.totalorder %s28, %s29
    %p40 = scmp.eq.s32.totalorder %s20, 0
    %p41 = por %p39, %p40
    %p42 = scmp.ne.s32.totalorder %s28, %s29
    %p43 = scmp.eq.s32.totalorder %s21, 1
    %p44 = por %p42, %p43
    %p46 = scmp.ne.s32.totalorder %s29, %s45
    %p47 = scmp.eq.s32.totalorder %s21, 0
    %p48 = por %p46, %p47
    %s50 = sadd.s32 %s49, 1
    %p53 = scmp.eq.s32.totalorder %s15, 1
    %p54 = scmp.ne.s32.totalorder %s49, %s51
    %p55 = scmp.eq.s32.totalorder %s15, 0
    %p56 = por %p54, %p55
    %p57 = scmp.ne.s32.totalorder %s49, %s51
    %p58 = scmp.eq.s32.totalorder %s20, 1
    %p59 = por %p57, %p58
    %p60 = scmp.ne.s32.totalorder %s51, %s52
    %p61 = scmp.eq.s32.totalorder %s20, 0
    %p62 = por %p60, %p61
    %p63 = scmp.ne.s32.totalorder %s51, %s52
    %p64 = scmp.eq.s32.totalorder %s21, 1
    %p65 = por %p63, %p64
    %p67 = scmp.ne.s32.totalorder %s52, %s66
    %p68 = scmp.eq.s32.totalorder %s21, 0
    %p69 = por %p67, %p68
    %s71 = sadd.s32 %s70, 1
    %p74 = scmp.eq.s32.totalorder %s15, 1
    %p75 = scmp.ne.s32.totalorder %s70, %s72
    %p76 = scmp.eq.s32.totalorder %s15, 0
    %p77 = por %p75, %p76
    %p78 = scmp.ne.s32.totalorder %s70, %s72
    %p79 = scmp.eq.s32.totalorder %s20, 1
    %p80 = por %p78, %p79
    %p81 = scmp.ne.s32.totalorder %s72, %s73
    %p82 = scmp.eq.s32.totalorder %s20, 0
    %p83 = por %p81, %p82
    %p84 = scmp.ne.s32.totalorder %s72, %s73
    %p85 = scmp.eq.s32.totalorder %s21, 1
    %p86 = por %p84, %p85
    %p88 = scmp.ne.s32.totalorder %s73, %s87
    %p89 = scmp.eq.s32.totalorder %s21, 0
    %p90 = por %p88, %p89
    %s92 = sadd.s32 %s91, 1
    %p95 = scmp.eq.s32.totalorder %s15, 1
    %p96 = scmp.ne.s32.totalorder %s91, %s93
    %p97 = scmp.eq.s32.totalorder %s15, 0
    %p98 = por %p96, %p97
    %p99 = scmp.ne.s32.totalorder %s91, %s93
    %p100 = scmp.eq.s32.totalorder %s20, 1
    %p101 = por %p99, %p100
    %p102 = scmp.ne.s32.totalorder %s93, %s94
    %p103 = scmp.eq.s32.totalorder %s20, 0
    %p104 = por %p102, %p103
    %p105 = scmp.ne.s32.totalorder %s93, %s94
    %p106 = scmp.eq.s32.totalorder %s21, 1
    %p107 = por %p105, %p106
    %p109 = scmp.ne.s32.totalorder %s94, %s108
    %p110 = scmp.eq.s32.totalorder %s21, 0
    %p111 = por %p109, %p110
    %s113 = sadd.s32 %s112, 1
    %p116 = scmp.eq.s32.totalorder %s15, 1
    %p117 = scmp.ne.s32.totalorder %s112, %s114
    %p118 = scmp.eq.s32.totalorder %s15, 0
    %p119 = por %p117, %p118
    %p120 = scmp.ne.s32.totalorder %s112, %s114
    %p121 = scmp.eq.s32.totalorder %s20, 1
    %p122 = por %p120, %p121
    %p123 = scmp.ne.s32.totalorder %s114, %s115
    %p124 = scmp.eq.s32.totalorder %s20, 0
    %p125 = por %p123, %p124
    %p126 = scmp.ne.s32.totalorder %s114, %s115
    %p127 = scmp.eq.s32.totalorder %s21, 1
    %p128 = por %p126, %p127
    %p130 = scmp.ne.s32.totalorder %s115, %s129
    %p131 = scmp.eq.s32.totalorder %s21, 0
    %p132 = por %p130, %p131
    %s134 = sadd.s32 %s133, 1
    %p137 = scmp.eq.s32.totalorder %s15, 1
    %p138 = scmp.ne.s32.totalorder %s133, %s135
    %p139 = scmp.eq.s32.totalorder %s15, 0
    %p140 = por %p138, %p139
    %p141 = scmp.ne.s32.totalorder %s133, %s135
    %p142 = scmp.eq.s32.totalorder %s20, 1
    %p143 = por %p141, %p142
    %p144 = scmp.ne.s32.totalorder %s135, %s136
    %p145 = scmp.eq.s32.totalorder %s20, 0
    %p146 = por %p144, %p145
    %p147 = scmp.ne.s32.totalorder %s135, %s136
    %p148 = scmp.eq.s32.totalorder %s21, 1
    %p149 = por %p147, %p148
    %p151 = scmp.ne.s32.totalorder %s136, %s150
    %p152 = scmp.eq.s32.totalorder %s21, 0
    %p153 = por %p151, %p152
    %s155 = sadd.s32 %s154, 1
    %p158 = scmp.eq.s32.totalorder %s15, 1
    %p159 = scmp.ne.s32.totalorder %s154, %s156
    %p160 = scmp.eq.s32.totalorder %s15, 0
    %p161 = por %p159, %p160
    %p162 = scmp.ne.s32.totalorder %s154, %s156
    %p163 = scmp.eq.s32.totalorder %s20, 1
    %p164 = por %p162, %p163
    %p165 = scmp.ne.s32.totalorder %s156, %s157
    %p166 = scmp.eq.s32.totalorder %s20, 0
    %p167 = por %p165, %p166
    %p168 = scmp.ne.s32.totalorder %s156, %s157
    %p169 = scmp.eq.s32.totalorder %s21, 1
    %p170 = por %p168, %p169
    %p172 = scmp.ne.s32.totalorder %s157, %s171
    %p173 = scmp.eq.s32.totalorder %s21, 0
    %p174 = por %p172, %p173
    %s176 = sadd.s32 %s175, 1
    %p179 = scmp.eq.s32.totalorder %s15, 1
    %p180 = scmp.ne.s32.totalorder %s175, %s177
    %p181 = scmp.eq.s32.totalorder %s15, 0
    %p182 = por %p180, %p181
    %p183 = scmp.ne.s32.totalorder %s175, %s177
    %p184 = scmp.eq.s32.totalorder %s20, 1
    %p185 = por %p183, %p184
    %p186 = scmp.ne.s32.totalorder %s177, %s178
    %p187 = scmp.eq.s32.totalorder %s20, 0
    %p188 = por %p186, %p187
    %p189 = scmp.ne.s32.totalorder %s177, %s178
    %p190 = scmp.eq.s32.totalorder %s21, 1
    %p191 = por %p189, %p190
    %p193 = scmp.ne.s32.totalorder %s178, %s192
    %p194 = scmp.eq.s32.totalorder %s21, 0
    %p195 = por %p193, %p194
    %s197 = sadd.s32 %s196, 1
    %p200 = scmp.eq.s32.totalorder %s15, 1
    %p201 = scmp.ne.s32.totalorder %s196, %s198
    %p202 = scmp.eq.s32.totalorder %s15, 0
    %p203 = por %p201, %p202
    %p204 = scmp.ne.s32.totalorder %s196, %s198
    %p205 = scmp.eq.s32.totalorder %s20, 1
    %p206 = por %p204, %p205
    %p207 = scmp.ne.s32.totalorder %s198, %s199
    %p208 = scmp.eq.s32.totalorder %s20, 0
    %p209 = por %p207, %p208
    %p210 = scmp.ne.s32.totalorder %s198, %s199
    %p211 = scmp.eq.s32.totalorder %s21, 1
    %p212 = por %p210, %p211
    %p214 = scmp.ne.s32.totalorder %s199, %s213
    %p215 = scmp.eq.s32.totalorder %s21, 0
    %p216 = por %p214, %p215
    %s217 = ssub.s32 %s15, %s22
    %p218 = scmp.eq.s32.totalorder %s217, 0
    %s220 = sadd.s32 %s219, 1
    %s221 = scalar_select %p218, %s219, %s220
    %p224 = pneg %p218
    %p225 = scmp.eq.s32.totalorder %s15, 1
    %p226 = por %p224, %p225
    %p227 = scmp.ne.s32.totalorder %s219, %s222
    %p228 = scmp.eq.s32.totalorder %s15, 0
    %p229 = por %p227, %p228
    %p230 = scmp.ne.s32.totalorder %s219, %s222
    %p231 = scmp.eq.s32.totalorder %s20, 1
    %p232 = por %p230, %p231
    %p233 = scmp.ne.s32.totalorder %s222, %s223
    %p234 = scmp.eq.s32.totalorder %s20, 0
    %p235 = por %p233, %p234
    %p236 = scmp.ne.s32.totalorder %s222, %s223
    %p237 = scmp.eq.s32.totalorder %s21, 1
    %p238 = por %p236, %p237
    %p240 = scmp.ne.s32.totalorder %s223, %s239
    %p241 = scmp.eq.s32.totalorder %s21, 0
    %p242 = por %p240, %p241
    %p243 = scmp.le.s32.totalorder 1, %s15
    %p244 = scmp.lt.s32.totalorder %s15, 3
    %p245 = pnand %p243, %p244
    %p246 = pneg %p245
    // Predicated region
    $region9: #{decoder_forward.2} parent=5 // pred_check
      _
    $region10: #{decoder_forward.2} parent=5 // pred_check_branch
      %248 = sbr.rel (%p245) target = $region12
    $region11: #{decoder_forward.2} parent=5 // pred_region
      %s249 = ssub.s32 %s15, 1
      // Predicated region
      $region13: #{decoder_forward.2} parent=11 // pred_check
        %p250 = pneg %p62
      $region14: #{decoder_forward.2} parent=11 // pred_check_branch
        %252 = sbr.rel (%p250) target = $region16
      $region15: #{decoder_forward.2} parent=11 // pred_region
        _
      $region16: #{decoder_forward.2} parent=11 // pred_fallthru
        _
      // Predicated region
      $region17: #{decoder_forward.2} parent=11 // pred_check
        %p253 = pneg %p83
      $region18: #{decoder_forward.2} parent=11 // pred_check_branch
        %255 = sbr.rel (%p253) target = $region20
      $region19: #{decoder_forward.2} parent=11 // pred_region
        _
      $region20: #{decoder_forward.2} parent=11 // pred_fallthru
        _
      // Predicated region
      $region21: #{decoder_forward.2} parent=11 // pred_check
        %p256 = pneg %p104
      $region22: #{decoder_forward.2} parent=11 // pred_check_branch
        %258 = sbr.rel (%p256) target = $region24
      $region23: #{decoder_forward.2} parent=11 // pred_region
        _
      $region24: #{decoder_forward.2} parent=11 // pred_fallthru
        _
      // Predicated region
      $region25: #{decoder_forward.2} parent=11 // pred_check
        %p259 = pneg %p125
      $region26: #{decoder_forward.2} parent=11 // pred_check_branch
        %261 = sbr.rel (%p259) target = $region28
      $region27: #{decoder_forward.2} parent=11 // pred_region
        _
      $region28: #{decoder_forward.2} parent=11 // pred_fallthru
        _
      // Predicated region
      $region29: #{decoder_forward.2} parent=11 // pred_check
        %p262 = pneg %p146
      $region30: #{decoder_forward.2} parent=11 // pred_check_branch
        %264 = sbr.rel (%p262) target = $region32
      $region31: #{decoder_forward.2} parent=11 // pred_region
        _
      $region32: #{decoder_forward.2} parent=11 // pred_fallthru
        _
      // Predicated region
      $region33: #{decoder_forward.2} parent=11 // pred_check
        %p265 = pneg %p167
      $region34: #{decoder_forward.2} parent=11 // pred_check_branch
        %267 = sbr.rel (%p265) target = $region36
      $region35: #{decoder_forward.2} parent=11 // pred_region
        _
      $region36: #{decoder_forward.2} parent=11 // pred_fallthru
        _
      // Predicated region
      $region37: #{decoder_forward.2} parent=11 // pred_check
        %p268 = pneg %p188
      $region38: #{decoder_forward.2} parent=11 // pred_check_branch
        %270 = sbr.rel (%p268) target = $region40
      $region39: #{decoder_forward.2} parent=11 // pred_region
        _
      $region40: #{decoder_forward.2} parent=11 // pred_fallthru
        _
      // Predicated region
      $region41: #{decoder_forward.2} parent=11 // pred_check
        %p271 = pneg %p209
      $region42: #{decoder_forward.2} parent=11 // pred_check_branch
        %273 = sbr.rel (%p271) target = $region44
      $region43: #{decoder_forward.2} parent=11 // pred_region
        _
      $region44: #{decoder_forward.2} parent=11 // pred_fallthru
        _
    $region12: #{decoder_forward.2} parent=5 // pred_fallthru
      _
    %p274 = scmp.lt.s32.totalorder %s15, 2
    // Predicated region
    $region45: #{decoder_forward.2} parent=5 // pred_check
      %p275 = pneg %p274
    $region46: #{decoder_forward.2} parent=5 // pred_check_branch
      %277 = sbr.rel (%p275) target = $region48
    $region47: #{decoder_forward.2} parent=5 // pred_region
      // Predicated region
      $region49: #{decoder_forward.2} parent=47 // pred_check
        %p278 = pneg %p35
      $region50: #{decoder_forward.2} parent=47 // pred_check_branch
        %280 = sbr.rel (%p278) target = $region52
      $region51: #{decoder_forward.2} parent=47 // pred_region
        %p281 = scmp.lt.s32.totalorder %s15, 1
        %s282 = scalar_select %p281, %s15, 1
        %s283 = smul.addr %s282, 2
        %s284 = smul.addr %s283, 4
        %s285 = scalar_lea.vmem %s0, %s284
      $region52: #{decoder_forward.2} parent=47 // pred_fallthru
        _
    $region48: #{decoder_forward.2} parent=5 // pred_fallthru
      _
    %p286 = scmp.le.s32.totalorder 1, %s15
    %p287 = scmp.lt.s32.totalorder %s15, 3
    %p288 = pnand %p286, %p287
    %p289 = pneg %p288
    // Predicated region
    $region53: #{decoder_forward.2} parent=5 // pred_check
      _
    $region54: #{decoder_forward.2} parent=5 // pred_check_branch
      %291 = sbr.rel (%p288) target = $region56
    $region55: #{decoder_forward.2} parent=5 // pred_region
      %s292 = ssub.s32 %s15, 1
      %p293 = scmp.lt.s32.totalorder %s20, 1
      %s294 = scalar_select %p293, %s20, 1
      %s295 = smul.addr %s294, 2
      %s296 = smul.addr %s295, 4
      %s297 = scalar_lea.vmem %s0, %s296
      %p298 = pneg %p41
      %p299 = pneg %p38
      %p300 = pneg %p62
      %p301 = pneg %p59
      %p302 = pneg %p83
      %p303 = pneg %p80
      %p304 = pneg %p104
      %p305 = pneg %p101
      %p306 = pneg %p125
      %p307 = pneg %p122
      %p308 = pneg %p146
      %p309 = pneg %p143
      %p310 = pneg %p167
      %p311 = pneg %p164
      %p312 = pneg %p188
      %p313 = pneg %p185
      %p314 = pneg %p209
      %p315 = pneg %p206
      %p316 = pneg %p235
      %p317 = pneg %p232
      %p318 = scmp.lt.s32.totalorder %s20, 1
      %s319 = scalar_select %p318, %s20, 1
      %s320 = smul.addr %s319, 8
      %s321 = smul.addr %s320, 4
      %s322 = scalar_lea.vmem %s9, %s321
      %p323 = scmp.lt.s32.totalorder %s20, 1
      %s324 = scalar_select %p323, %s20, 1
      %s325 = smul.addr %s324, 2
      %s326 = smul.addr %s325, 4
      %s327 = scalar_lea.vmem %s0, %s326
      %p328 = scmp.lt.s32.totalorder %s20, 1
      %s329 = scalar_select %p328, %s20, 1
      %s330 = smul.addr %s329, 8
      %s331 = smul.addr %s330, 4
      %s332 = scalar_lea.vmem %s9, %s331
      %v334 = vld [vmem:[%s327] sm:$0xf]
      %v335 = vld [vmem:[%s327 + $0x4] sm:$0xf]
      %v336 = vld [vmem:[%s1] sm:$0xf]
      %v337 = vld [vmem:[%s2] sm:$0x1]
      %v339 = vperm.slane %v337, 0
      %v343 = vunpack.c.l.b16 %v334
      %v344 = vunpack.c.l.b16 %v335
      %v345 = vpack.c.b16 %v344, %v343
      %vm346 = vcmask 64512
      %v348 = vsel %vm346, %v345, 0
      %vm350 = vcmask 1043456
      %v352 = vsel %vm350, %v336, 0
      %354 = vmatpush.bf16.msra.mxu0 0
      %355 = vmatpush.bf16.msra.mxu0 0
      %356 = vmatpush.bf16.msra.mxu0 0
      %357 = vmatpush.bf16.msra.mxu0 0
      %358 = vmatpush.bf16.msra.mxu0 0
      %359 = vmatpush.bf16.msra.mxu0 0
      %360 = vmatpush.bf16.msra.mxu0 0
      %361 = vmatpush.bf16.msra.mxu0 %v352
      %362 = vmatmul.bf16.gmra.mxu0 %v348
      %v363 = vpop.f32.mrf.mxu0
      %v364 = vadd.f32 %v339, %v363
      %v365 = vpop.f32.mrf.mxu0
      %v366 = vadd.f32 %v339, %v365
      %367 = vdwg.mxu0
      %v368 = vadd.f32 %v364, 3.0
      %v369 = vadd.f32 %v366, 3.0
      %v370 = vmax.f32 %v368, 0.0
      %v371 = vmax.f32 %v369, 0.0
      %v372 = vmin.f32 %v370, 6.0
      %v373 = vmin.f32 %v371, 6.0
      %v374 = vmul.f32 %v364, %v372
      %v375 = vmul.f32 %v366, %v373
      %v376 = vmul.f32 %v374, 0.16666667
      %v377 = vmul.f32 %v375, 0.16666667
      %v378 = vpack.c.bf16 %v377, %v376
      %v379 = vld [vmem:[%s3] sm:$0xf]
      %v380 = vld [vmem:[%s3 + $0x4] sm:$0xf]
      %v381 = vld [vmem:[%s3 + $0x8] sm:$0xf]
      %v382 = vld [vmem:[%s3 + $0xc] sm:$0xf]
      %v383 = vld [vmem:[%s4] sm:$0x1]
      %v385 = vperm.slane %v383, 0
      %v391 = vunpack.c.l.b16 %v379
      %v392 = vunpack.c.l.b16 %v380
      %v393 = vunpack.c.l.b16 %v381
      %v394 = vunpack.c.l.b16 %v382
      %v395 = vpack.c.b16 %v392, %v391
      %v396 = vpack.c.b16 %v394, %v393
      %vm399 = vcmask 261120
      %v401 = vsel %vm399, %v378, 0
      %403 = vmatpush.bf16.msra.mxu0 0
      %404 = vmatpush.bf16.msra.mxu0 0
      %405 = vmatpush.bf16.msra.mxu0 0
      %406 = vmatpush.bf16.msra.mxu0 0
      %407 = vmatpush.bf16.msra.mxu0 0
      %408 = vmatpush.bf16.msra.mxu0 0
      %409 = vmatpush.bf16.msra.mxu0 %v396
      %410 = vmatpush.bf16.msra.mxu0 %v395
      %411 = vmatmul.bf16.gmra.mxu0 %v401
      %v412 = vpop.f32.mrf.mxu0
      %v413 = vadd.f32 %v385, %v412
      %v414 = vpop.f32.mrf.mxu0
      %v415 = vadd.f32 %v385, %v414
      %416 = vdwg.mxu0
      %v417 = vadd.f32 %v413, 3.0
      %v418 = vadd.f32 %v415, 3.0
      %v419 = vmax.f32 %v417, 0.0
      %v420 = vmax.f32 %v418, 0.0
      %v421 = vmin.f32 %v419, 6.0
      %v422 = vmin.f32 %v420, 6.0
      %v423 = vmul.f32 %v413, %v421
      %v424 = vmul.f32 %v415, %v422
      %v425 = vmul.f32 %v423, 0.16666667
      %v426 = vmul.f32 %v424, 0.16666667
      %v427 = vpack.c.bf16 %v426, %v425
      %v428 = vld [vmem:[%s5] sm:$0xff]
      %v429 = vld [vmem:[%s5 + $0x8] sm:$0xff]
      %v430 = vld [vmem:[%s5 + $0x10] sm:$0xff]
      %v431 = vld [vmem:[%s5 + $0x18] sm:$0xff]
      %v432 = vld [vmem:[%s6] sm:$0x3]
      %v434 = vperm.slane %v432, 0
      %v435 = vperm.slane %v432, 1
      %v442 = vunpack.c.l.b16 %v428
      %v443 = vunpack.c.h.b16 %v428
      %v444 = vunpack.c.l.b16 %v429
      %v445 = vunpack.c.h.b16 %v429
      %v446 = vunpack.c.l.b16 %v430
      %v447 = vunpack.c.h.b16 %v430
      %v448 = vunpack.c.l.b16 %v431
      %v449 = vunpack.c.h.b16 %v431
      %v450 = vpack.c.b16 %v444, %v442
      %v451 = vpack.c.b16 %v445, %v443
      %v452 = vpack.c.b16 %v448, %v446
      %v453 = vpack.c.b16 %v449, %v447
      %v459 = vsel %vm399, %v427, 0
      %461 = vmatpush.bf16.msra.mxu0 0
      %462 = vmatpush.bf16.msra.mxu0 0
      %463 = vmatpush.bf16.msra.mxu0 0
      %464 = vmatpush.bf16.msra.mxu0 0
      %465 = vmatpush.bf16.msra.mxu0 0
      %466 = vmatpush.bf16.msra.mxu0 0
      %467 = vmatpush.bf16.msra.mxu0 %v452
      %468 = vmatpush.bf16.msra.mxu0 %v450
      %469 = vmatmul.bf16.gmra.mxu0 %v459
      %v470 = vpop.f32.mrf.mxu0
      %v471 = vadd.f32 %v434, %v470
      %v472 = vpop.f32.mrf.mxu0
      %v473 = vadd.f32 %v434, %v472
      %474 = vdwg.mxu0
      %475 = vmatpush.bf16.msra.mxu0 0
      %476 = vmatpush.bf16.msra.mxu0 0
      %477 = vmatpush.bf16.msra.mxu0 0
      %478 = vmatpush.bf16.msra.mxu0 0
      %479 = vmatpush.bf16.msra.mxu0 0
      %480 = vmatpush.bf16.msra.mxu0 0
      %481 = vmatpush.bf16.msra.mxu0 %v453
      %482 = vmatpush.bf16.msra.mxu0 %v451
      %483 = vmatmul.bf16.gmra.mxu0 %v459
      %v484 = vpop.f32.mrf.mxu0
      %v485 = vadd.f32 %v435, %v484
      %v486 = vpop.f32.mrf.mxu0
      %v487 = vadd.f32 %v435, %v486
      %488 = vdwg.mxu0
      %v489 = vadd.f32 %v471, 3.0
      %v490 = vadd.f32 %v485, 3.0
      %v491 = vadd.f32 %v473, 3.0
      %v492 = vadd.f32 %v487, 3.0
      %v493 = vmax.f32 %v489, 0.0
      %v494 = vmax.f32 %v490, 0.0
      %v495 = vmax.f32 %v491, 0.0
      %v496 = vmax.f32 %v492, 0.0
      %v497 = vmin.f32 %v493, 6.0
      %v498 = vmin.f32 %v494, 6.0
      %v499 = vmin.f32 %v495, 6.0
      %v500 = vmin.f32 %v496, 6.0
      %v501 = vmul.f32 %v471, %v497
      %v502 = vmul.f32 %v485, %v498
      %v503 = vmul.f32 %v473, %v499
      %v504 = vmul.f32 %v487, %v500
      %v505 = vmul.f32 %v501, 0.16666667
      %v506 = vmul.f32 %v502, 0.16666667
      %v507 = vmul.f32 %v503, 0.16666667
      %v508 = vmul.f32 %v504, 0.16666667
      %v509 = vpack.c.bf16 %v507, %v505
      %v510 = vpack.c.bf16 %v508, %v506
      %v511 = vld [vmem:[%s7] sm:$0xff]
      %v512 = vld [vmem:[%s7 + $0x8] sm:$0xff]
      %v513 = vld [vmem:[%s7 + $0x10] sm:$0xff]
      %v514 = vld [vmem:[%s7 + $0x18] sm:$0xff]
      %v515 = vld [vmem:[%s7 + $0x20] sm:$0xff]
      %v516 = vld [vmem:[%s7 + $0x28] sm:$0xff]
      %v517 = vld [vmem:[%s7 + $0x30] sm:$0xff]
      %v518 = vld [vmem:[%s7 + $0x38] sm:$0xff]
      %v519 = vld [vmem:[%s7 + $0x40] sm:$0xff]
      %v520 = vld [vmem:[%s7 + $0x48] sm:$0xff]
      %v521 = vld [vmem:[%s7 + $0x50] sm:$0xff]
      %v522 = vld [vmem:[%s7 + $0x58] sm:$0xff]
      %v523 = vld [vmem:[%s7 + $0x60] sm:$0xff]
      %v524 = vld [vmem:[%s7 + $0x68] sm:$0xff]
      %v525 = vld [vmem:[%s7 + $0x70] sm:$0xff]
      %v526 = vld [vmem:[%s7 + $0x78] sm:$0xff]
      %v527 = vld [vmem:[%s7 + $0x80] sm:$0xff]
      %v528 = vld [vmem:[%s7 + $0x88] sm:$0xff]
      %v529 = vld [vmem:[%s7 + $0x90] sm:$0xff]
      %v530 = vld [vmem:[%s7 + $0x98] sm:$0xff]
      %v531 = vld [vmem:[%s7 + $0xa0] sm:$0xff]
      %v532 = vld [vmem:[%s7 + $0xa8] sm:$0xff]
      %v533 = vld [vmem:[%s7 + $0xb0] sm:$0xff]
      %v534 = vld [vmem:[%s7 + $0xb8] sm:$0xff]
      %v535 = vld [vmem:[%s7 + $0xc0] sm:$0xff]
      %v536 = vld [vmem:[%s7 + $0xc8] sm:$0xff]
      %v537 = vld [vmem:[%s7 + $0xd0] sm:$0xff]
      %v538 = vld [vmem:[%s7 + $0xd8] sm:$0xff]
      %v539 = vld [vmem:[%s7 + $0xe0] sm:$0xff]
      %v540 = vld [vmem:[%s7 + $0xe8] sm:$0xff]
      %v541 = vld [vmem:[%s7 + $0xf0] sm:$0xff]
      %v542 = vld [vmem:[%s7 + $0xf8] sm:$0xff]
      %v543 = vld [vmem:[%s7 + $0x100] sm:$0xff]
      %v544 = vld [vmem:[%s7 + $0x108] sm:$0xff]
      %v545 = vld [vmem:[%s7 + $0x110] sm:$0xff]
      %v546 = vld [vmem:[%s7 + $0x118] sm:$0xff]
      %v547 = vld [vmem:[%s7 + $0x120] sm:$0xff]
      %v548 = vld [vmem:[%s7 + $0x128] sm:$0xff]
      %v549 = vld [vmem:[%s7 + $0x130] sm:$0xff]
      %v550 = vld [vmem:[%s7 + $0x138] sm:$0xff]
      %v551 = vld [vmem:[%s7 + $0x140] sm:$0xff]
      %v552 = vld [vmem:[%s7 + $0x148] sm:$0xff]
      %v553 = vld [vmem:[%s7 + $0x150] sm:$0xff]
      %v554 = vld [vmem:[%s7 + $0x158] sm:$0xff]
      %v555 = vld [vmem:[%s7 + $0x160] sm:$0xff]
      %v556 = vld [vmem:[%s7 + $0x168] sm:$0xff]
      %v557 = vld [vmem:[%s7 + $0x170] sm:$0xff]
      %v558 = vld [vmem:[%s7 + $0x178] sm:$0xff]
      %v559 = vld [vmem:[%s7 + $0x180] sm:$0xff]
      %v560 = vld [vmem:[%s7 + $0x188] sm:$0xff]
      %v561 = vld [vmem:[%s7 + $0x190] sm:$0xff]
      %v562 = vld [vmem:[%s7 + $0x198] sm:$0xff]
      %v563 = vld [vmem:[%s7 + $0x1a0] sm:$0xff]
      %v564 = vld [vmem:[%s7 + $0x1a8] sm:$0xff]
      %v565 = vld [vmem:[%s7 + $0x1b0] sm:$0xff]
      %v566 = vld [vmem:[%s7 + $0x1b8] sm:$0xff]
      %v567 = vld [vmem:[%s7 + $0x1c0] sm:$0xff]
      %v568 = vld [vmem:[%s7 + $0x1c8] sm:$0xff]
      %v569 = vld [vmem:[%s7 + $0x1d0] sm:$0xff]
      %v570 = vld [vmem:[%s7 + $0x1d8] sm:$0xff]
      %v571 = vld [vmem:[%s7 + $0x1e0] sm:$0xff]
      %v572 = vld [vmem:[%s7 + $0x1e8] sm:$0xff]
      %v573 = vld [vmem:[%s7 + $0x1f0] sm:$0xff]
      %v574 = vld [vmem:[%s7 + $0x1f8] sm:$0xff]
      %v575 = vld [vmem:[%s8] sm:$0xf]
      %v577 = vperm.slane %v575, 0
      %v578 = vperm.slane %v575, 1
      %v579 = vperm.slane %v575, 2
      %v580 = vperm.slane %v575, 3
      %v649 = vunpack.c.l.b16 %v511
      %v650 = vunpack.c.h.b16 %v511
      %v651 = vunpack.c.l.b16 %v512
      %v652 = vunpack.c.h.b16 %v512
      %v653 = vunpack.c.l.b16 %v513
      %v654 = vunpack.c.h.b16 %v513
      %v655 = vunpack.c.l.b16 %v514
      %v656 = vunpack.c.h.b16 %v514
      %v657 = vunpack.c.l.b16 %v515
      %v658 = vunpack.c.h.b16 %v515
      %v659 = vunpack.c.l.b16 %v516
      %v660 = vunpack.c.h.b16 %v516
      %v661 = vunpack.c.l.b16 %v517
      %v662 = vunpack.c.h.b16 %v517
      %v663 = vunpack.c.l.b16 %v518
      %v664 = vunpack.c.h.b16 %v518
      %v665 = vunpack.c.l.b16 %v519
      %v666 = vunpack.c.h.b16 %v519
      %v667 = vunpack.c.l.b16 %v520
      %v668 = vunpack.c.h.b16 %v520
      %v669 = vunpack.c.l.b16 %v521
      %v670 = vunpack.c.h.b16 %v521
      %v671 = vunpack.c.l.b16 %v522
      %v672 = vunpack.c.h.b16 %v522
      %v673 = vunpack.c.l.b16 %v523
      %v674 = vunpack.c.h.b16 %v523
      %v675 = vunpack.c.l.b16 %v524
      %v676 = vunpack.c.h.b16 %v524
      %v677 = vunpack.c.l.b16 %v525
      %v678 = vunpack.c.h.b16 %v525
      %v679 = vunpack.c.l.b16 %v526
      %v680 = vunpack.c.h.b16 %v526
      %v681 = vunpack.c.l.b16 %v527
      %v682 = vunpack.c.h.b16 %v527
      %v683 = vunpack.c.l.b16 %v528
      %v684 = vunpack.c.h.b16 %v528
      %v685 = vunpack.c.l.b16 %v529
      %v686 = vunpack.c.h.b16 %v529
      %v687 = vunpack.c.l.b16 %v530
      %v688 = vunpack.c.h.b16 %v530
      %v689 = vunpack.c.l.b16 %v531
      %v690 = vunpack.c.h.b16 %v531
      %v691 = vunpack.c.l.b16 %v532
      %v692 = vunpack.c.h.b16 %v532
      %v693 = vunpack.c.l.b16 %v533
      %v694 = vunpack.c.h.b16 %v533
      %v695 = vunpack.c.l.b16 %v534
      %v696 = vunpack.c.h.b16 %v534
      %v697 = vunpack.c.l.b16 %v535
      %v698 = vunpack.c.h.b16 %v535
      %v699 = vunpack.c.l.b16 %v536
      %v700 = vunpack.c.h.b16 %v536
      %v701 = vunpack.c.l.b16 %v537
      %v702 = vunpack.c.h.b16 %v537
      %v703 = vunpack.c.l.b16 %v538
      %v704 = vunpack.c.h.b16 %v538
      %v705 = vunpack.c.l.b16 %v539
      %v706 = vunpack.c.h.b16 %v539
      %v707 = vunpack.c.l.b16 %v540
      %v708 = vunpack.c.h.b16 %v540
      %v709 = vunpack.c.l.b16 %v541
      %v710 = vunpack.c.h.b16 %v541
      %v711 = vunpack.c.l.b16 %v542
      %v712 = vunpack.c.h.b16 %v542
      %v713 = vunpack.c.l.b16 %v543
      %v714 = vunpack.c.h.b16 %v543
      %v715 = vunpack.c.l.b16 %v544
      %v716 = vunpack.c.h.b16 %v544
      %v717 = vunpack.c.l.b16 %v545
      %v718 = vunpack.c.h.b16 %v545
      %v719 = vunpack.c.l.b16 %v546
      %v720 = vunpack.c.h.b16 %v546
      %v721 = vunpack.c.l.b16 %v547
      %v722 = vunpack.c.h.b16 %v547
      %v723 = vunpack.c.l.b16 %v548
      %v724 = vunpack.c.h.b16 %v548
      %v725 = vunpack.c.l.b16 %v549
      %v726 = vunpack.c.h.b16 %v549
      %v727 = vunpack.c.l.b16 %v550
      %v728 = vunpack.c.h.b16 %v550
      %v729 = vunpack.c.l.b16 %v551
      %v730 = vunpack.c.h.b16 %v551
      %v731 = vunpack.c.l.b16 %v552
      %v732 = vunpack.c.h.b16 %v552
      %v733 = vunpack.c.l.b16 %v553
      %v734 = vunpack.c.h.b16 %v553
      %v735 = vunpack.c.l.b16 %v554
      %v736 = vunpack.c.h.b16 %v554
      %v737 = vunpack.c.l.b16 %v555
      %v738 = vunpack.c.h.b16 %v555
      %v739 = vunpack.c.l.b16 %v556
      %v740 = vunpack.c.h.b16 %v556
      %v741 = vunpack.c.l.b16 %v557
      %v742 = vunpack.c.h.b16 %v557
      %v743 = vunpack.c.l.b16 %v558
      %v744 = vunpack.c.h.b16 %v558
      %v745 = vunpack.c.l.b16 %v559
      %v746 = vunpack.c.h.b16 %v559
      %v747 = vunpack.c.l.b16 %v560
      %v748 = vunpack.c.h.b16 %v560
      %v749 = vunpack.c.l.b16 %v561
      %v750 = vunpack.c.h.b16 %v561
      %v751 = vunpack.c.l.b16 %v562
      %v752 = vunpack.c.h.b16 %v562
      %v753 = vunpack.c.l.b16 %v563
      %v754 = vunpack.c.h.b16 %v563
      %v755 = vunpack.c.l.b16 %v564
      %v756 = vunpack.c.h.b16 %v564
      %v757 = vunpack.c.l.b16 %v565
      %v758 = vunpack.c.h.b16 %v565
      %v759 = vunpack.c.l.b16 %v566
      %v760 = vunpack.c.h.b16 %v566
      %v761 = vunpack.c.l.b16 %v567
      %v762 = vunpack.c.h.b16 %v567
      %v763 = vunpack.c.l.b16 %v568
      %v764 = vunpack.c.h.b16 %v568
      %v765 = vunpack.c.l.b16 %v569
      %v766 = vunpack.c.h.b16 %v569
      %v767 = vunpack.c.l.b16 %v570
      %v768 = vunpack.c.h.b16 %v570
      %v769 = vunpack.c.l.b16 %v571
      %v770 = vunpack.c.h.b16 %v571
      %v771 = vunpack.c.l.b16 %v572
      %v772 = vunpack.c.h.b16 %v572
      %v773 = vunpack.c.l.b16 %v573
      %v774 = vunpack.c.h.b16 %v573
      %v775 = vunpack.c.l.b16 %v574
      %v776 = vunpack.c.h.b16 %v574
      %v777 = vpack.c.b16 %v653, %v649
      %v778 = vpack.c.b16 %v654, %v650
      %v779 = vpack.c.b16 %v655, %v651
      %v780 = vpack.c.b16 %v656, %v652
      %v781 = vpack.c.b16 %v661, %v657
      %v782 = vpack.c.b16 %v662, %v658
      %v783 = vpack.c.b16 %v663, %v659
      %v784 = vpack.c.b16 %v664, %v660
      %v785 = vpack.c.b16 %v669, %v665
      %v786 = vpack.c.b16 %v670, %v666
      %v787 = vpack.c.b16 %v671, %v667
      %v788 = vpack.c.b16 %v672, %v668
      %v789 = vpack.c.b16 %v677, %v673
      %v790 = vpack.c.b16 %v678, %v674
      %v791 = vpack.c.b16 %v679, %v675
      %v792 = vpack.c.b16 %v680, %v676
      %v793 = vpack.c.b16 %v685, %v681
      %v794 = vpack.c.b16 %v686, %v682
      %v795 = vpack.c.b16 %v687, %v683
      %v796 = vpack.c.b16 %v688, %v684
      %v797 = vpack.c.b16 %v693, %v689
      %v798 = vpack.c.b16 %v694, %v690
      %v799 = vpack.c.b16 %v695, %v691
      %v800 = vpack.c.b16 %v696, %v692
      %v801 = vpack.c.b16 %v701, %v697
      %v802 = vpack.c.b16 %v702, %v698
      %v803 = vpack.c.b16 %v703, %v699
      %v804 = vpack.c.b16 %v704, %v700
      %v805 = vpack.c.b16 %v709, %v705
      %v806 = vpack.c.b16 %v710, %v706
      %v807 = vpack.c.b16 %v711, %v707
      %v808 = vpack.c.b16 %v712, %v708
      %v809 = vpack.c.b16 %v717, %v713
      %v810 = vpack.c.b16 %v718, %v714
      %v811 = vpack.c.b16 %v719, %v715
      %v812 = vpack.c.b16 %v720, %v716
      %v813 = vpack.c.b16 %v725, %v721
      %v814 = vpack.c.b16 %v726, %v722
      %v815 = vpack.c.b16 %v727, %v723
      %v816 = vpack.c.b16 %v728, %v724
      %v817 = vpack.c.b16 %v733, %v729
      %v818 = vpack.c.b16 %v734, %v730
      %v819 = vpack.c.b16 %v735, %v731
      %v820 = vpack.c.b16 %v736, %v732
      %v821 = vpack.c.b16 %v741, %v737
      %v822 = vpack.c.b16 %v742, %v738
      %v823 = vpack.c.b16 %v743, %v739
      %v824 = vpack.c.b16 %v744, %v740
      %v825 = vpack.c.b16 %v749, %v745
      %v826 = vpack.c.b16 %v750, %v746
      %v827 = vpack.c.b16 %v751, %v747
      %v828 = vpack.c.b16 %v752, %v748
      %v829 = vpack.c.b16 %v757, %v753
      %v830 = vpack.c.b16 %v758, %v754
      %v831 = vpack.c.b16 %v759, %v755
      %v832 = vpack.c.b16 %v760, %v756
      %v833 = vpack.c.b16 %v765, %v761
      %v834 = vpack.c.b16 %v766, %v762
      %v835 = vpack.c.b16 %v767, %v763
      %v836 = vpack.c.b16 %v768, %v764
      %v837 = vpack.c.b16 %v773, %v769
      %v838 = vpack.c.b16 %v774, %v770
      %v839 = vpack.c.b16 %v775, %v771
      %v840 = vpack.c.b16 %v776, %v772
      %905 = vmatpush.bf16.msra.mxu0 %v805
      %906 = vmatpush.bf16.msra.mxu0 %v801
      %907 = vmatpush.bf16.msra.mxu0 %v797
      %908 = vmatpush.bf16.msra.mxu0 %v793
      %909 = vmatpush.bf16.msra.mxu0 %v789
      %910 = vmatpush.bf16.msra.mxu0 %v785
      %911 = vmatpush.bf16.msra.mxu0 %v781
      %912 = vmatpush.bf16.msra.mxu0 %v777
      %913 = vmatmul.bf16.gmra.mxu0 %v509
      %v914 = vpop.f32.mrf.mxu0
      %v915 = vadd.f32 %v577, %v914
      %v916 = vpop.f32.mrf.mxu0
      %v917 = vadd.f32 %v577, %v916
      %918 = vdwg.mxu0
      %919 = vmatpush.bf16.msra.mxu0 %v837
      %920 = vmatpush.bf16.msra.mxu0 %v833
      %921 = vmatpush.bf16.msra.mxu0 %v829
      %922 = vmatpush.bf16.msra.mxu0 %v825
      %923 = vmatpush.bf16.msra.mxu0 %v821
      %924 = vmatpush.bf16.msra.mxu0 %v817
      %925 = vmatpush.bf16.msra.mxu0 %v813
      %926 = vmatpush.bf16.msra.mxu0 %v809
      %927 = vmatmul.bf16.gmra.mxu0 %v510
      %v928 = vpop.f32.mrf.mxu0
      %v929 = vadd.f32 %v915, %v928
      %v930 = vpop.f32.mrf.mxu0
      %v931 = vadd.f32 %v917, %v930
      %932 = vdwg.mxu0
      %933 = vmatpush.bf16.msra.mxu0 %v806
      %934 = vmatpush.bf16.msra.mxu0 %v802
      %935 = vmatpush.bf16.msra.mxu0 %v798
      %936 = vmatpush.bf16.msra.mxu0 %v794
      %937 = vmatpush.bf16.msra.mxu0 %v790
      %938 = vmatpush.bf16.msra.mxu0 %v786
      %939 = vmatpush.bf16.msra.mxu0 %v782
      %940 = vmatpush.bf16.msra.mxu0 %v778
      %941 = vmatmul.bf16.gmra.mxu0 %v509
      %v942 = vpop.f32.mrf.mxu0
      %v943 = vadd.f32 %v578, %v942
      %v944 = vpop.f32.mrf.mxu0
      %v945 = vadd.f32 %v578, %v944
      %946 = vdwg.mxu0
      %947 = vmatpush.bf16.msra.mxu0 %v838
      %948 = vmatpush.bf16.msra.mxu0 %v834
      %949 = vmatpush.bf16.msra.mxu0 %v830
      %950 = vmatpush.bf16.msra.mxu0 %v826
      %951 = vmatpush.bf16.msra.mxu0 %v822
      %952 = vmatpush.bf16.msra.mxu0 %v818
      %953 = vmatpush.bf16.msra.mxu0 %v814
      %954 = vmatpush.bf16.msra.mxu0 %v810
      %955 = vmatmul.bf16.gmra.mxu0 %v510
      %v956 = vpop.f32.mrf.mxu0
      %v957 = vadd.f32 %v943, %v956
      %v958 = vpop.f32.mrf.mxu0
      %v959 = vadd.f32 %v945, %v958
      %960 = vdwg.mxu0
      %961 = vmatpush.bf16.msra.mxu0 %v807
      %962 = vmatpush.bf16.msra.mxu0 %v803
      %963 = vmatpush.bf16.msra.mxu0 %v799
      %964 = vmatpush.bf16.msra.mxu0 %v795
      %965 = vmatpush.bf16.msra.mxu0 %v791
      %966 = vmatpush.bf16.msra.mxu0 %v787
      %967 = vmatpush.bf16.msra.mxu0 %v783
      %968 = vmatpush.bf16.msra.mxu0 %v779
      %969 = vmatmul.bf16.gmra.mxu0 %v509
      %v970 = vpop.f32.mrf.mxu0
      %v971 = vadd.f32 %v579, %v970
      %v972 = vpop.f32.mrf.mxu0
      %v973 = vadd.f32 %v579, %v972
      %974 = vdwg.mxu0
      %975 = vmatpush.bf16.msra.mxu0 %v839
      %976 = vmatpush.bf16.msra.mxu0 %v835
      %977 = vmatpush.bf16.msra.mxu0 %v831
      %978 = vmatpush.bf16.msra.mxu0 %v827
      %979 = vmatpush.bf16.msra.mxu0 %v823
      %980 = vmatpush.bf16.msra.mxu0 %v819
      %981 = vmatpush.bf16.msra.mxu0 %v815
      %982 = vmatpush.bf16.msra.mxu0 %v811
      %983 = vmatmul.bf16.gmra.mxu0 %v510
      %v984 = vpop.f32.mrf.mxu0
      %v985 = vadd.f32 %v971, %v984
      %v986 = vpop.f32.mrf.mxu0
      %v987 = vadd.f32 %v973, %v986
      %988 = vdwg.mxu0
      %989 = vmatpush.bf16.msra.mxu0 %v808
      %990 = vmatpush.bf16.msra.mxu0 %v804
      %991 = vmatpush.bf16.msra.mxu0 %v800
      %992 = vmatpush.bf16.msra.mxu0 %v796
      %993 = vmatpush.bf16.msra.mxu0 %v792
      %994 = vmatpush.bf16.msra.mxu0 %v788
      %995 = vmatpush.bf16.msra.mxu0 %v784
      %996 = vmatpush.bf16.msra.mxu0 %v780
      %997 = vmatmul.bf16.gmra.mxu0 %v509
      %v998 = vpop.f32.mrf.mxu0
      %v999 = vadd.f32 %v580, %v998
      %v1000 = vpop.f32.mrf.mxu0
      %v1001 = vadd.f32 %v580, %v1000
      %1002 = vdwg.mxu0
      %1003 = vmatpush.bf16.msra.mxu0 %v840
      %1004 = vmatpush.bf16.msra.mxu0 %v836
      %1005 = vmatpush.bf16.msra.mxu0 %v832
      %1006 = vmatpush.bf16.msra.mxu0 %v828
      %1007 = vmatpush.bf16.msra.mxu0 %v824
      %1008 = vmatpush.bf16.msra.mxu0 %v820
      %1009 = vmatpush.bf16.msra.mxu0 %v816
      %1010 = vmatpush.bf16.msra.mxu0 %v812
      %1011 = vmatmul.bf16.gmra.mxu0 %v510
      %v1012 = vpop.f32.mrf.mxu0
      %v1013 = vadd.f32 %v999, %v1012
      %v1014 = vpop.f32.mrf.mxu0
      %v1015 = vadd.f32 %v1001, %v1014
      %1016 = vdwg.mxu0
      %v1017 = vadd.f32 %v929, 3.0
      %v1018 = vadd.f32 %v957, 3.0
      %v1019 = vadd.f32 %v985, 3.0
      %v1020 = vadd.f32 %v1013, 3.0
      %v1021 = vadd.f32 %v931, 3.0
      %v1022 = vadd.f32 %v959, 3.0
      %v1023 = vadd.f32 %v987, 3.0
      %v1024 = vadd.f32 %v1015, 3.0
      %v1025 = vmax.f32 %v1017, 0.0
      %v1026 = vmax.f32 %v1018, 0.0
      %v1027 = vmax.f32 %v1019, 0.0
      %v1028 = vmax.f32 %v1020, 0.0
      %v1029 = vmax.f32 %v1021, 0.0
      %v1030 = vmax.f32 %v1022, 0.0
      %v1031 = vmax.f32 %v1023, 0.0
      %v1032 = vmax.f32 %v1024, 0.0
      %v1033 = vmin.f32 %v1025, 6.0
      %v1034 = vmin.f32 %v1026, 6.0
      %v1035 = vmin.f32 %v1027, 6.0
      %v1036 = vmin.f32 %v1028, 6.0
      %v1037 = vmin.f32 %v1029, 6.0
      %v1038 = vmin.f32 %v1030, 6.0
      %v1039 = vmin.f32 %v1031, 6.0
      %v1040 = vmin.f32 %v1032, 6.0
      %v1041 = vmul.f32 %v929, %v1033
      %v1042 = vmul.f32 %v957, %v1034
      %v1043 = vmul.f32 %v985, %v1035
      %v1044 = vmul.f32 %v1013, %v1036
      %v1045 = vmul.f32 %v931, %v1037
      %v1046 = vmul.f32 %v959, %v1038
      %v1047 = vmul.f32 %v987, %v1039
      %v1048 = vmul.f32 %v1015, %v1040
      %v1049 = vmul.f32 %v1041, 0.16666667
      %v1050 = vmul.f32 %v1042, 0.16666667
      %v1051 = vmul.f32 %v1043, 0.16666667
      %v1052 = vmul.f32 %v1044, 0.16666667
      %v1053 = vmul.f32 %v1045, 0.16666667
      %v1054 = vmul.f32 %v1046, 0.16666667
      %v1055 = vmul.f32 %v1047, 0.16666667
      %v1056 = vmul.f32 %v1048, 0.16666667
      %v1057 = vpack.c.bf16 %v1050, %v1049
      %v1058 = vpack.c.bf16 %v1052, %v1051
      %v1059 = vpack.c.bf16 %v1054, %v1053
      %v1060 = vpack.c.bf16 %v1056, %v1055
      %1061 = vst [vmem:[%s332] sm:$0xff] %v1057
      %1062 = vst [vmem:[%s332 + $0x8] sm:$0xff] %v1058
      %1063 = vst [vmem:[%s332 + $0x10] sm:$0xff] %v1059
      %1064 = vst [vmem:[%s332 + $0x18] sm:$0xff] %v1060
      %p1065 = scmp.lt.s32.totalorder %s20, 1
      %s1066 = scalar_select %p1065, %s20, 1
      %s1067 = smul.addr %s1066, 8
      %s1068 = smul.addr %s1067, 4
      %s1069 = scalar_lea.vmem %s9, %s1068
      // Predicated region
      $region57: #{decoder_forward.2} parent=55 // pred_check
        %p1070 = pneg %p232
      $region58: #{decoder_forward.2} parent=55 // pred_check_branch
        %1072 = sbr.rel (%p1070) target = $region60
      $region59: #{decoder_forward.2} parent=55 // pred_region
        _
      $region60: #{decoder_forward.2} parent=55 // pred_fallthru
        _
    $region56: #{decoder_forward.2} parent=5 // pred_fallthru
      _
    %p1073 = scmp.le.s32.totalorder 2, %s15
    // Predicated region
    $region61: #{decoder_forward.2} parent=5 // pred_check
      %p1074 = pneg %p1073
    $region62: #{decoder_forward.2} parent=5 // pred_check_branch
      %1076 = sbr.rel (%p1074) target = $region64
    $region63: #{decoder_forward.2} parent=5 // pred_region
      %s1077 = ssub.s32 %s15, 2
      // Predicated region
      $region65: #{decoder_forward.2} parent=63 // pred_check
        %p1078 = pneg %p238
      $region66: #{decoder_forward.2} parent=63 // pred_check_branch
        %1080 = sbr.rel (%p1078) target = $region68
      $region67: #{decoder_forward.2} parent=63 // pred_region
        %p1081 = scmp.lt.s32.totalorder %s21, 1
        %s1082 = scalar_select %p1081, %s21, 1
        %s1083 = smul.addr %s1082, 8
        %s1084 = smul.addr %s1083, 4
        %s1085 = scalar_lea.vmem %s9, %s1084
      $region68: #{decoder_forward.2} parent=63 // pred_fallthru
        _
    $region64: #{decoder_forward.2} parent=5 // pred_fallthru
      _
  $region6: #{decoder_forward.2} parent=0 // loop_footer
    %s19 = sadd.s32 1, %s15
  $region7: #{decoder_forward.2} parent=0 // loop_footer_branch
    %14 = sbr.rel target = $region3
  $region8: #{decoder_forward.2} parent=0 // loop_exit
    _

// kernel: tile.53
$region0: #{tile.53}
  #allocation0 [shape = 's32[1]{0}', space=sflag, size = 0x4, scoped, tag = 'scoped memory for tile.53']
  %s0 = inlined_call_operand.vmem [shape: f32[8], index: 0, kind: input, shape index: {}]
  %s1 = inlined_call_operand.vmem [shape: f32[32,8], index: 1, kind: output, shape index: {}]
  // Predicated region
  $region2: #{tile.53} parent=0 // pred_check
    _
  $region3: #{tile.53} parent=0 // pred_check_branch
    %3 = sbr.rel (0) target = $region5
  $region4: #{tile.53} parent=0 // pred_region
    _
  $region5: #{tile.53} parent=0 // pred_fallthru
    _
  %v4 = vld [vmem:[%s0] ss:$0 sm:$0xff]
  %5 = vst [vmem:[%s1] sm:$0xff] %v4
  %s6 = scalar_lea.vmem %s1, 8
  %7 = vst [vmem:[%s6] sm:$0xff] %v4
  %s8 = scalar_lea.vmem %s1, 16
  %9 = vst [vmem:[%s8] sm:$0xff] %v4
  %s10 = scalar_lea.vmem %s1, 24
  %11 = vst [vmem:[%s10] sm:$0xff] %v4

// kernel: tile.54
$region0: #{tile.54}
  %s0 = inlined_call_operand.vmem [shape: f32[32,8], index: 0, kind: input, shape index: {}]
  %s1 = inlined_call_operand.vmem [shape: f32[1,256], index: 1, kind: output, shape index: {}]
  $region1: #{tile.54} parent=0
    #allocation0 [shape = 'u8[8192]{0}', space=vmem, size = 0x2000, scoped, tag = 'scoped mem for output reshape']
    %s2 = smov 3
    %v3 = vld [vmem:[%s0] ss:$16 sm:%s2]
    %vm4 = vcmask 64512
    %5 = vst.msk [vmem:[#allocation0] ss:$8 sm:$0x3] %vm4, %v3
    %s6 = scalar_lea.vmem %s0, 15
    %s7 = smov 3
    %v8 = vld [vmem:[%s6] ss:$16 sm:%s7]
    %9 = vrot.lane.b32.xlu0 %v8, 120
    %v10 = vpop.permute.xlu0 %9
    %vm11 = vcmask 1048512
    %12 = vst.msk [vmem:[#allocation0] ss:$8 sm:$0x3] %vm11, %v10
    %s13 = scalar_lea.vmem %s0, 14
    %s14 = smov 3
    %v15 = vld [vmem:[%s13] ss:$16 sm:%s14]
    %16 = vrot.lane.b32.xlu0 %v15, 112
    %v17 = vpop.permute.xlu0 %16
    %vm18 = vcmask 982912
    %19 = vst.msk [vmem:[#allocation0] ss:$8 sm:$0x3] %vm18, %v17
    %s20 = scalar_lea.vmem %s0, 13
    %s21 = smov 3
    %v22 = vld [vmem:[%s20] ss:$16 sm:%s21]
    %23 = vrot.lane.b32.xlu0 %v22, 104
    %v24 = vpop.permute.xlu0 %23
    %vm25 = vcmask 917312
    %26 = vst.msk [vmem:[#allocation0] ss:$8 sm:$0x3] %vm25, %v24
    %s27 = scalar_lea.vmem %s0, 12
    %s28 = smov 3
    %v29 = vld [vmem:[%s27] ss:$16 sm:%s28]
    %30 = vrot.lane.b32.xlu0 %v29, 96
    %v31 = vpop.permute.xlu0 %30
    %vm32 = vcmask 851712
    %33 = vst.msk [vmem:[#allocation0] ss:$8 sm:$0x3] %vm32, %v31
    %s34 = scalar_lea.vmem %s0, 11
    %s35 = smov 3
    %v36 = vld [vmem:[%s34] ss:$16 sm:%s35]
    %37 = vrot.lane.b32.xlu0 %v36, 88
    %v38 = vpop.permute.xlu0 %37
    %vm39 = vcmask 786112
    %40 = vst.msk [vmem:[#allocation0] ss:$8 sm:$0x3] %vm39, %v38
    %s41 = scalar_lea.vmem %s0, 10
    %s42 = smov 3
    %v43 = vld [vmem:[%s41] ss:$16 sm:%s42]
    %44 = vrot.lane.b32.xlu0 %v43, 80
    %v45 = vpop.permute.xlu0 %44
    %vm46 = vcmask 720512
    %47 = vst.msk [vmem:[#allocation0] ss:$8 sm:$0x3] %vm46, %v45
    %s48 = scalar_lea.vmem %s0, 9
    %s49 = smov 3
    %v50 = vld [vmem:[%s48] ss:$16 sm:%s49]
    %51 = vrot.lane.b32.xlu0 %v50, 72
    %v52 = vpop.permute.xlu0 %51
    %vm53 = vcmask 654912
    %54 = vst.msk [vmem:[#allocation0] ss:$8 sm:$0x3] %vm53, %v52
    %s55 = scalar_lea.vmem %s0, 8
    %s56 = smov 3
    %v57 = vld [vmem:[%s55] ss:$16 sm:%s56]
    %58 = vrot.lane.b32.xlu0 %v57, 64
    %v59 = vpop.permute.xlu0 %58
    %vm60 = vcmask 589312
    %61 = vst.msk [vmem:[#allocation0] ss:$8 sm:$0x3] %vm60, %v59
    %s62 = scalar_lea.vmem %s0, 7
    %s63 = smov 3
    %v64 = vld [vmem:[%s62] ss:$16 sm:%s63]
    %65 = vrot.lane.b32.xlu0 %v64, 56
    %v66 = vpop.permute.xlu0 %65
    %vm67 = vcmask 523712
    %68 = vst.msk [vmem:[#allocation0] ss:$8 sm:$0x3] %vm67, %v66
    %s69 = scalar_lea.vmem %s0, 6
    %s70 = smov 3
    %v71 = vld [vmem:[%s69] ss:$16 sm:%s70]
    %72 = vrot.lane.b32.xlu0 %v71, 48
    %v73 = vpop.permute.xlu0 %72
    %vm74 = vcmask 458112
    %75 = vst.msk [vmem:[#allocation0] ss:$8 sm:$0x3] %vm74, %v73
    %s76 = scalar_lea.vmem %s0, 5
    %s77 = smov 3
    %v78 = vld [vmem:[%s76] ss:$16 sm:%s77]
    %79 = vrot.lane.b32.xlu0 %v78, 40
    %v80 = vpop.permute.xlu0 %79
    %vm81 = vcmask 392512
    %82 = vst.msk [vmem:[#allocation0] ss:$8 sm:$0x3] %vm81, %v80
    %s83 = scalar_lea.vmem %s0, 4
    %s84 = smov 3
    %v85 = vld [vmem:[%s83] ss:$16 sm:%s84]
    %86 = vrot.lane.b32.xlu0 %v85, 32
    %v87 = vpop.permute.xlu0 %86
    %vm88 = vcmask 326912
    %89 = vst.msk [vmem:[#allocation0] ss:$8 sm:$0x3] %vm88, %v87
    %s90 = scalar_lea.vmem %s0, 3
    %s91 = smov 3
    %v92 = vld [vmem:[%s90] ss:$16 sm:%s91]
    %93 = vrot.lane.b32.xlu0 %v92, 24
    %v94 = vpop.permute.xlu0 %93
    %vm95 = vcmask 261312
    %96 = vst.msk [vmem:[#allocation0] ss:$8 sm:$0x3] %vm95, %v94
    %s97 = scalar_lea.vmem %s0, 2
    %s98 = smov 3
    %v99 = vld [vmem:[%s97] ss:$16 sm:%s98]
    %100 = vrot.lane.b32.xlu0 %v99, 16
    %v101 = vpop.permute.xlu0 %100
    %vm102 = vcmask 195712
    %103 = vst.msk [vmem:[#allocation0] ss:$8 sm:$0x3] %vm102, %v101
    %s104 = scalar_lea.vmem %s0, 1
    %s105 = smov 3
    %v106 = vld [vmem:[%s104] ss:$16 sm:%s105]
    %107 = vrot.lane.b32.xlu0 %v106, 8
    %v108 = vpop.permute.xlu0 %107
    %vm109 = vcmask 130112
    %110 = vst.msk [vmem:[#allocation0] ss:$8 sm:$0x3] %vm109, %v108
    %s112 = ssub.s32 2, 1
    %v113 = vld [vmem:[#allocation0] sm:%s112]
    %s115 = ssub.s32 2, 1
    %116 = vst [vmem:[%s1] sm:%s115] %v113
    %s117 = scalar_lea.vmem [#allocation0], 8
    %v118 = vld [vmem:[%s117] sm:%s112]
    %s120 = ssub.s32 2, 1
    %s121 = scalar_lea.vmem %s1, 1
    %122 = vst [vmem:[%s121] sm:%s120] %v118

// kernel: tile.58
$region0: #{tile.58}
  #allocation0 [shape = 's32[1]{0}', space=sflag, size = 0x4, scoped, tag = 'scoped memory for tile.58']
  %s0 = inlined_call_operand.vmem [shape: f32[4], index: 0, kind: input, shape index: {}]
  %s1 = inlined_call_operand.vmem [shape: f32[32,4], index: 1, kind: output, shape index: {}]
  // Predicated region
  $region2: #{tile.58} parent=0 // pred_check
    _
  $region3: #{tile.58} parent=0 // pred_check_branch
    %3 = sbr.rel (0) target = $region5
  $region4: #{tile.58} parent=0 // pred_region
    _
  $region5: #{tile.58} parent=0 // pred_fallthru
    _
  %v4 = vld [vmem:[%s0] ss:$0 sm:$0xff]
  %5 = vst [vmem:[%s1] sm:$0xff] %v4
  %s6 = scalar_lea.vmem %s1, 8
  %7 = vst [vmem:[%s6] sm:$0xff] %v4
  %s8 = scalar_lea.vmem %s1, 16
  %9 = vst [vmem:[%s8] sm:$0xff] %v4
  %s10 = scalar_lea.vmem %s1, 24
  %11 = vst [vmem:[%s10] sm:$0xff] %v4

// kernel: tile.59
$region0: #{tile.59}
  %s0 = inlined_call_operand.vmem [shape: f32[32,4], index: 0, kind: input, shape index: {}]
  %s1 = inlined_call_operand.vmem [shape: f32[1,128], index: 1, kind: output, shape index: {}]
  $region1: #{tile.59} parent=0
    #allocation0 [shape = 'u8[4096]{0}', space=vmem, size = 0x1000, scoped, tag = 'scoped mem for output reshape']
    %v2 = vld [vmem:[%s0] sm:$0x1]
    %vm3 = vcmask 31744
    %4 = vst.msk [vmem:[#allocation0] sm:$0x1] %vm3, %v2
    %s5 = scalar_lea.vmem %s0, 31
    %v6 = vld [vmem:[%s5] sm:$0x1]
    %7 = vrot.lane.b32.xlu0 %v6, 124
    %v8 = vpop.permute.xlu0 %7
    %vm9 = vcmask 1048544
    %10 = vst.msk [vmem:[#allocation0] sm:$0x1] %vm9, %v8
    %s11 = scalar_lea.vmem %s0, 30
    %v12 = vld [vmem:[%s11] sm:$0x1]
    %13 = vrot.lane.b32.xlu0 %v12, 120
    %v14 = vpop.permute.xlu0 %13
    %vm15 = vcmask 1015744
    %16 = vst.msk [vmem:[#allocation0] sm:$0x1] %vm15, %v14
    %s17 = scalar_lea.vmem %s0, 29
    %v18 = vld [vmem:[%s17] sm:$0x1]
    %19 = vrot.lane.b32.xlu0 %v18, 116
    %v20 = vpop.permute.xlu0 %19
    %vm21 = vcmask 982944
    %22 = vst.msk [vmem:[#allocation0] sm:$0x1] %vm21, %v20
    %s23 = scalar_lea.vmem %s0, 28
    %v24 = vld [vmem:[%s23] sm:$0x1]
    %25 = vrot.lane.b32.xlu0 %v24, 112
    %v26 = vpop.permute.xlu0 %25
    %vm27 = vcmask 950144
    %28 = vst.msk [vmem:[#allocation0] sm:$0x1] %vm27, %v26
    %s29 = scalar_lea.vmem %s0, 27
    %v30 = vld [vmem:[%s29] sm:$0x1]
    %31 = vrot.lane.b32.xlu0 %v30, 108
    %v32 = vpop.permute.xlu0 %31
    %vm33 = vcmask 917344
    %34 = vst.msk [vmem:[#allocation0] sm:$0x1] %vm33, %v32
    %s35 = scalar_lea.vmem %s0, 26
    %v36 = vld [vmem:[%s35] sm:$0x1]
    %37 = vrot.lane.b32.xlu0 %v36, 104
    %v38 = vpop.permute.xlu0 %37
    %vm39 = vcmask 884544
    %40 = vst.msk [vmem:[#allocation0] sm:$0x1] %vm39, %v38
    %s41 = scalar_lea.vmem %s0, 25
    %v42 = vld [vmem:[%s41] sm:$0x1]
    %43 = vrot.lane.b32.xlu0 %v42, 100
    %v44 = vpop.permute.xlu0 %43
    %vm45 = vcmask 851744
    %46 = vst.msk [vmem:[#allocation0] sm:$0x1] %vm45, %v44
    %s47 = scalar_lea.vmem %s0, 24
    %v48 = vld [vmem:[%s47] sm:$0x1]
    %49 = vrot.lane.b32.xlu0 %v48, 96
    %v50 = vpop.permute.xlu0 %49
    %vm51 = vcmask 818944
    %52 = vst.msk [vmem:[#allocation0] sm:$0x1] %vm51, %v50
    %s53 = scalar_lea.vmem %s0, 23
    %v54 = vld [vmem:[%s53] sm:$0x1]
    %55 = vrot.lane.b32.xlu0 %v54, 92
    %v56 = vpop.permute.xlu0 %55
    %vm57 = vcmask 786144
    %58 = vst.msk [vmem:[#allocation0] sm:$0x1] %vm57, %v56
    %s59 = scalar_lea.vmem %s0, 22
    %v60 = vld [vmem:[%s59] sm:$0x1]
    %61 = vrot.lane.b32.xlu0 %v60, 88
    %v62 = vpop.permute.xlu0 %61
    %vm63 = vcmask 753344
    %64 = vst.msk [vmem:[#allocation0] sm:$0x1] %vm63, %v62
    %s65 = scalar_lea.vmem %s0, 21
    %v66 = vld [vmem:[%s65] sm:$0x1]
    %67 = vrot.lane.b32.xlu0 %v66, 84
    %v68 = vpop.permute.xlu0 %67
    %vm69 = vcmask 720544
    %70 = vst.msk [vmem:[#allocation0] sm:$0x1] %vm69, %v68
    %s71 = scalar_lea.vmem %s0, 20
    %v72 = vld [vmem:[%s71] sm:$0x1]
    %73 = vrot.lane.b32.xlu0 %v72, 80
    %v74 = vpop.permute.xlu0 %73
    %vm75 = vcmask 687744
    %76 = vst.msk [vmem:[#allocation0] sm:$0x1] %vm75, %v74
    %s77 = scalar_lea.vmem %s0, 19
    %v78 = vld [vmem:[%s77] sm:$0x1]
    %79 = vrot.lane.b32.xlu0 %v78, 76
    %v80 = vpop.permute.xlu0 %79
    %vm81 = vcmask 654944
    %82 = vst.msk [vmem:[#allocation0] sm:$0x1] %vm81, %v80
    %s83 = scalar_lea.vmem %s0, 18
    %v84 = vld [vmem:[%s83] sm:$0x1]
    %85 = vrot.lane.b32.xlu0 %v84, 72
    %v86 = vpop.permute.xlu0 %85
    %vm87 = vcmask 622144
    %88 = vst.msk [vmem:[#allocation0] sm:$0x1] %vm87, %v86
    %s89 = scalar_lea.vmem %s0, 17
    %v90 = vld [vmem:[%s89] sm:$0x1]
    %91 = vrot.lane.b32.xlu0 %v90, 68
    %v92 = vpop.permute.xlu0 %91
    %vm93 = vcmask 589344
    %94 = vst.msk [vmem:[#allocation0] sm:$0x1] %vm93, %v92
    %s95 = scalar_lea.vmem %s0, 16
    %v96 = vld [vmem:[%s95] sm:$0x1]
    %97 = vrot.lane.b32.xlu0 %v96, 64
    %v98 = vpop.permute.xlu0 %97
    %vm99 = vcmask 556544
    %100 = vst.msk [vmem:[#allocation0] sm:$0x1] %vm99, %v98
    %s101 = scalar_lea.vmem %s0, 15
    %v102 = vld [vmem:[%s101] sm:$0x1]
    %103 = vrot.lane.b32.xlu0 %v102, 60
    %v104 = vpop.permute.xlu0 %103
    %vm105 = vcmask 523744
    %106 = vst.msk [vmem:[#allocation0] sm:$0x1] %vm105, %v104
    %s107 = scalar_lea.vmem %s0, 14
    %v108 = vld [vmem:[%s107] sm:$0x1]
    %109 = vrot.lane.b32.xlu0 %v108, 56
    %v110 = vpop.permute.xlu0 %109
    %vm111 = vcmask 490944
    %112 = vst.msk [vmem:[#allocation0] sm:$0x1] %vm111, %v110
    %s113 = scalar_lea.vmem %s0, 13
    %v114 = vld [vmem:[%s113] sm:$0x1]
    %115 = vrot.lane.b32.xlu0 %v114, 52
    %v116 = vpop.permute.xlu0 %115
    %vm117 = vcmask 458144
    %118 = vst.msk [vmem:[#allocation0] sm:$0x1] %vm117, %v116
    %s119 = scalar_lea.vmem %s0, 12
    %v120 = vld [vmem:[%s119] sm:$0x1]
    %121 = vrot.lane.b32.xlu0 %v120, 48
    %v122 = vpop.permute.xlu0 %121
    %vm123 = vcmask 425344
    %124 = vst.msk [vmem:[#allocation0] sm:$0x1] %vm123, %v122
    %s125 = scalar_lea.vmem %s0, 11
    %v126 = vld [vmem:[%s125] sm:$0x1]
    %127 = vrot.lane.b32.xlu0 %v126, 44
    %v128 = vpop.permute.xlu0 %127
    %vm129 = vcmask 392544
    %130 = vst.msk [vmem:[#allocation0] sm:$0x1] %vm129, %v128
    %s131 = scalar_lea.vmem %s0, 10
    %v132 = vld [vmem:[%s131] sm:$0x1]
    %133 = vrot.lane.b32.xlu0 %v132, 40
    %v134 = vpop.permute.xlu0 %133
    %vm135 = vcmask 359744
    %136 = vst.msk [vmem:[#allocation0] sm:$0x1] %vm135, %v134
    %s137 = scalar_lea.vmem %s0, 9
    %v138 = vld [vmem:[%s137] sm:$0x1]
    %139 = vrot.lane.b32.xlu0 %v138, 36
    %v140 = vpop.permute.xlu0 %139
    %vm141 = vcmask 326944
    %142 = vst.msk [vmem:[#allocation0] sm:$0x1] %vm141, %v140
    %s143 = scalar_lea.vmem %s0, 8
    %v144 = vld [vmem:[%s143] sm:$0x1]
    %145 = vrot.lane.b32.xlu0 %v144, 32
    %v146 = vpop.permute.xlu0 %145
    %vm147 = vcmask 294144
    %148 = vst.msk [vmem:[#allocation0] sm:$0x1] %vm147, %v146
    %s149 = scalar_lea.vmem %s0, 7
    %v150 = vld [vmem:[%s149] sm:$0x1]
    %151 = vrot.lane.b32.xlu0 %v150, 28
    %v152 = vpop.permute.xlu0 %151
    %vm153 = vcmask 261344
    %154 = vst.msk [vmem:[#allocation0] sm:$0x1] %vm153, %v152
    %s155 = scalar_lea.vmem %s0, 6
    %v156 = vld [vmem:[%s155] sm:$0x1]
    %157 = vrot.lane.b32.xlu0 %v156, 24
    %v158 = vpop.permute.xlu0 %157
    %vm159 = vcmask 228544
    %160 = vst.msk [vmem:[#allocation0] sm:$0x1] %vm159, %v158
    %s161 = scalar_lea.vmem %s0, 5
    %v162 = vld [vmem:[%s161] sm:$0x1]
    %163 = vrot.lane.b32.xlu0 %v162, 20
    %v164 = vpop.permute.xlu0 %163
    %vm165 = vcmask 195744
    %166 = vst.msk [vmem:[#allocation0] sm:$0x1] %vm165, %v164
    %s167 = scalar_lea.vmem %s0, 4
    %v168 = vld [vmem:[%s167] sm:$0x1]
    %169 = vrot.lane.b32.xlu0 %v168, 16
    %v170 = vpop.permute.xlu0 %169
    %vm171 = vcmask 162944
    %172 = vst.msk [vmem:[#allocation0] sm:$0x1] %vm171, %v170
    %s173 = scalar_lea.vmem %s0, 3
    %v174 = vld [vmem:[%s173] sm:$0x1]
    %175 = vrot.lane.b32.xlu0 %v174, 12
    %v176 = vpop.permute.xlu0 %175
    %vm177 = vcmask 130144
    %178 = vst.msk [vmem:[#allocation0] sm:$0x1] %vm177, %v176
    %s179 = scalar_lea.vmem %s0, 2
    %v180 = vld [vmem:[%s179] sm:$0x1]
    %181 = vrot.lane.b32.xlu0 %v180, 8
    %v182 = vpop.permute.xlu0 %181
    %vm183 = vcmask 97344
    %184 = vst.msk [vmem:[#allocation0] sm:$0x1] %vm183, %v182
    %s185 = scalar_lea.vmem %s0, 1
    %v186 = vld [vmem:[%s185] sm:$0x1]
    %187 = vrot.lane.b32.xlu0 %v186, 4
    %v188 = vpop.permute.xlu0 %187
    %vm189 = vcmask 64544
    %190 = vst.msk [vmem:[#allocation0] sm:$0x1] %vm189, %v188
    %s192 = ssub.s32 2, 1
    %v193 = vld [vmem:[#allocation0] sm:%s192]
    %s195 = ssub.s32 2, 1
    %196 = vst [vmem:[%s1] sm:%s195] %v193

// kernel: decoder_forward.3
$region0: #{decoder_forward.3}
  #allocation0 [shape = 'u32[]', space=smem, size = 0x4, offset = 0x4, fixed_abs, tag = 'smem constant byte address 0x4 - core index']
  #allocation1 [shape = 'u32[72,128]{1,0:T(1,128)}', space=vmem, size = 0x9000, scoped, tag = 'internal scratch']
  %s0 = inlined_call_operand.vmem [shape: bf16[2,32,256], index: 0, kind: input, shape index: {}]
  %s1 = inlined_call_operand.vmem [shape: bf16[3,32,32], index: 1, kind: input, shape index: {}]
  %s2 = inlined_call_operand.vmem [shape: bf16[3,256,256], index: 2, kind: input, shape index: {}]
  %s3 = inlined_call_operand.vmem [shape: f32[1,256], index: 3, kind: input, shape index: {}]
  %s4 = inlined_call_operand.vmem [shape: bf16[3,256,128], index: 4, kind: input, shape index: {}]
  %s5 = inlined_call_operand.vmem [shape: f32[1,128], index: 5, kind: input, shape index: {}]
  %s6 = inlined_call_operand.vmem [shape: f32[2,32,128], index: 6, kind: output, shape index: {}]
  %s7 = sld [smem:[#allocation0]]
  $region57: #{decoder_forward.3} parent=0
    _
  %s9 = ssub.s32 1, %s7
  %s10 = scalar_select 0, %s9, %s7
  loop: start=0, step=1, limit=4
  $region2: #{decoder_forward.3} parent=0 // loop_pre_header
    _
  $region3: #{decoder_forward.3} parent=0 // loop_header
    %s12 = sphi 0, %s16
    %p13 = scmp.ge.s32.totalorder %s12, 4
    %s22 = sphi 0, %s24
    %s25 = sphi 0, %s22
    %s26 = sphi 0, %s25
    %s42 = sphi 0, %s26
    %s46 = sphi 0, %s46
    %s48 = sphi 0, %s46
    %s49 = sphi 0, %s48
    %s63 = sphi 0, %s49
    %s67 = sphi 0, %s67
    %s69 = sphi 0, %s67
    %s70 = sphi 0, %s69
    %s84 = sphi 0, %s70
    %s88 = sphi 0, %s88
    %s90 = sphi 0, %s88
    %s91 = sphi 0, %s90
    %s105 = sphi 0, %s91
    %s109 = sphi 0, %s109
    %s111 = sphi 0, %s109
    %s112 = sphi 0, %s111
    %s126 = sphi 0, %s112
    %s130 = sphi 0, %s130
    %s132 = sphi 0, %s130
    %s133 = sphi 0, %s132
    %s147 = sphi 0, %s133
    %s153 = sphi 0, %s155
    %s156 = sphi 0, %s153
    %s157 = sphi 0, %s156
    %s173 = sphi 0, %s157
  $region4: #{decoder_forward.3} parent=0 // loop_header_branch
    %15 = sbr.rel (%p13) target = $region8
  $region5: #{decoder_forward.3} parent=0 // loop_body
    %s17 = ssub.s32 %s12, 1
    %s18 = ssub.s32 %s12, 2
    %s19 = sadd.s32 %s12, 1
    %s20 = ssub.s32 %s12, %s19
    %p21 = scmp.eq.s32.totalorder %s20, 0
    %s23 = sadd.s32 %s22, 1
    %s24 = scalar_select %p21, %s22, %s23
    %p27 = pneg %p21
    %p28 = scmp.eq.s32.totalorder %s12, 1
    %p29 = por %p27, %p28
    %p30 = scmp.ne.s32.totalorder %s22, %s25
    %p31 = scmp.eq.s32.totalorder %s12, 0
    %p32 = por %p30, %p31
    %p33 = scmp.ne.s32.totalorder %s22, %s25
    %p34 = scmp.eq.s32.totalorder %s17, 1
    %p35 = por %p33, %p34
    %p36 = scmp.ne.s32.totalorder %s25, %s26
    %p37 = scmp.eq.s32.totalorder %s17, 0
    %p38 = por %p36, %p37
    %p39 = scmp.ne.s32.totalorder %s25, %s26
    %p40 = scmp.eq.s32.totalorder %s18, 1
    %p41 = por %p39, %p40
    %p43 = scmp.ne.s32.totalorder %s26, %s42
    %p44 = scmp.eq.s32.totalorder %s18, 0
    %p45 = por %p43, %p44
    %s47 = sadd.s32 %s46, 1
    %p50 = scmp.eq.s32.totalorder %s12, 1
    %p51 = scmp.ne.s32.totalorder %s46, %s48
    %p52 = scmp.eq.s32.totalorder %s12, 0
    %p53 = por %p51, %p52
    %p54 = scmp.ne.s32.totalorder %s46, %s48
    %p55 = scmp.eq.s32.totalorder %s17, 1
    %p56 = por %p54, %p55
    %p57 = scmp.ne.s32.totalorder %s48, %s49
    %p58 = scmp.eq.s32.totalorder %s17, 0
    %p59 = por %p57, %p58
    %p60 = scmp.ne.s32.totalorder %s48, %s49
    %p61 = scmp.eq.s32.totalorder %s18, 1
    %p62 = por %p60, %p61
    %p64 = scmp.ne.s32.totalorder %s49, %s63
    %p65 = scmp.eq.s32.totalorder %s18, 0
    %p66 = por %p64, %p65
    %s68 = sadd.s32 %s67, 1
    %p71 = scmp.eq.s32.totalorder %s12, 1
    %p72 = scmp.ne.s32.totalorder %s67, %s69
    %p73 = scmp.eq.s32.totalorder %s12, 0
    %p74 = por %p72, %p73
    %p75 = scmp.ne.s32.totalorder %s67, %s69
    %p76 = scmp.eq.s32.totalorder %s17, 1
    %p77 = por %p75, %p76
    %p78 = scmp.ne.s32.totalorder %s69, %s70
    %p79 = scmp.eq.s32.totalorder %s17, 0
    %p80 = por %p78, %p79
    %p81 = scmp.ne.s32.totalorder %s69, %s70
    %p82 = scmp.eq.s32.totalorder %s18, 1
    %p83 = por %p81, %p82
    %p85 = scmp.ne.s32.totalorder %s70, %s84
    %p86 = scmp.eq.s32.totalorder %s18, 0
    %p87 = por %p85, %p86
    %s89 = sadd.s32 %s88, 1
    %p92 = scmp.eq.s32.totalorder %s12, 1
    %p93 = scmp.ne.s32.totalorder %s88, %s90
    %p94 = scmp.eq.s32.totalorder %s12, 0
    %p95 = por %p93, %p94
    %p96 = scmp.ne.s32.totalorder %s88, %s90
    %p97 = scmp.eq.s32.totalorder %s17, 1
    %p98 = por %p96, %p97
    %p99 = scmp.ne.s32.totalorder %s90, %s91
    %p100 = scmp.eq.s32.totalorder %s17, 0
    %p101 = por %p99, %p100
    %p102 = scmp.ne.s32.totalorder %s90, %s91
    %p103 = scmp.eq.s32.totalorder %s18, 1
    %p104 = por %p102, %p103
    %p106 = scmp.ne.s32.totalorder %s91, %s105
    %p107 = scmp.eq.s32.totalorder %s18, 0
    %p108 = por %p106, %p107
    %s110 = sadd.s32 %s109, 1
    %p113 = scmp.eq.s32.totalorder %s12, 1
    %p114 = scmp.ne.s32.totalorder %s109, %s111
    %p115 = scmp.eq.s32.totalorder %s12, 0
    %p116 = por %p114, %p115
    %p117 = scmp.ne.s32.totalorder %s109, %s111
    %p118 = scmp.eq.s32.totalorder %s17, 1
    %p119 = por %p117, %p118
    %p120 = scmp.ne.s32.totalorder %s111, %s112
    %p121 = scmp.eq.s32.totalorder %s17, 0
    %p122 = por %p120, %p121
    %p123 = scmp.ne.s32.totalorder %s111, %s112
    %p124 = scmp.eq.s32.totalorder %s18, 1
    %p125 = por %p123, %p124
    %p127 = scmp.ne.s32.totalorder %s112, %s126
    %p128 = scmp.eq.s32.totalorder %s18, 0
    %p129 = por %p127, %p128
    %s131 = sadd.s32 %s130, 1
    %p134 = scmp.eq.s32.totalorder %s12, 1
    %p135 = scmp.ne.s32.totalorder %s130, %s132
    %p136 = scmp.eq.s32.totalorder %s12, 0
    %p137 = por %p135, %p136
    %p138 = scmp.ne.s32.totalorder %s130, %s132
    %p139 = scmp.eq.s32.totalorder %s17, 1
    %p140 = por %p138, %p139
    %p141 = scmp.ne.s32.totalorder %s132, %s133
    %p142 = scmp.eq.s32.totalorder %s17, 0
    %p143 = por %p141, %p142
    %p144 = scmp.ne.s32.totalorder %s132, %s133
    %p145 = scmp.eq.s32.totalorder %s18, 1
    %p146 = por %p144, %p145
    %p148 = scmp.ne.s32.totalorder %s133, %s147
    %p149 = scmp.eq.s32.totalorder %s18, 0
    %p150 = por %p148, %p149
    %s151 = ssub.s32 %s12, %s19
    %p152 = scmp.eq.s32.totalorder %s151, 0
    %s154 = sadd.s32 %s153, 1
    %s155 = scalar_select %p152, %s153, %s154
    %p158 = pneg %p152
    %p159 = scmp.eq.s32.totalorder %s12, 1
    %p160 = por %p158, %p159
    %p161 = scmp.ne.s32.totalorder %s153, %s156
    %p162 = scmp.eq.s32.totalorder %s12, 0
    %p163 = por %p161, %p162
    %p164 = scmp.ne.s32.totalorder %s153, %s156
    %p165 = scmp.eq.s32.totalorder %s17, 1
    %p166 = por %p164, %p165
    %p167 = scmp.ne.s32.totalorder %s156, %s157
    %p168 = scmp.eq.s32.totalorder %s17, 0
    %p169 = por %p167, %p168
    %p170 = scmp.ne.s32.totalorder %s156, %s157
    %p171 = scmp.eq.s32.totalorder %s18, 1
    %p172 = por %p170, %p171
    %p174 = scmp.ne.s32.totalorder %s157, %s173
    %p175 = scmp.eq.s32.totalorder %s18, 0
    %p176 = por %p174, %p175
    %p177 = scmp.le.s32.totalorder 1, %s12
    %p178 = scmp.lt.s32.totalorder %s12, 3
    %p179 = pnand %p177, %p178
    %p180 = pneg %p179
    // Predicated region
    $region9: #{decoder_forward.3} parent=5 // pred_check
      _
    $region10: #{decoder_forward.3} parent=5 // pred_check_branch
      %182 = sbr.rel (%p179) target = $region12
    $region11: #{decoder_forward.3} parent=5 // pred_region
      %s183 = ssub.s32 %s12, 1
      // Predicated region
      $region13: #{decoder_forward.3} parent=11 // pred_check
        %p184 = pneg %p59
      $region14: #{decoder_forward.3} parent=11 // pred_check_branch
        %186 = sbr.rel (%p184) target = $region16
      $region15: #{decoder_forward.3} parent=11 // pred_region
        _
      $region16: #{decoder_forward.3} parent=11 // pred_fallthru
        _
      // Predicated region
      $region17: #{decoder_forward.3} parent=11 // pred_check
        %p187 = pneg %p80
      $region18: #{decoder_forward.3} parent=11 // pred_check_branch
        %189 = sbr.rel (%p187) target = $region20
      $region19: #{decoder_forward.3} parent=11 // pred_region
        _
      $region20: #{decoder_forward.3} parent=11 // pred_fallthru
        _
      // Predicated region
      $region21: #{decoder_forward.3} parent=11 // pred_check
        %p190 = pneg %p101
      $region22: #{decoder_forward.3} parent=11 // pred_check_branch
        %192 = sbr.rel (%p190) target = $region24
      $region23: #{decoder_forward.3} parent=11 // pred_region
        _
      $region24: #{decoder_forward.3} parent=11 // pred_fallthru
        _
      // Predicated region
      $region25: #{decoder_forward.3} parent=11 // pred_check
        %p193 = pneg %p122
      $region26: #{decoder_forward.3} parent=11 // pred_check_branch
        %195 = sbr.rel (%p193) target = $region28
      $region27: #{decoder_forward.3} parent=11 // pred_region
        _
      $region28: #{decoder_forward.3} parent=11 // pred_fallthru
        _
      // Predicated region
      $region29: #{decoder_forward.3} parent=11 // pred_check
        %p196 = pneg %p143
      $region30: #{decoder_forward.3} parent=11 // pred_check_branch
        %198 = sbr.rel (%p196) target = $region32
      $region31: #{decoder_forward.3} parent=11 // pred_region
        _
      $region32: #{decoder_forward.3} parent=11 // pred_fallthru
        _
    $region12: #{decoder_forward.3} parent=5 // pred_fallthru
      _
    %p199 = scmp.lt.s32.totalorder %s12, 2
    // Predicated region
    $region33: #{decoder_forward.3} parent=5 // pred_check
      %p200 = pneg %p199
    $region34: #{decoder_forward.3} parent=5 // pred_check_branch
      %202 = sbr.rel (%p200) target = $region36
    $region35: #{decoder_forward.3} parent=5 // pred_region
      // Predicated region
      $region37: #{decoder_forward.3} parent=35 // pred_check
        %p203 = pneg %p32
      $region38: #{decoder_forward.3} parent=35 // pred_check_branch
        %205 = sbr.rel (%p203) target = $region40
      $region39: #{decoder_forward.3} parent=35 // pred_region
        %p206 = scmp.lt.s32.totalorder %s12, 1
        %s207 = scalar_select %p206, %s12, 1
        %s208 = smul.addr %s207, 8
        %s209 = smul.addr %s208, 4
        %s210 = scalar_lea.vmem %s0, %s209
      $region40: #{decoder_forward.3} parent=35 // pred_fallthru
        _
    $region36: #{decoder_forward.3} parent=5 // pred_fallthru
      _
    %p211 = scmp.le.s32.totalorder 1, %s12
    %p212 = scmp.lt.s32.totalorder %s12, 3
    %p213 = pnand %p211, %p212
    %p214 = pneg %p213
    // Predicated region
    $region41: #{decoder_forward.3} parent=5 // pred_check
      _
    $region42: #{decoder_forward.3} parent=5 // pred_check_branch
      %216 = sbr.rel (%p213) target = $region44
    $region43: #{decoder_forward.3} parent=5 // pred_region
      %s217 = ssub.s32 %s12, 1
      %p218 = scmp.lt.s32.totalorder %s17, 1
      %s219 = scalar_select %p218, %s17, 1
      %s220 = smul.addr %s219, 8
      %s221 = smul.addr %s220, 4
      %s222 = scalar_lea.vmem %s0, %s221
      %p223 = pneg %p38
      %p224 = pneg %p35
      %p225 = pneg %p59
      %p226 = pneg %p56
      %p227 = pneg %p80
      %p228 = pneg %p77
      %p229 = pneg %p101
      %p230 = pneg %p98
      %p231 = pneg %p122
      %p232 = pneg %p119
      %p233 = pneg %p143
      %p234 = pneg %p140
      %p235 = pneg %p169
      %p236 = pneg %p166
      %p237 = scmp.lt.s32.totalorder %s17, 1
      %s238 = scalar_select %p237, %s17, 1
      %s239 = smul.addr %s238, 4
      %s240 = smul.addr %s239, 8
      %s241 = scalar_lea.vmem %s6, %s240
      %p242 = scmp.lt.s32.totalorder %s17, 1
      %s243 = scalar_select %p242, %s17, 1
      %s244 = smul.addr %s243, 8
      %s245 = smul.addr %s244, 4
      %s246 = scalar_lea.vmem %s0, %s245
      %p247 = scmp.lt.s32.totalorder %s17, 1
      %s248 = scalar_select %p247, %s17, 1
      %s249 = smul.addr %s248, 4
      %s250 = smul.addr %s249, 8
      %s251 = scalar_lea.vmem %s6, %s250
      %v253 = vld [vmem:[%s246] sm:$0xff]
      %v254 = vld [vmem:[%s246 + $0x8] sm:$0xff]
      %v255 = vld [vmem:[%s246 + $0x10] sm:$0xff]
      %v256 = vld [vmem:[%s246 + $0x18] sm:$0xff]
      %v257 = vld [vmem:[%s1] sm:$0xf]
      %v258 = vld [vmem:[%s1 + $0x4] sm:$0xf]
      %v259 = vld [vmem:[%s1 + $0x8] sm:$0xf]
      %v260 = vld [vmem:[%s1 + $0xc] sm:$0xf]
      %v265 = vunpack.c.l.b16 %v257
      %v266 = vunpack.c.l.b16 %v258
      %v267 = vunpack.c.l.b16 %v259
      %v268 = vunpack.c.l.b16 %v260
      %v269 = vpack.c.b16 %v266, %v265
      %v270 = vpack.c.b16 %v268, %v267
      %v275 = vunpack.c.l.b16 %v253
      %v276 = vunpack.c.h.b16 %v253
      %v277 = vunpack.c.l.b16 %v254
      %v278 = vunpack.c.h.b16 %v254
      %v279 = vunpack.c.l.b16 %v255
      %v280 = vunpack.c.h.b16 %v255
      %v281 = vunpack.c.l.b16 %v256
      %v282 = vunpack.c.h.b16 %v256
      %v283 = vpack.c.b16 %v277, %v275
      %v284 = vpack.c.b16 %v278, %v276
      %v285 = vpack.c.b16 %v281, %v279
      %v286 = vpack.c.b16 %v282, %v280
      %vm291 = vcmask 261120
      %v293 = vsel %vm291, %v269, 0
      %v296 = vsel %vm291, %v270, 0
      %298 = vmatpush.bf16.msra.mxu0 0
      %299 = vmatpush.bf16.msra.mxu0 0
      %300 = vmatpush.bf16.msra.mxu0 0
      %301 = vmatpush.bf16.msra.mxu0 0
      %302 = vmatpush.bf16.msra.mxu0 0
      %303 = vmatpush.bf16.msra.mxu0 0
      %304 = vmatpush.bf16.msra.mxu0 %v285
      %305 = vmatpush.bf16.msra.mxu0 %v283
      %306 = vmatmul.bf16.gmra.mxu0 %v293
      %v307 = vpop.f32.mrf.mxu0
      %v308 = vadd.f32 0.0, %v307
      %v309 = vpop.f32.mrf.mxu0
      %v310 = vadd.f32 0.0, %v309
      %311 = vmatmul.bf16.gmra.mxu0 %v296
      %v312 = vpop.f32.mrf.mxu0
      %v313 = vadd.f32 0.0, %v312
      %v314 = vpop.f32.mrf.mxu0
      %v315 = vadd.f32 0.0, %v314
      %316 = vdwg.mxu0
      %317 = vmatpush.bf16.msra.mxu0 0
      %318 = vmatpush.bf16.msra.mxu0 0
      %319 = vmatpush.bf16.msra.mxu0 0
      %320 = vmatpush.bf16.msra.mxu0 0
      %321 = vmatpush.bf16.msra.mxu0 0
      %322 = vmatpush.bf16.msra.mxu0 0
      %323 = vmatpush.bf16.msra.mxu0 %v286
      %324 = vmatpush.bf16.msra.mxu0 %v284
      %325 = vmatmul.bf16.gmra.mxu0 %v293
      %v326 = vpop.f32.mrf.mxu0
      %v327 = vadd.f32 0.0, %v326
      %v328 = vpop.f32.mrf.mxu0
      %v329 = vadd.f32 0.0, %v328
      %330 = vmatmul.bf16.gmra.mxu0 %v296
      %v331 = vpop.f32.mrf.mxu0
      %v332 = vadd.f32 0.0, %v331
      %v333 = vpop.f32.mrf.mxu0
      %v334 = vadd.f32 0.0, %v333
      %335 = vdwg.mxu0
      %v336 = vpack.c.bf16 %v310, %v308
      %v337 = vpack.c.bf16 %v329, %v327
      %v338 = vpack.c.bf16 %v315, %v313
      %v339 = vpack.c.bf16 %v334, %v332
      %v340 = vld [vmem:[%s2] sm:$0xff]
      %v341 = vld [vmem:[%s2 + $0x8] sm:$0xff]
      %v342 = vld [vmem:[%s2 + $0x10] sm:$0xff]
      %v343 = vld [vmem:[%s2 + $0x18] sm:$0xff]
      %v344 = vld [vmem:[%s2 + $0x20] sm:$0xff]
      %v345 = vld [vmem:[%s2 + $0x28] sm:$0xff]
      %v346 = vld [vmem:[%s2 + $0x30] sm:$0xff]
      %v347 = vld [vmem:[%s2 + $0x38] sm:$0xff]
      %v348 = vld [vmem:[%s2 + $0x40] sm:$0xff]
      %v349 = vld [vmem:[%s2 + $0x48] sm:$0xff]
      %v350 = vld [vmem:[%s2 + $0x50] sm:$0xff]
      %v351 = vld [vmem:[%s2 + $0x58] sm:$0xff]
      %v352 = vld [vmem:[%s2 + $0x60] sm:$0xff]
      %v353 = vld [vmem:[%s2 + $0x68] sm:$0xff]
      %v354 = vld [vmem:[%s2 + $0x70] sm:$0xff]
      %v355 = vld [vmem:[%s2 + $0x78] sm:$0xff]
      %v356 = vld [vmem:[%s2 + $0x80] sm:$0xff]
      %v357 = vld [vmem:[%s2 + $0x88] sm:$0xff]
      %v358 = vld [vmem:[%s2 + $0x90] sm:$0xff]
      %v359 = vld [vmem:[%s2 + $0x98] sm:$0xff]
      %v360 = vld [vmem:[%s2 + $0xa0] sm:$0xff]
      %v361 = vld [vmem:[%s2 + $0xa8] sm:$0xff]
      %v362 = vld [vmem:[%s2 + $0xb0] sm:$0xff]
      %v363 = vld [vmem:[%s2 + $0xb8] sm:$0xff]
      %v364 = vld [vmem:[%s2 + $0xc0] sm:$0xff]
      %v365 = vld [vmem:[%s2 + $0xc8] sm:$0xff]
      %v366 = vld [vmem:[%s2 + $0xd0] sm:$0xff]
      %v367 = vld [vmem:[%s2 + $0xd8] sm:$0xff]
      %v368 = vld [vmem:[%s2 + $0xe0] sm:$0xff]
      %v369 = vld [vmem:[%s2 + $0xe8] sm:$0xff]
      %v370 = vld [vmem:[%s2 + $0xf0] sm:$0xff]
      %v371 = vld [vmem:[%s2 + $0xf8] sm:$0xff]
      %s372 = scalar_lea.vmem %s1, 16
      %v373 = vld [vmem:[%s372] sm:$0xf]
      %v374 = vld [vmem:[%s372 + $0x4] sm:$0xf]
      %v375 = vld [vmem:[%s372 + $0x8] sm:$0xf]
      %v376 = vld [vmem:[%s372 + $0xc] sm:$0xf]
      %v381 = vunpack.c.l.b16 %v373
      %v382 = vunpack.c.l.b16 %v374
      %v383 = vunpack.c.l.b16 %v375
      %v384 = vunpack.c.l.b16 %v376
      %v385 = vpack.c.b16 %v382, %v381
      %v386 = vpack.c.b16 %v384, %v383
      %v388 = vsel %vm291, %v385, 0
      %v391 = vsel %vm291, %v386, 0
      %393 = vmatpush.bf16.msra.mxu0 0
      %394 = vmatpush.bf16.msra.mxu0 0
      %395 = vmatpush.bf16.msra.mxu0 0
      %396 = vmatpush.bf16.msra.mxu0 0
      %397 = vmatpush.bf16.msra.mxu0 0
      %398 = vmatpush.bf16.msra.mxu0 0
      %399 = vmatpush.bf16.msra.mxu0 %v285
      %400 = vmatpush.bf16.msra.mxu0 %v283
      %401 = vmatmul.bf16.gmra.mxu0 %v388
      %v402 = vpop.f32.mrf.mxu0
      %v403 = vadd.f32 0.0, %v402
      %v404 = vpop.f32.mrf.mxu0
      %v405 = vadd.f32 0.0, %v404
      %406 = vmatmul.bf16.gmra.mxu0 %v391
      %v407 = vpop.f32.mrf.mxu0
      %v408 = vadd.f32 0.0, %v407
      %v409 = vpop.f32.mrf.mxu0
      %v410 = vadd.f32 0.0, %v409
      %411 = vdwg.mxu0
      %412 = vmatpush.bf16.msra.mxu0 0
      %413 = vmatpush.bf16.msra.mxu0 0
      %414 = vmatpush.bf16.msra.mxu0 0
      %415 = vmatpush.bf16.msra.mxu0 0
      %416 = vmatpush.bf16.msra.mxu0 0
      %417 = vmatpush.bf16.msra.mxu0 0
      %418 = vmatpush.bf16.msra.mxu0 %v286
      %419 = vmatpush.bf16.msra.mxu0 %v284
      %420 = vmatmul.bf16.gmra.mxu0 %v388
      %v421 = vpop.f32.mrf.mxu0
      %v422 = vadd.f32 0.0, %v421
      %v423 = vpop.f32.mrf.mxu0
      %v424 = vadd.f32 0.0, %v423
      %425 = vmatmul.bf16.gmra.mxu0 %v391
      %v426 = vpop.f32.mrf.mxu0
      %v427 = vadd.f32 0.0, %v426
      %v428 = vpop.f32.mrf.mxu0
      %v429 = vadd.f32 0.0, %v428
      %430 = vdwg.mxu0
      %v431 = vpack.c.bf16 %v405, %v403
      %v432 = vpack.c.bf16 %v424, %v422
      %v433 = vpack.c.bf16 %v410, %v408
      %v434 = vpack.c.bf16 %v429, %v427
      %s435 = scalar_lea.vmem %s2, 256
      %v436 = vld [vmem:[%s435] sm:$0xff]
      %v437 = vld [vmem:[%s435 + $0x8] sm:$0xff]
      %v438 = vld [vmem:[%s435 + $0x10] sm:$0xff]
      %v439 = vld [vmem:[%s435 + $0x18] sm:$0xff]
      %v440 = vld [vmem:[%s435 + $0x20] sm:$0xff]
      %v441 = vld [vmem:[%s435 + $0x28] sm:$0xff]
      %v442 = vld [vmem:[%s435 + $0x30] sm:$0xff]
      %v443 = vld [vmem:[%s435 + $0x38] sm:$0xff]
      %v444 = vld [vmem:[%s435 + $0x40] sm:$0xff]
      %v445 = vld [vmem:[%s435 + $0x48] sm:$0xff]
      %v446 = vld [vmem:[%s435 + $0x50] sm:$0xff]
      %v447 = vld [vmem:[%s435 + $0x58] sm:$0xff]
      %v448 = vld [vmem:[%s435 + $0x60] sm:$0xff]
      %v449 = vld [vmem:[%s435 + $0x68] sm:$0xff]
      %v450 = vld [vmem:[%s435 + $0x70] sm:$0xff]
      %v451 = vld [vmem:[%s435 + $0x78] sm:$0xff]
      %v452 = vld [vmem:[%s435 + $0x80] sm:$0xff]
      %v453 = vld [vmem:[%s435 + $0x88] sm:$0xff]
      %v454 = vld [vmem:[%s435 + $0x90] sm:$0xff]
      %v455 = vld [vmem:[%s435 + $0x98] sm:$0xff]
      %v456 = vld [vmem:[%s435 + $0xa0] sm:$0xff]
      %v457 = vld [vmem:[%s435 + $0xa8] sm:$0xff]
      %v458 = vld [vmem:[%s435 + $0xb0] sm:$0xff]
      %v459 = vld [vmem:[%s435 + $0xb8] sm:$0xff]
      %v460 = vld [vmem:[%s435 + $0xc0] sm:$0xff]
      %v461 = vld [vmem:[%s435 + $0xc8] sm:$0xff]
      %v462 = vld [vmem:[%s435 + $0xd0] sm:$0xff]
      %v463 = vld [vmem:[%s435 + $0xd8] sm:$0xff]
      %v464 = vld [vmem:[%s435 + $0xe0] sm:$0xff]
      %v465 = vld [vmem:[%s435 + $0xe8] sm:$0xff]
      %v466 = vld [vmem:[%s435 + $0xf0] sm:$0xff]
      %v467 = vld [vmem:[%s435 + $0xf8] sm:$0xff]
      %v500 = vunpack.c.l.b16 %v436
      %v501 = vunpack.c.h.b16 %v436
      %v502 = vunpack.c.l.b16 %v437
      %v503 = vunpack.c.h.b16 %v437
      %v504 = vunpack.c.l.b16 %v438
      %v505 = vunpack.c.h.b16 %v438
      %v506 = vunpack.c.l.b16 %v439
      %v507 = vunpack.c.h.b16 %v439
      %v508 = vunpack.c.l.b16 %v440
      %v509 = vunpack.c.h.b16 %v440
      %v510 = vunpack.c.l.b16 %v441
      %v511 = vunpack.c.h.b16 %v441
      %v512 = vunpack.c.l.b16 %v442
      %v513 = vunpack.c.h.b16 %v442
      %v514 = vunpack.c.l.b16 %v443
      %v515 = vunpack.c.h.b16 %v443
      %v516 = vunpack.c.l.b16 %v444
      %v517 = vunpack.c.h.b16 %v444
      %v518 = vunpack.c.l.b16 %v445
      %v519 = vunpack.c.h.b16 %v445
      %v520 = vunpack.c.l.b16 %v446
      %v521 = vunpack.c.h.b16 %v446
      %v522 = vunpack.c.l.b16 %v447
      %v523 = vunpack.c.h.b16 %v447
      %v524 = vunpack.c.l.b16 %v448
      %v525 = vunpack.c.h.b16 %v448
      %v526 = vunpack.c.l.b16 %v449
      %v527 = vunpack.c.h.b16 %v449
      %v528 = vunpack.c.l.b16 %v450
      %v529 = vunpack.c.h.b16 %v450
      %v530 = vunpack.c.l.b16 %v451
      %v531 = vunpack.c.h.b16 %v451
      %v532 = vunpack.c.l.b16 %v452
      %v533 = vunpack.c.h.b16 %v452
      %v534 = vunpack.c.l.b16 %v453
      %v535 = vunpack.c.h.b16 %v453
      %v536 = vunpack.c.l.b16 %v454
      %v537 = vunpack.c.h.b16 %v454
      %v538 = vunpack.c.l.b16 %v455
      %v539 = vunpack.c.h.b16 %v455
      %v540 = vunpack.c.l.b16 %v456
      %v541 = vunpack.c.h.b16 %v456
      %v542 = vunpack.c.l.b16 %v457
      %v543 = vunpack.c.h.b16 %v457
      %v544 = vunpack.c.l.b16 %v458
      %v545 = vunpack.c.h.b16 %v458
      %v546 = vunpack.c.l.b16 %v459
      %v547 = vunpack.c.h.b16 %v459
      %v548 = vunpack.c.l.b16 %v460
      %v549 = vunpack.c.h.b16 %v460
      %v550 = vunpack.c.l.b16 %v461
      %v551 = vunpack.c.h.b16 %v461
      %v552 = vunpack.c.l.b16 %v462
      %v553 = vunpack.c.h.b16 %v462
      %v554 = vunpack.c.l.b16 %v463
      %v555 = vunpack.c.h.b16 %v463
      %v556 = vunpack.c.l.b16 %v464
      %v557 = vunpack.c.h.b16 %v464
      %v558 = vunpack.c.l.b16 %v465
      %v559 = vunpack.c.h.b16 %v465
      %v560 = vunpack.c.l.b16 %v466
      %v561 = vunpack.c.h.b16 %v466
      %v562 = vunpack.c.l.b16 %v467
      %v563 = vunpack.c.h.b16 %v467
      %v564 = vpack.c.b16 %v502, %v500
      %v565 = vpack.c.b16 %v503, %v501
      %v566 = vpack.c.b16 %v506, %v504
      %v567 = vpack.c.b16 %v507, %v505
      %v568 = vpack.c.b16 %v510, %v508
      %v569 = vpack.c.b16 %v511, %v509
      %v570 = vpack.c.b16 %v514, %v512
      %v571 = vpack.c.b16 %v515, %v513
      %v572 = vpack.c.b16 %v518, %v516
      %v573 = vpack.c.b16 %v519, %v517
      %v574 = vpack.c.b16 %v522, %v520
      %v575 = vpack.c.b16 %v523, %v521
      %v576 = vpack.c.b16 %v526, %v524
      %v577 = vpack.c.b16 %v527, %v525
      %v578 = vpack.c.b16 %v530, %v528
      %v579 = vpack.c.b16 %v531, %v529
      %v580 = vpack.c.b16 %v534, %v532
      %v581 = vpack.c.b16 %v535, %v533
      %v582 = vpack.c.b16 %v538, %v536
      %v583 = vpack.c.b16 %v539, %v537
      %v584 = vpack.c.b16 %v542, %v540
      %v585 = vpack.c.b16 %v543, %v541
      %v586 = vpack.c.b16 %v546, %v544
      %v587 = vpack.c.b16 %v547, %v545
      %v588 = vpack.c.b16 %v550, %v548
      %v589 = vpack.c.b16 %v551, %v549
      %v590 = vpack.c.b16 %v554, %v552
      %v591 = vpack.c.b16 %v555, %v553
      %v592 = vpack.c.b16 %v558, %v556
      %v593 = vpack.c.b16 %v559, %v557
      %v594 = vpack.c.b16 %v562, %v560
      %v595 = vpack.c.b16 %v563, %v561
      %628 = vmatpush.bf16.msra.mxu0 %v578
      %629 = vmatpush.bf16.msra.mxu0 %v576
      %630 = vmatpush.bf16.msra.mxu0 %v574
      %631 = vmatpush.bf16.msra.mxu0 %v572
      %632 = vmatpush.bf16.msra.mxu0 %v570
      %633 = vmatpush.bf16.msra.mxu0 %v568
      %634 = vmatpush.bf16.msra.mxu0 %v566
      %635 = vmatpush.bf16.msra.mxu0 %v564
      %636 = vmatmul.bf16.gmra.mxu0 %v431
      %v637 = vpop.f32.mrf.mxu0
      %v638 = vadd.f32 0.0, %v637
      %v639 = vpop.f32.mrf.mxu0
      %v640 = vadd.f32 0.0, %v639
      %641 = vmatmul.bf16.gmra.mxu0 %v433
      %v642 = vpop.f32.mrf.mxu0
      %v643 = vadd.f32 0.0, %v642
      %v644 = vpop.f32.mrf.mxu0
      %v645 = vadd.f32 0.0, %v644
      %646 = vdwg.mxu0
      %647 = vmatpush.bf16.msra.mxu0 %v594
      %648 = vmatpush.bf16.msra.mxu0 %v592
      %649 = vmatpush.bf16.msra.mxu0 %v590
      %650 = vmatpush.bf16.msra.mxu0 %v588
      %651 = vmatpush.bf16.msra.mxu0 %v586
      %652 = vmatpush.bf16.msra.mxu0 %v584
      %653 = vmatpush.bf16.msra.mxu0 %v582
      %654 = vmatpush.bf16.msra.mxu0 %v580
      %655 = vmatmul.bf16.gmra.mxu0 %v432
      %v656 = vpop.f32.mrf.mxu0
      %v657 = vadd.f32 %v638, %v656
      %v658 = vpop.f32.mrf.mxu0
      %v659 = vadd.f32 %v640, %v658
      %660 = vmatmul.bf16.gmra.mxu0 %v434
      %v661 = vpop.f32.mrf.mxu0
      %v662 = vadd.f32 %v643, %v661
      %v663 = vpop.f32.mrf.mxu0
      %v664 = vadd.f32 %v645, %v663
      %665 = vdwg.mxu0
      %666 = vmatpush.bf16.msra.mxu0 %v579
      %667 = vmatpush.bf16.msra.mxu0 %v577
      %668 = vmatpush.bf16.msra.mxu0 %v575
      %669 = vmatpush.bf16.msra.mxu0 %v573
      %670 = vmatpush.bf16.msra.mxu0 %v571
      %671 = vmatpush.bf16.msra.mxu0 %v569
      %672 = vmatpush.bf16.msra.mxu0 %v567
      %673 = vmatpush.bf16.msra.mxu0 %v565
      %674 = vmatmul.bf16.gmra.mxu0 %v431
      %v675 = vpop.f32.mrf.mxu0
      %v676 = vadd.f32 0.0, %v675
      %v677 = vpop.f32.mrf.mxu0
      %v678 = vadd.f32 0.0, %v677
      %679 = vmatmul.bf16.gmra.mxu0 %v433
      %v680 = vpop.f32.mrf.mxu0
      %v681 = vadd.f32 0.0, %v680
      %v682 = vpop.f32.mrf.mxu0
      %v683 = vadd.f32 0.0, %v682
      %684 = vdwg.mxu0
      %685 = vmatpush.bf16.msra.mxu0 %v595
      %686 = vmatpush.bf16.msra.mxu0 %v593
      %687 = vmatpush.bf16.msra.mxu0 %v591
      %688 = vmatpush.bf16.msra.mxu0 %v589
      %689 = vmatpush.bf16.msra.mxu0 %v587
      %690 = vmatpush.bf16.msra.mxu0 %v585
      %691 = vmatpush.bf16.msra.mxu0 %v583
      %692 = vmatpush.bf16.msra.mxu0 %v581
      %693 = vmatmul.bf16.gmra.mxu0 %v432
      %v694 = vpop.f32.mrf.mxu0
      %v695 = vadd.f32 %v676, %v694
      %v696 = vpop.f32.mrf.mxu0
      %v697 = vadd.f32 %v678, %v696
      %698 = vmatmul.bf16.gmra.mxu0 %v434
      %v699 = vpop.f32.mrf.mxu0
      %v700 = vadd.f32 %v681, %v699
      %v701 = vpop.f32.mrf.mxu0
      %v702 = vadd.f32 %v683, %v701
      %703 = vdwg.mxu0
      %v736 = vunpack.c.l.b16 %v340
      %v737 = vunpack.c.h.b16 %v340
      %v738 = vunpack.c.l.b16 %v341
      %v739 = vunpack.c.h.b16 %v341
      %v740 = vunpack.c.l.b16 %v342
      %v741 = vunpack.c.h.b16 %v342
      %v742 = vunpack.c.l.b16 %v343
      %v743 = vunpack.c.h.b16 %v343
      %v744 = vunpack.c.l.b16 %v344
      %v745 = vunpack.c.h.b16 %v344
      %v746 = vunpack.c.l.b16 %v345
      %v747 = vunpack.c.h.b16 %v345
      %v748 = vunpack.c.l.b16 %v346
      %v749 = vunpack.c.h.b16 %v346
      %v750 = vunpack.c.l.b16 %v347
      %v751 = vunpack.c.h.b16 %v347
      %v752 = vunpack.c.l.b16 %v348
      %v753 = vunpack.c.h.b16 %v348
      %v754 = vunpack.c.l.b16 %v349
      %v755 = vunpack.c.h.b16 %v349
      %v756 = vunpack.c.l.b16 %v350
      %v757 = vunpack.c.h.b16 %v350
      %v758 = vunpack.c.l.b16 %v351
      %v759 = vunpack.c.h.b16 %v351
      %v760 = vunpack.c.l.b16 %v352
      %v761 = vunpack.c.h.b16 %v352
      %v762 = vunpack.c.l.b16 %v353
      %v763 = vunpack.c.h.b16 %v353
      %v764 = vunpack.c.l.b16 %v354
      %v765 = vunpack.c.h.b16 %v354
      %v766 = vunpack.c.l.b16 %v355
      %v767 = vunpack.c.h.b16 %v355
      %v768 = vunpack.c.l.b16 %v356
      %v769 = vunpack.c.h.b16 %v356
      %v770 = vunpack.c.l.b16 %v357
      %v771 = vunpack.c.h.b16 %v357
      %v772 = vunpack.c.l.b16 %v358
      %v773 = vunpack.c.h.b16 %v358
      %v774 = vunpack.c.l.b16 %v359
      %v775 = vunpack.c.h.b16 %v359
      %v776 = vunpack.c.l.b16 %v360
      %v777 = vunpack.c.h.b16 %v360
      %v778 = vunpack.c.l.b16 %v361
      %v779 = vunpack.c.h.b16 %v361
      %v780 = vunpack.c.l.b16 %v362
      %v781 = vunpack.c.h.b16 %v362
      %v782 = vunpack.c.l.b16 %v363
      %v783 = vunpack.c.h.b16 %v363
      %v784 = vunpack.c.l.b16 %v364
      %v785 = vunpack.c.h.b16 %v364
      %v786 = vunpack.c.l.b16 %v365
      %v787 = vunpack.c.h.b16 %v365
      %v788 = vunpack.c.l.b16 %v366
      %v789 = vunpack.c.h.b16 %v366
      %v790 = vunpack.c.l.b16 %v367
      %v791 = vunpack.c.h.b16 %v367
      %v792 = vunpack.c.l.b16 %v368
      %v793 = vunpack.c.h.b16 %v368
      %v794 = vunpack.c.l.b16 %v369
      %v795 = vunpack.c.h.b16 %v369
      %v796 = vunpack.c.l.b16 %v370
      %v797 = vunpack.c.h.b16 %v370
      %v798 = vunpack.c.l.b16 %v371
      %v799 = vunpack.c.h.b16 %v371
      %v800 = vpack.c.b16 %v738, %v736
      %v801 = vpack.c.b16 %v739, %v737
      %v802 = vpack.c.b16 %v742, %v740
      %v803 = vpack.c.b16 %v743, %v741
      %v804 = vpack.c.b16 %v746, %v744
      %v805 = vpack.c.b16 %v747, %v745
      %v806 = vpack.c.b16 %v750, %v748
      %v807 = vpack.c.b16 %v751, %v749
      %v808 = vpack.c.b16 %v754, %v752
      %v809 = vpack.c.b16 %v755, %v753
      %v810 = vpack.c.b16 %v758, %v756
      %v811 = vpack.c.b16 %v759, %v757
      %v812 = vpack.c.b16 %v762, %v760
      %v813 = vpack.c.b16 %v763, %v761
      %v814 = vpack.c.b16 %v766, %v764
      %v815 = vpack.c.b16 %v767, %v765
      %v816 = vpack.c.b16 %v770, %v768
      %v817 = vpack.c.b16 %v771, %v769
      %v818 = vpack.c.b16 %v774, %v772
      %v819 = vpack.c.b16 %v775, %v773
      %v820 = vpack.c.b16 %v778, %v776
      %v821 = vpack.c.b16 %v779, %v777
      %v822 = vpack.c.b16 %v782, %v780
      %v823 = vpack.c.b16 %v783, %v781
      %v824 = vpack.c.b16 %v786, %v784
      %v825 = vpack.c.b16 %v787, %v785
      %v826 = vpack.c.b16 %v790, %v788
      %v827 = vpack.c.b16 %v791, %v789
      %v828 = vpack.c.b16 %v794, %v792
      %v829 = vpack.c.b16 %v795, %v793
      %v830 = vpack.c.b16 %v798, %v796
      %v831 = vpack.c.b16 %v799, %v797
      %864 = vmatpush.bf16.msra.mxu0 %v814
      %865 = vmatpush.bf16.msra.mxu0 %v812
      %866 = vmatpush.bf16.msra.mxu0 %v810
      %867 = vmatpush.bf16.msra.mxu0 %v808
      %868 = vmatpush.bf16.msra.mxu0 %v806
      %869 = vmatpush.bf16.msra.mxu0 %v804
      %870 = vmatpush.bf16.msra.mxu0 %v802
      %871 = vmatpush.bf16.msra.mxu0 %v800
      %872 = vmatmul.bf16.gmra.mxu0 %v336
      %v873 = vpop.f32.mrf.mxu0
      %v874 = vadd.f32 %v657, %v873
      %v875 = vpop.f32.mrf.mxu0
      %v876 = vadd.f32 %v659, %v875
      %877 = vmatmul.bf16.gmra.mxu0 %v338
      %v878 = vpop.f32.mrf.mxu0
      %v879 = vadd.f32 %v662, %v878
      %v880 = vpop.f32.mrf.mxu0
      %v881 = vadd.f32 %v664, %v880
      %882 = vdwg.mxu0
      %883 = vmatpush.bf16.msra.mxu0 %v830
      %884 = vmatpush.bf16.msra.mxu0 %v828
      %885 = vmatpush.bf16.msra.mxu0 %v826
      %886 = vmatpush.bf16.msra.mxu0 %v824
      %887 = vmatpush.bf16.msra.mxu0 %v822
      %888 = vmatpush.bf16.msra.mxu0 %v820
      %889 = vmatpush.bf16.msra.mxu0 %v818
      %890 = vmatpush.bf16.msra.mxu0 %v816
      %891 = vmatmul.bf16.gmra.mxu0 %v337
      %v892 = vpop.f32.mrf.mxu0
      %v893 = vadd.f32 %v874, %v892
      %v894 = vpop.f32.mrf.mxu0
      %v895 = vadd.f32 %v876, %v894
      %896 = vmatmul.bf16.gmra.mxu0 %v339
      %v897 = vpop.f32.mrf.mxu0
      %v898 = vadd.f32 %v879, %v897
      %v899 = vpop.f32.mrf.mxu0
      %v900 = vadd.f32 %v881, %v899
      %901 = vdwg.mxu0
      %902 = vmatpush.bf16.msra.mxu0 %v815
      %903 = vmatpush.bf16.msra.mxu0 %v813
      %904 = vmatpush.bf16.msra.mxu0 %v811
      %905 = vmatpush.bf16.msra.mxu0 %v809
      %906 = vmatpush.bf16.msra.mxu0 %v807
      %907 = vmatpush.bf16.msra.mxu0 %v805
      %908 = vmatpush.bf16.msra.mxu0 %v803
      %909 = vmatpush.bf16.msra.mxu0 %v801
      %910 = vmatmul.bf16.gmra.mxu0 %v336
      %v911 = vpop.f32.mrf.mxu0
      %v912 = vadd.f32 %v695, %v911
      %v913 = vpop.f32.mrf.mxu0
      %v914 = vadd.f32 %v697, %v913
      %915 = vmatmul.bf16.gmra.mxu0 %v338
      %v916 = vpop.f32.mrf.mxu0
      %v917 = vadd.f32 %v700, %v916
      %v918 = vpop.f32.mrf.mxu0
      %v919 = vadd.f32 %v702, %v918
      %920 = vdwg.mxu0
      %921 = vmatpush.bf16.msra.mxu0 %v831
      %922 = vmatpush.bf16.msra.mxu0 %v829
      %923 = vmatpush.bf16.msra.mxu0 %v827
      %924 = vmatpush.bf16.msra.mxu0 %v825
      %925 = vmatpush.bf16.msra.mxu0 %v823
      %926 = vmatpush.bf16.msra.mxu0 %v821
      %927 = vmatpush.bf16.msra.mxu0 %v819
      %928 = vmatpush.bf16.msra.mxu0 %v817
      %929 = vmatmul.bf16.gmra.mxu0 %v337
      %v930 = vpop.f32.mrf.mxu0
      %v931 = vadd.f32 %v912, %v930
      %v932 = vpop.f32.mrf.mxu0
      %v933 = vadd.f32 %v914, %v932
      %934 = vmatmul.bf16.gmra.mxu0 %v339
      %v935 = vpop.f32.mrf.mxu0
      %v936 = vadd.f32 %v917, %v935
      %v937 = vpop.f32.mrf.mxu0
      %v938 = vadd.f32 %v919, %v937
      %939 = vdwg.mxu0
      %s940 = scalar_lea.vmem %s1, 32
      %v941 = vld [vmem:[%s940] sm:$0xf]
      %v942 = vld [vmem:[%s940 + $0x4] sm:$0xf]
      %v943 = vld [vmem:[%s940 + $0x8] sm:$0xf]
      %v944 = vld [vmem:[%s940 + $0xc] sm:$0xf]
      %v949 = vunpack.c.l.b16 %v941
      %v950 = vunpack.c.l.b16 %v942
      %v951 = vunpack.c.l.b16 %v943
      %v952 = vunpack.c.l.b16 %v944
      %v953 = vpack.c.b16 %v950, %v949
      %v954 = vpack.c.b16 %v952, %v951
      %v956 = vsel %vm291, %v953, 0
      %v959 = vsel %vm291, %v954, 0
      %961 = vmatpush.bf16.msra.mxu0 0
      %962 = vmatpush.bf16.msra.mxu0 0
      %963 = vmatpush.bf16.msra.mxu0 0
      %964 = vmatpush.bf16.msra.mxu0 0
      %965 = vmatpush.bf16.msra.mxu0 0
      %966 = vmatpush.bf16.msra.mxu0 0
      %967 = vmatpush.bf16.msra.mxu0 %v285
      %968 = vmatpush.bf16.msra.mxu0 %v283
      %969 = vmatmul.bf16.gmra.mxu0 %v956
      %v970 = vpop.f32.mrf.mxu0
      %v971 = vadd.f32 0.0, %v970
      %v972 = vpop.f32.mrf.mxu0
      %v973 = vadd.f32 0.0, %v972
      %974 = vmatmul.bf16.gmra.mxu0 %v959
      %v975 = vpop.f32.mrf.mxu0
      %v976 = vadd.f32 0.0, %v975
      %v977 = vpop.f32.mrf.mxu0
      %v978 = vadd.f32 0.0, %v977
      %979 = vdwg.mxu0
      %980 = vmatpush.bf16.msra.mxu0 0
      %981 = vmatpush.bf16.msra.mxu0 0
      %982 = vmatpush.bf16.msra.mxu0 0
      %983 = vmatpush.bf16.msra.mxu0 0
      %984 = vmatpush.bf16.msra.mxu0 0
      %985 = vmatpush.bf16.msra.mxu0 0
      %986 = vmatpush.bf16.msra.mxu0 %v286
      %987 = vmatpush.bf16.msra.mxu0 %v284
      %988 = vmatmul.bf16.gmra.mxu0 %v956
      %v989 = vpop.f32.mrf.mxu0
      %v990 = vadd.f32 0.0, %v989
      %v991 = vpop.f32.mrf.mxu0
      %v992 = vadd.f32 0.0, %v991
      %993 = vmatmul.bf16.gmra.mxu0 %v959
      %v994 = vpop.f32.mrf.mxu0
      %v995 = vadd.f32 0.0, %v994
      %v996 = vpop.f32.mrf.mxu0
      %v997 = vadd.f32 0.0, %v996
      %998 = vdwg.mxu0
      %v999 = vpack.c.bf16 %v973, %v971
      %v1000 = vpack.c.bf16 %v992, %v990
      %v1001 = vpack.c.bf16 %v978, %v976
      %v1002 = vpack.c.bf16 %v997, %v995
      %s1003 = scalar_lea.vmem %s2, 512
      %v1004 = vld [vmem:[%s1003] sm:$0xff]
      %v1005 = vld [vmem:[%s1003 + $0x8] sm:$0xff]
      %v1006 = vld [vmem:[%s1003 + $0x10] sm:$0xff]
      %v1007 = vld [vmem:[%s1003 + $0x18] sm:$0xff]
      %v1008 = vld [vmem:[%s1003 + $0x20] sm:$0xff]
      %v1009 = vld [vmem:[%s1003 + $0x28] sm:$0xff]
      %v1010 = vld [vmem:[%s1003 + $0x30] sm:$0xff]
      %v1011 = vld [vmem:[%s1003 + $0x38] sm:$0xff]
      %v1012 = vld [vmem:[%s1003 + $0x40] sm:$0xff]
      %v1013 = vld [vmem:[%s1003 + $0x48] sm:$0xff]
      %v1014 = vld [vmem:[%s1003 + $0x50] sm:$0xff]
      %v1015 = vld [vmem:[%s1003 + $0x58] sm:$0xff]
      %v1016 = vld [vmem:[%s1003 + $0x60] sm:$0xff]
      %v1017 = vld [vmem:[%s1003 + $0x68] sm:$0xff]
      %v1018 = vld [vmem:[%s1003 + $0x70] sm:$0xff]
      %v1019 = vld [vmem:[%s1003 + $0x78] sm:$0xff]
      %v1020 = vld [vmem:[%s1003 + $0x80] sm:$0xff]
      %v1021 = vld [vmem:[%s1003 + $0x88] sm:$0xff]
      %v1022 = vld [vmem:[%s1003 + $0x90] sm:$0xff]
      %v1023 = vld [vmem:[%s1003 + $0x98] sm:$0xff]
      %v1024 = vld [vmem:[%s1003 + $0xa0] sm:$0xff]
      %v1025 = vld [vmem:[%s1003 + $0xa8] sm:$0xff]
      %v1026 = vld [vmem:[%s1003 + $0xb0] sm:$0xff]
      %v1027 = vld [vmem:[%s1003 + $0xb8] sm:$0xff]
      %v1028 = vld [vmem:[%s1003 + $0xc0] sm:$0xff]
      %v1029 = vld [vmem:[%s1003 + $0xc8] sm:$0xff]
      %v1030 = vld [vmem:[%s1003 + $0xd0] sm:$0xff]
      %v1031 = vld [vmem:[%s1003 + $0xd8] sm:$0xff]
      %v1032 = vld [vmem:[%s1003 + $0xe0] sm:$0xff]
      %v1033 = vld [vmem:[%s1003 + $0xe8] sm:$0xff]
      %v1034 = vld [vmem:[%s1003 + $0xf0] sm:$0xff]
      %v1035 = vld [vmem:[%s1003 + $0xf8] sm:$0xff]
      %v1068 = vunpack.c.l.b16 %v1004
      %v1069 = vunpack.c.h.b16 %v1004
      %v1070 = vunpack.c.l.b16 %v1005
      %v1071 = vunpack.c.h.b16 %v1005
      %v1072 = vunpack.c.l.b16 %v1006
      %v1073 = vunpack.c.h.b16 %v1006
      %v1074 = vunpack.c.l.b16 %v1007
      %v1075 = vunpack.c.h.b16 %v1007
      %v1076 = vunpack.c.l.b16 %v1008
      %v1077 = vunpack.c.h.b16 %v1008
      %v1078 = vunpack.c.l.b16 %v1009
      %v1079 = vunpack.c.h.b16 %v1009
      %v1080 = vunpack.c.l.b16 %v1010
      %v1081 = vunpack.c.h.b16 %v1010
      %v1082 = vunpack.c.l.b16 %v1011
      %v1083 = vunpack.c.h.b16 %v1011
      %v1084 = vunpack.c.l.b16 %v1012
      %v1085 = vunpack.c.h.b16 %v1012
      %v1086 = vunpack.c.l.b16 %v1013
      %v1087 = vunpack.c.h.b16 %v1013
      %v1088 = vunpack.c.l.b16 %v1014
      %v1089 = vunpack.c.h.b16 %v1014
      %v1090 = vunpack.c.l.b16 %v1015
      %v1091 = vunpack.c.h.b16 %v1015
      %v1092 = vunpack.c.l.b16 %v1016
      %v1093 = vunpack.c.h.b16 %v1016
      %v1094 = vunpack.c.l.b16 %v1017
      %v1095 = vunpack.c.h.b16 %v1017
      %v1096 = vunpack.c.l.b16 %v1018
      %v1097 = vunpack.c.h.b16 %v1018
      %v1098 = vunpack.c.l.b16 %v1019
      %v1099 = vunpack.c.h.b16 %v1019
      %v1100 = vunpack.c.l.b16 %v1020
      %v1101 = vunpack.c.h.b16 %v1020
      %v1102 = vunpack.c.l.b16 %v1021
      %v1103 = vunpack.c.h.b16 %v1021
      %v1104 = vunpack.c.l.b16 %v1022
      %v1105 = vunpack.c.h.b16 %v1022
      %v1106 = vunpack.c.l.b16 %v1023
      %v1107 = vunpack.c.h.b16 %v1023
      %v1108 = vunpack.c.l.b16 %v1024
      %v1109 = vunpack.c.h.b16 %v1024
      %v1110 = vunpack.c.l.b16 %v1025
      %v1111 = vunpack.c.h.b16 %v1025
      %v1112 = vunpack.c.l.b16 %v1026
      %v1113 = vunpack.c.h.b16 %v1026
      %v1114 = vunpack.c.l.b16 %v1027
      %v1115 = vunpack.c.h.b16 %v1027
      %v1116 = vunpack.c.l.b16 %v1028
      %v1117 = vunpack.c.h.b16 %v1028
      %v1118 = vunpack.c.l.b16 %v1029
      %v1119 = vunpack.c.h.b16 %v1029
      %v1120 = vunpack.c.l.b16 %v1030
      %v1121 = vunpack.c.h.b16 %v1030
      %v1122 = vunpack.c.l.b16 %v1031
      %v1123 = vunpack.c.h.b16 %v1031
      %v1124 = vunpack.c.l.b16 %v1032
      %v1125 = vunpack.c.h.b16 %v1032
      %v1126 = vunpack.c.l.b16 %v1033
      %v1127 = vunpack.c.h.b16 %v1033
      %v1128 = vunpack.c.l.b16 %v1034
      %v1129 = vunpack.c.h.b16 %v1034
      %v1130 = vunpack.c.l.b16 %v1035
      %v1131 = vunpack.c.h.b16 %v1035
      %v1132 = vpack.c.b16 %v1070, %v1068
      %v1133 = vpack.c.b16 %v1071, %v1069
      %v1134 = vpack.c.b16 %v1074, %v1072
      %v1135 = vpack.c.b16 %v1075, %v1073
      %v1136 = vpack.c.b16 %v1078, %v1076
      %v1137 = vpack.c.b16 %v1079, %v1077
      %v1138 = vpack.c.b16 %v1082, %v1080
      %v1139 = vpack.c.b16 %v1083, %v1081
      %v1140 = vpack.c.b16 %v1086, %v1084
      %v1141 = vpack.c.b16 %v1087, %v1085
      %v1142 = vpack.c.b16 %v1090, %v1088
      %v1143 = vpack.c.b16 %v1091, %v1089
      %v1144 = vpack.c.b16 %v1094, %v1092
      %v1145 = vpack.c.b16 %v1095, %v1093
      %v1146 = vpack.c.b16 %v1098, %v1096
      %v1147 = vpack.c.b16 %v1099, %v1097
      %v1148 = vpack.c.b16 %v1102, %v1100
      %v1149 = vpack.c.b16 %v1103, %v1101
      %v1150 = vpack.c.b16 %v1106, %v1104
      %v1151 = vpack.c.b16 %v1107, %v1105
      %v1152 = vpack.c.b16 %v1110, %v1108
      %v1153 = vpack.c.b16 %v1111, %v1109
      %v1154 = vpack.c.b16 %v1114, %v1112
      %v1155 = vpack.c.b16 %v1115, %v1113
      %v1156 = vpack.c.b16 %v1118, %v1116
      %v1157 = vpack.c.b16 %v1119, %v1117
      %v1158 = vpack.c.b16 %v1122, %v1120
      %v1159 = vpack.c.b16 %v1123, %v1121
      %v1160 = vpack.c.b16 %v1126, %v1124
      %v1161 = vpack.c.b16 %v1127, %v1125
      %v1162 = vpack.c.b16 %v1130, %v1128
      %v1163 = vpack.c.b16 %v1131, %v1129
      %1196 = vmatpush.bf16.msra.mxu0 %v1146
      %1197 = vmatpush.bf16.msra.mxu0 %v1144
      %1198 = vmatpush.bf16.msra.mxu0 %v1142
      %1199 = vmatpush.bf16.msra.mxu0 %v1140
      %1200 = vmatpush.bf16.msra.mxu0 %v1138
      %1201 = vmatpush.bf16.msra.mxu0 %v1136
      %1202 = vmatpush.bf16.msra.mxu0 %v1134
      %1203 = vmatpush.bf16.msra.mxu0 %v1132
      %1204 = vmatmul.bf16.gmra.mxu0 %v999
      %v1205 = vpop.f32.mrf.mxu0
      %v1206 = vadd.f32 0.0, %v1205
      %v1207 = vpop.f32.mrf.mxu0
      %v1208 = vadd.f32 0.0, %v1207
      %1209 = vmatmul.bf16.gmra.mxu0 %v1001
      %v1210 = vpop.f32.mrf.mxu0
      %v1211 = vadd.f32 0.0, %v1210
      %v1212 = vpop.f32.mrf.mxu0
      %v1213 = vadd.f32 0.0, %v1212
      %1214 = vdwg.mxu0
      %1215 = vmatpush.bf16.msra.mxu0 %v1162
      %1216 = vmatpush.bf16.msra.mxu0 %v1160
      %1217 = vmatpush.bf16.msra.mxu0 %v1158
      %1218 = vmatpush.bf16.msra.mxu0 %v1156
      %1219 = vmatpush.bf16.msra.mxu0 %v1154
      %1220 = vmatpush.bf16.msra.mxu0 %v1152
      %1221 = vmatpush.bf16.msra.mxu0 %v1150
      %1222 = vmatpush.bf16.msra.mxu0 %v1148
      %1223 = vmatmul.bf16.gmra.mxu0 %v1000
      %v1224 = vpop.f32.mrf.mxu0
      %v1225 = vadd.f32 %v1206, %v1224
      %v1226 = vpop.f32.mrf.mxu0
      %v1227 = vadd.f32 %v1208, %v1226
      %1228 = vmatmul.bf16.gmra.mxu0 %v1002
      %v1229 = vpop.f32.mrf.mxu0
      %v1230 = vadd.f32 %v1211, %v1229
      %v1231 = vpop.f32.mrf.mxu0
      %v1232 = vadd.f32 %v1213, %v1231
      %1233 = vdwg.mxu0
      %1234 = vmatpush.bf16.msra.mxu0 %v1147
      %1235 = vmatpush.bf16.msra.mxu0 %v1145
      %1236 = vmatpush.bf16.msra.mxu0 %v1143
      %1237 = vmatpush.bf16.msra.mxu0 %v1141
      %1238 = vmatpush.bf16.msra.mxu0 %v1139
      %1239 = vmatpush.bf16.msra.mxu0 %v1137
      %1240 = vmatpush.bf16.msra.mxu0 %v1135
      %1241 = vmatpush.bf16.msra.mxu0 %v1133
      %1242 = vmatmul.bf16.gmra.mxu0 %v999
      %v1243 = vpop.f32.mrf.mxu0
      %v1244 = vadd.f32 0.0, %v1243
      %v1245 = vpop.f32.mrf.mxu0
      %v1246 = vadd.f32 0.0, %v1245
      %1247 = vmatmul.bf16.gmra.mxu0 %v1001
      %v1248 = vpop.f32.mrf.mxu0
      %v1249 = vadd.f32 0.0, %v1248
      %v1250 = vpop.f32.mrf.mxu0
      %v1251 = vadd.f32 0.0, %v1250
      %1252 = vdwg.mxu0
      %1253 = vmatpush.bf16.msra.mxu0 %v1163
      %1254 = vmatpush.bf16.msra.mxu0 %v1161
      %1255 = vmatpush.bf16.msra.mxu0 %v1159
      %1256 = vmatpush.bf16.msra.mxu0 %v1157
      %1257 = vmatpush.bf16.msra.mxu0 %v1155
      %1258 = vmatpush.bf16.msra.mxu0 %v1153
      %1259 = vmatpush.bf16.msra.mxu0 %v1151
      %1260 = vmatpush.bf16.msra.mxu0 %v1149
      %1261 = vmatmul.bf16.gmra.mxu0 %v1000
      %v1262 = vpop.f32.mrf.mxu0
      %v1263 = vadd.f32 %v1244, %v1262
      %v1264 = vpop.f32.mrf.mxu0
      %v1265 = vadd.f32 %v1246, %v1264
      %1266 = vmatmul.bf16.gmra.mxu0 %v1002
      %v1267 = vpop.f32.mrf.mxu0
      %v1268 = vadd.f32 %v1249, %v1267
      %v1269 = vpop.f32.mrf.mxu0
      %v1270 = vadd.f32 %v1251, %v1269
      %1271 = vdwg.mxu0
      %v1272 = vadd.f32 %v893, %v1225
      %v1273 = vadd.f32 %v931, %v1263
      %v1274 = vadd.f32 %v895, %v1227
      %v1275 = vadd.f32 %v933, %v1265
      %v1276 = vadd.f32 %v898, %v1230
      %v1277 = vadd.f32 %v936, %v1268
      %v1278 = vadd.f32 %v900, %v1232
      %v1279 = vadd.f32 %v938, %v1270
      %v1280 = vld [vmem:[%s3] sm:$0x3]
      %v1282 = vperm.slane %v1280, 0
      %v1283 = vperm.slane %v1280, 1
      %v1286 = vadd.f32 %v1272, %v1282
      %v1287 = vadd.f32 %v1273, %v1283
      %v1288 = vadd.f32 %v1274, %v1282
      %v1289 = vadd.f32 %v1275, %v1283
      %v1290 = vadd.f32 %v1276, %v1282
      %v1291 = vadd.f32 %v1277, %v1283
      %v1292 = vadd.f32 %v1278, %v1282
      %v1293 = vadd.f32 %v1279, %v1283
      %v1294 = vadd.f32 %v1286, 3.0
      %v1295 = vadd.f32 %v1287, 3.0
      %v1296 = vadd.f32 %v1288, 3.0
      %v1297 = vadd.f32 %v1289, 3.0
      %v1298 = vadd.f32 %v1290, 3.0
      %v1299 = vadd.f32 %v1291, 3.0
      %v1300 = vadd.f32 %v1292, 3.0
      %v1301 = vadd.f32 %v1293, 3.0
      %v1302 = vmax.f32 %v1294, 0.0
      %v1303 = vmax.f32 %v1295, 0.0
      %v1304 = vmax.f32 %v1296, 0.0
      %v1305 = vmax.f32 %v1297, 0.0
      %v1306 = vmax.f32 %v1298, 0.0
      %v1307 = vmax.f32 %v1299, 0.0
      %v1308 = vmax.f32 %v1300, 0.0
      %v1309 = vmax.f32 %v1301, 0.0
      %v1310 = vmin.f32 %v1302, 6.0
      %v1311 = vmin.f32 %v1303, 6.0
      %v1312 = vmin.f32 %v1304, 6.0
      %v1313 = vmin.f32 %v1305, 6.0
      %v1314 = vmin.f32 %v1306, 6.0
      %v1315 = vmin.f32 %v1307, 6.0
      %v1316 = vmin.f32 %v1308, 6.0
      %v1317 = vmin.f32 %v1309, 6.0
      %v1318 = vmul.f32 %v1286, %v1310
      %v1319 = vmul.f32 %v1287, %v1311
      %v1320 = vmul.f32 %v1288, %v1312
      %v1321 = vmul.f32 %v1289, %v1313
      %v1322 = vmul.f32 %v1290, %v1314
      %v1323 = vmul.f32 %v1291, %v1315
      %v1324 = vmul.f32 %v1292, %v1316
      %v1325 = vmul.f32 %v1293, %v1317
      %v1326 = vmul.f32 %v1318, 0.16666667
      %v1327 = vmul.f32 %v1319, 0.16666667
      %v1328 = vmul.f32 %v1320, 0.16666667
      %v1329 = vmul.f32 %v1321, 0.16666667
      %v1330 = vmul.f32 %v1322, 0.16666667
      %v1331 = vmul.f32 %v1323, 0.16666667
      %v1332 = vmul.f32 %v1324, 0.16666667
      %v1333 = vmul.f32 %v1325, 0.16666667
      %v1334 = vpack.c.bf16 %v1328, %v1326
      %v1335 = vpack.c.bf16 %v1329, %v1327
      %v1336 = vpack.c.bf16 %v1332, %v1330
      %v1337 = vpack.c.bf16 %v1333, %v1331
      %1338 = vmatpush.bf16.msra.mxu0 0
      %1339 = vmatpush.bf16.msra.mxu0 0
      %1340 = vmatpush.bf16.msra.mxu0 0
      %1341 = vmatpush.bf16.msra.mxu0 0
      %1342 = vmatpush.bf16.msra.mxu0 0
      %1343 = vmatpush.bf16.msra.mxu0 0
      %1344 = vmatpush.bf16.msra.mxu0 %v1336
      %1345 = vmatpush.bf16.msra.mxu0 %v1334
      %1346 = vmatmul.bf16.gmra.mxu0 %v293
      %v1347 = vpop.f32.mrf.mxu0
      %v1348 = vadd.f32 0.0, %v1347
      %v1349 = vpop.f32.mrf.mxu0
      %v1350 = vadd.f32 0.0, %v1349
      %1351 = vmatmul.bf16.gmra.mxu0 %v296
      %v1352 = vpop.f32.mrf.mxu0
      %v1353 = vadd.f32 0.0, %v1352
      %v1354 = vpop.f32.mrf.mxu0
      %v1355 = vadd.f32 0.0, %v1354
      %1356 = vdwg.mxu0
      %1357 = vmatpush.bf16.msra.mxu0 0
      %1358 = vmatpush.bf16.msra.mxu0 0
      %1359 = vmatpush.bf16.msra.mxu0 0
      %1360 = vmatpush.bf16.msra.mxu0 0
      %1361 = vmatpush.bf16.msra.mxu0 0
      %1362 = vmatpush.bf16.msra.mxu0 0
      %1363 = vmatpush.bf16.msra.mxu0 %v1337
      %1364 = vmatpush.bf16.msra.mxu0 %v1335
      %1365 = vmatmul.bf16.gmra.mxu0 %v293
      %v1366 = vpop.f32.mrf.mxu0
      %v1367 = vadd.f32 0.0, %v1366
      %v1368 = vpop.f32.mrf.mxu0
      %v1369 = vadd.f32 0.0, %v1368
      %1370 = vmatmul.bf16.gmra.mxu0 %v296
      %v1371 = vpop.f32.mrf.mxu0
      %v1372 = vadd.f32 0.0, %v1371
      %v1373 = vpop.f32.mrf.mxu0
      %v1374 = vadd.f32 0.0, %v1373
      %1375 = vdwg.mxu0
      %v1376 = vpack.c.bf16 %v1350, %v1348
      %v1377 = vpack.c.bf16 %v1369, %v1367
      %v1378 = vpack.c.bf16 %v1355, %v1353
      %v1379 = vpack.c.bf16 %v1374, %v1372
      %v1380 = vld [vmem:[%s4] sm:$0xf]
      %v1381 = vld [vmem:[%s4 + $0x4] sm:$0xf]
      %v1382 = vld [vmem:[%s4 + $0x8] sm:$0xf]
      %v1383 = vld [vmem:[%s4 + $0xc] sm:$0xf]
      %v1384 = vld [vmem:[%s4 + $0x10] sm:$0xf]
      %v1385 = vld [vmem:[%s4 + $0x14] sm:$0xf]
      %v1386 = vld [vmem:[%s4 + $0x18] sm:$0xf]
      %v1387 = vld [vmem:[%s4 + $0x1c] sm:$0xf]
      %v1388 = vld [vmem:[%s4 + $0x20] sm:$0xf]
      %v1389 = vld [vmem:[%s4 + $0x24] sm:$0xf]
      %v1390 = vld [vmem:[%s4 + $0x28] sm:$0xf]
      %v1391 = vld [vmem:[%s4 + $0x2c] sm:$0xf]
      %v1392 = vld [vmem:[%s4 + $0x30] sm:$0xf]
      %v1393 = vld [vmem:[%s4 + $0x34] sm:$0xf]
      %v1394 = vld [vmem:[%s4 + $0x38] sm:$0xf]
      %v1395 = vld [vmem:[%s4 + $0x3c] sm:$0xf]
      %v1396 = vld [vmem:[%s4 + $0x40] sm:$0xf]
      %v1397 = vld [vmem:[%s4 + $0x44] sm:$0xf]
      %v1398 = vld [vmem:[%s4 + $0x48] sm:$0xf]
      %v1399 = vld [vmem:[%s4 + $0x4c] sm:$0xf]
      %v1400 = vld [vmem:[%s4 + $0x50] sm:$0xf]
      %v1401 = vld [vmem:[%s4 + $0x54] sm:$0xf]
      %v1402 = vld [vmem:[%s4 + $0x58] sm:$0xf]
      %v1403 = vld [vmem:[%s4 + $0x5c] sm:$0xf]
      %v1404 = vld [vmem:[%s4 + $0x60] sm:$0xf]
      %v1405 = vld [vmem:[%s4 + $0x64] sm:$0xf]
      %v1406 = vld [vmem:[%s4 + $0x68] sm:$0xf]
      %v1407 = vld [vmem:[%s4 + $0x6c] sm:$0xf]
      %v1408 = vld [vmem:[%s4 + $0x70] sm:$0xf]
      %v1409 = vld [vmem:[%s4 + $0x74] sm:$0xf]
      %v1410 = vld [vmem:[%s4 + $0x78] sm:$0xf]
      %v1411 = vld [vmem:[%s4 + $0x7c] sm:$0xf]
      %1412 = vmatpush.bf16.msra.mxu0 0
      %1413 = vmatpush.bf16.msra.mxu0 0
      %1414 = vmatpush.bf16.msra.mxu0 0
      %1415 = vmatpush.bf16.msra.mxu0 0
      %1416 = vmatpush.bf16.msra.mxu0 0
      %1417 = vmatpush.bf16.msra.mxu0 0
      %1418 = vmatpush.bf16.msra.mxu0 %v1336
      %1419 = vmatpush.bf16.msra.mxu0 %v1334
      %1420 = vmatmul.bf16.gmra.mxu0 %v388
      %v1421 = vpop.f32.mrf.mxu0
      %v1422 = vadd.f32 0.0, %v1421
      %v1423 = vpop.f32.mrf.mxu0
      %v1424 = vadd.f32 0.0, %v1423
      %1425 = vmatmul.bf16.gmra.mxu0 %v391
      %v1426 = vpop.f32.mrf.mxu0
      %v1427 = vadd.f32 0.0, %v1426
      %v1428 = vpop.f32.mrf.mxu0
      %v1429 = vadd.f32 0.0, %v1428
      %1430 = vdwg.mxu0
      %1431 = vmatpush.bf16.msra.mxu0 0
      %1432 = vmatpush.bf16.msra.mxu0 0
      %1433 = vmatpush.bf16.msra.mxu0 0
      %1434 = vmatpush.bf16.msra.mxu0 0
      %1435 = vmatpush.bf16.msra.mxu0 0
      %1436 = vmatpush.bf16.msra.mxu0 0
      %1437 = vmatpush.bf16.msra.mxu0 %v1337
      %1438 = vmatpush.bf16.msra.mxu0 %v1335
      %1439 = vmatmul.bf16.gmra.mxu0 %v388
      %v1440 = vpop.f32.mrf.mxu0
      %v1441 = vadd.f32 0.0, %v1440
      %v1442 = vpop.f32.mrf.mxu0
      %v1443 = vadd.f32 0.0, %v1442
      %1444 = vmatmul.bf16.gmra.mxu0 %v391
      %v1445 = vpop.f32.mrf.mxu0
      %v1446 = vadd.f32 0.0, %v1445
      %v1447 = vpop.f32.mrf.mxu0
      %v1448 = vadd.f32 0.0, %v1447
      %1449 = vdwg.mxu0
      %v1450 = vpack.c.bf16 %v1424, %v1422
      %v1451 = vpack.c.bf16 %v1443, %v1441
      %v1452 = vpack.c.bf16 %v1429, %v1427
      %v1453 = vpack.c.bf16 %v1448, %v1446
      %s1454 = scalar_lea.vmem %s4, 128
      %v1455 = vld [vmem:[%s1454] sm:$0xf]
      %v1456 = vld [vmem:[%s1454 + $0x4] sm:$0xf]
      %v1457 = vld [vmem:[%s1454 + $0x8] sm:$0xf]
      %v1458 = vld [vmem:[%s1454 + $0xc] sm:$0xf]
      %v1459 = vld [vmem:[%s1454 + $0x10] sm:$0xf]
      %v1460 = vld [vmem:[%s1454 + $0x14] sm:$0xf]
      %v1461 = vld [vmem:[%s1454 + $0x18] sm:$0xf]
      %v1462 = vld [vmem:[%s1454 + $0x1c] sm:$0xf]
      %v1463 = vld [vmem:[%s1454 + $0x20] sm:$0xf]
      %v1464 = vld [vmem:[%s1454 + $0x24] sm:$0xf]
      %v1465 = vld [vmem:[%s1454 + $0x28] sm:$0xf]
      %v1466 = vld [vmem:[%s1454 + $0x2c] sm:$0xf]
      %v1467 = vld [vmem:[%s1454 + $0x30] sm:$0xf]
      %v1468 = vld [vmem:[%s1454 + $0x34] sm:$0xf]
      %v1469 = vld [vmem:[%s1454 + $0x38] sm:$0xf]
      %v1470 = vld [vmem:[%s1454 + $0x3c] sm:$0xf]
      %v1471 = vld [vmem:[%s1454 + $0x40] sm:$0xf]
      %v1472 = vld [vmem:[%s1454 + $0x44] sm:$0xf]
      %v1473 = vld [vmem:[%s1454 + $0x48] sm:$0xf]
      %v1474 = vld [vmem:[%s1454 + $0x4c] sm:$0xf]
      %v1475 = vld [vmem:[%s1454 + $0x50] sm:$0xf]
      %v1476 = vld [vmem:[%s1454 + $0x54] sm:$0xf]
      %v1477 = vld [vmem:[%s1454 + $0x58] sm:$0xf]
      %v1478 = vld [vmem:[%s1454 + $0x5c] sm:$0xf]
      %v1479 = vld [vmem:[%s1454 + $0x60] sm:$0xf]
      %v1480 = vld [vmem:[%s1454 + $0x64] sm:$0xf]
      %v1481 = vld [vmem:[%s1454 + $0x68] sm:$0xf]
      %v1482 = vld [vmem:[%s1454 + $0x6c] sm:$0xf]
      %v1483 = vld [vmem:[%s1454 + $0x70] sm:$0xf]
      %v1484 = vld [vmem:[%s1454 + $0x74] sm:$0xf]
      %v1485 = vld [vmem:[%s1454 + $0x78] sm:$0xf]
      %v1486 = vld [vmem:[%s1454 + $0x7c] sm:$0xf]
      %v1519 = vunpack.c.l.b16 %v1455
      %v1520 = vunpack.c.l.b16 %v1456
      %v1521 = vunpack.c.l.b16 %v1457
      %v1522 = vunpack.c.l.b16 %v1458
      %v1523 = vunpack.c.l.b16 %v1459
      %v1524 = vunpack.c.l.b16 %v1460
      %v1525 = vunpack.c.l.b16 %v1461
      %v1526 = vunpack.c.l.b16 %v1462
      %v1527 = vunpack.c.l.b16 %v1463
      %v1528 = vunpack.c.l.b16 %v1464
      %v1529 = vunpack.c.l.b16 %v1465
      %v1530 = vunpack.c.l.b16 %v1466
      %v1531 = vunpack.c.l.b16 %v1467
      %v1532 = vunpack.c.l.b16 %v1468
      %v1533 = vunpack.c.l.b16 %v1469
      %v1534 = vunpack.c.l.b16 %v1470
      %v1535 = vunpack.c.l.b16 %v1471
      %v1536 = vunpack.c.l.b16 %v1472
      %v1537 = vunpack.c.l.b16 %v1473
      %v1538 = vunpack.c.l.b16 %v1474
      %v1539 = vunpack.c.l.b16 %v1475
      %v1540 = vunpack.c.l.b16 %v1476
      %v1541 = vunpack.c.l.b16 %v1477
      %v1542 = vunpack.c.l.b16 %v1478
      %v1543 = vunpack.c.l.b16 %v1479
      %v1544 = vunpack.c.l.b16 %v1480
      %v1545 = vunpack.c.l.b16 %v1481
      %v1546 = vunpack.c.l.b16 %v1482
      %v1547 = vunpack.c.l.b16 %v1483
      %v1548 = vunpack.c.l.b16 %v1484
      %v1549 = vunpack.c.l.b16 %v1485
      %v1550 = vunpack.c.l.b16 %v1486
      %v1551 = vpack.c.b16 %v1520, %v1519
      %v1552 = vpack.c.b16 %v1522, %v1521
      %v1553 = vpack.c.b16 %v1524, %v1523
      %v1554 = vpack.c.b16 %v1526, %v1525
      %v1555 = vpack.c.b16 %v1528, %v1527
      %v1556 = vpack.c.b16 %v1530, %v1529
      %v1557 = vpack.c.b16 %v1532, %v1531
      %v1558 = vpack.c.b16 %v1534, %v1533
      %v1559 = vpack.c.b16 %v1536, %v1535
      %v1560 = vpack.c.b16 %v1538, %v1537
      %v1561 = vpack.c.b16 %v1540, %v1539
      %v1562 = vpack.c.b16 %v1542, %v1541
      %v1563 = vpack.c.b16 %v1544, %v1543
      %v1564 = vpack.c.b16 %v1546, %v1545
      %v1565 = vpack.c.b16 %v1548, %v1547
      %v1566 = vpack.c.b16 %v1550, %v1549
      %1583 = vmatpush.bf16.msra.mxu0 %v1558
      %1584 = vmatpush.bf16.msra.mxu0 %v1557
      %1585 = vmatpush.bf16.msra.mxu0 %v1556
      %1586 = vmatpush.bf16.msra.mxu0 %v1555
      %1587 = vmatpush.bf16.msra.mxu0 %v1554
      %1588 = vmatpush.bf16.msra.mxu0 %v1553
      %1589 = vmatpush.bf16.msra.mxu0 %v1552
      %1590 = vmatpush.bf16.msra.mxu0 %v1551
      %1591 = vmatmul.bf16.gmra.mxu0 %v1450
      %v1592 = vpop.f32.mrf.mxu0
      %v1593 = vadd.f32 0.0, %v1592
      %v1594 = vpop.f32.mrf.mxu0
      %v1595 = vadd.f32 0.0, %v1594
      %1596 = vmatmul.bf16.gmra.mxu0 %v1452
      %v1597 = vpop.f32.mrf.mxu0
      %v1598 = vadd.f32 0.0, %v1597
      %v1599 = vpop.f32.mrf.mxu0
      %v1600 = vadd.f32 0.0, %v1599
      %1601 = vdwg.mxu0
      %1602 = vmatpush.bf16.msra.mxu0 %v1566
      %1603 = vmatpush.bf16.msra.mxu0 %v1565
      %1604 = vmatpush.bf16.msra.mxu0 %v1564
      %1605 = vmatpush.bf16.msra.mxu0 %v1563
      %1606 = vmatpush.bf16.msra.mxu0 %v1562
      %1607 = vmatpush.bf16.msra.mxu0 %v1561
      %1608 = vmatpush.bf16.msra.mxu0 %v1560
      %1609 = vmatpush.bf16.msra.mxu0 %v1559
      %1610 = vmatmul.bf16.gmra.mxu0 %v1451
      %v1611 = vpop.f32.mrf.mxu0
      %v1612 = vadd.f32 %v1593, %v1611
      %v1613 = vpop.f32.mrf.mxu0
      %v1614 = vadd.f32 %v1595, %v1613
      %1615 = vmatmul.bf16.gmra.mxu0 %v1453
      %v1616 = vpop.f32.mrf.mxu0
      %v1617 = vadd.f32 %v1598, %v1616
      %v1618 = vpop.f32.mrf.mxu0
      %v1619 = vadd.f32 %v1600, %v1618
      %1620 = vdwg.mxu0
      %v1653 = vunpack.c.l.b16 %v1380
      %v1654 = vunpack.c.l.b16 %v1381
      %v1655 = vunpack.c.l.b16 %v1382
      %v1656 = vunpack.c.l.b16 %v1383
      %v1657 = vunpack.c.l.b16 %v1384
      %v1658 = vunpack.c.l.b16 %v1385
      %v1659 = vunpack.c.l.b16 %v1386
      %v1660 = vunpack.c.l.b16 %v1387
      %v1661 = vunpack.c.l.b16 %v1388
      %v1662 = vunpack.c.l.b16 %v1389
      %v1663 = vunpack.c.l.b16 %v1390
      %v1664 = vunpack.c.l.b16 %v1391
      %v1665 = vunpack.c.l.b16 %v1392
      %v1666 = vunpack.c.l.b16 %v1393
      %v1667 = vunpack.c.l.b16 %v1394
      %v1668 = vunpack.c.l.b16 %v1395
      %v1669 = vunpack.c.l.b16 %v1396
      %v1670 = vunpack.c.l.b16 %v1397
      %v1671 = vunpack.c.l.b16 %v1398
      %v1672 = vunpack.c.l.b16 %v1399
      %v1673 = vunpack.c.l.b16 %v1400
      %v1674 = vunpack.c.l.b16 %v1401
      %v1675 = vunpack.c.l.b16 %v1402
      %v1676 = vunpack.c.l.b16 %v1403
      %v1677 = vunpack.c.l.b16 %v1404
      %v1678 = vunpack.c.l.b16 %v1405
      %v1679 = vunpack.c.l.b16 %v1406
      %v1680 = vunpack.c.l.b16 %v1407
      %v1681 = vunpack.c.l.b16 %v1408
      %v1682 = vunpack.c.l.b16 %v1409
      %v1683 = vunpack.c.l.b16 %v1410
      %v1684 = vunpack.c.l.b16 %v1411
      %v1685 = vpack.c.b16 %v1654, %v1653
      %v1686 = vpack.c.b16 %v1656, %v1655
      %v1687 = vpack.c.b16 %v1658, %v1657
      %v1688 = vpack.c.b16 %v1660, %v1659
      %v1689 = vpack.c.b16 %v1662, %v1661
      %v1690 = vpack.c.b16 %v1664, %v1663
      %v1691 = vpack.c.b16 %v1666, %v1665
      %v1692 = vpack.c.b16 %v1668, %v1667
      %v1693 = vpack.c.b16 %v1670, %v1669
      %v1694 = vpack.c.b16 %v1672, %v1671
      %v1695 = vpack.c.b16 %v1674, %v1673
      %v1696 = vpack.c.b16 %v1676, %v1675
      %v1697 = vpack.c.b16 %v1678, %v1677
      %v1698 = vpack.c.b16 %v1680, %v1679
      %v1699 = vpack.c.b16 %v1682, %v1681
      %v1700 = vpack.c.b16 %v1684, %v1683
      %1717 = vmatpush.bf16.msra.mxu0 %v1692
      %1718 = vmatpush.bf16.msra.mxu0 %v1691
      %1719 = vmatpush.bf16.msra.mxu0 %v1690
      %1720 = vmatpush.bf16.msra.mxu0 %v1689
      %1721 = vmatpush.bf16.msra.mxu0 %v1688
      %1722 = vmatpush.bf16.msra.mxu0 %v1687
      %1723 = vmatpush.bf16.msra.mxu0 %v1686
      %1724 = vmatpush.bf16.msra.mxu0 %v1685
      %1725 = vmatmul.bf16.gmra.mxu0 %v1376
      %v1726 = vpop.f32.mrf.mxu0
      %v1727 = vadd.f32 %v1612, %v1726
      %v1728 = vpop.f32.mrf.mxu0
      %v1729 = vadd.f32 %v1614, %v1728
      %1730 = vmatmul.bf16.gmra.mxu0 %v1378
      %v1731 = vpop.f32.mrf.mxu0
      %v1732 = vadd.f32 %v1617, %v1731
      %v1733 = vpop.f32.mrf.mxu0
      %v1734 = vadd.f32 %v1619, %v1733
      %1735 = vdwg.mxu0
      %1736 = vmatpush.bf16.msra.mxu0 %v1700
      %1737 = vmatpush.bf16.msra.mxu0 %v1699
      %1738 = vmatpush.bf16.msra.mxu0 %v1698
      %1739 = vmatpush.bf16.msra.mxu0 %v1697
      %1740 = vmatpush.bf16.msra.mxu0 %v1696
      %1741 = vmatpush.bf16.msra.mxu0 %v1695
      %1742 = vmatpush.bf16.msra.mxu0 %v1694
      %1743 = vmatpush.bf16.msra.mxu0 %v1693
      %1744 = vmatmul.bf16.gmra.mxu0 %v1377
      %v1745 = vpop.f32.mrf.mxu0
      %v1746 = vadd.f32 %v1727, %v1745
      %v1747 = vpop.f32.mrf.mxu0
      %v1748 = vadd.f32 %v1729, %v1747
      %1749 = vmatmul.bf16.gmra.mxu0 %v1379
      %v1750 = vpop.f32.mrf.mxu0
      %v1751 = vadd.f32 %v1732, %v1750
      %v1752 = vpop.f32.mrf.mxu0
      %v1753 = vadd.f32 %v1734, %v1752
      %1754 = vdwg.mxu0
      %1755 = vmatpush.bf16.msra.mxu0 0
      %1756 = vmatpush.bf16.msra.mxu0 0
      %1757 = vmatpush.bf16.msra.mxu0 0
      %1758 = vmatpush.bf16.msra.mxu0 0
      %1759 = vmatpush.bf16.msra.mxu0 0
      %1760 = vmatpush.bf16.msra.mxu0 0
      %1761 = vmatpush.bf16.msra.mxu0 %v1336
      %1762 = vmatpush.bf16.msra.mxu0 %v1334
      %1763 = vmatmul.bf16.gmra.mxu0 %v956
      %v1764 = vpop.f32.mrf.mxu0
      %v1765 = vadd.f32 0.0, %v1764
      %v1766 = vpop.f32.mrf.mxu0
      %v1767 = vadd.f32 0.0, %v1766
      %1768 = vmatmul.bf16.gmra.mxu0 %v959
      %v1769 = vpop.f32.mrf.mxu0
      %v1770 = vadd.f32 0.0, %v1769
      %v1771 = vpop.f32.mrf.mxu0
      %v1772 = vadd.f32 0.0, %v1771
      %1773 = vdwg.mxu0
      %1774 = vmatpush.bf16.msra.mxu0 0
      %1775 = vmatpush.bf16.msra.mxu0 0
      %1776 = vmatpush.bf16.msra.mxu0 0
      %1777 = vmatpush.bf16.msra.mxu0 0
      %1778 = vmatpush.bf16.msra.mxu0 0
      %1779 = vmatpush.bf16.msra.mxu0 0
      %1780 = vmatpush.bf16.msra.mxu0 %v1337
      %1781 = vmatpush.bf16.msra.mxu0 %v1335
      %1782 = vmatmul.bf16.gmra.mxu0 %v956
      %v1783 = vpop.f32.mrf.mxu0
      %v1784 = vadd.f32 0.0, %v1783
      %v1785 = vpop.f32.mrf.mxu0
      %v1786 = vadd.f32 0.0, %v1785
      %1787 = vmatmul.bf16.gmra.mxu0 %v959
      %v1788 = vpop.f32.mrf.mxu0
      %v1789 = vadd.f32 0.0, %v1788
      %v1790 = vpop.f32.mrf.mxu0
      %v1791 = vadd.f32 0.0, %v1790
      %1792 = vdwg.mxu0
      %v1793 = vpack.c.bf16 %v1767, %v1765
      %v1794 = vpack.c.bf16 %v1786, %v1784
      %v1795 = vpack.c.bf16 %v1772, %v1770
      %v1796 = vpack.c.bf16 %v1791, %v1789
      %s1797 = scalar_lea.vmem %s4, 256
      %v1798 = vld [vmem:[%s1797] sm:$0xf]
      %v1799 = vld [vmem:[%s1797 + $0x4] sm:$0xf]
      %v1800 = vld [vmem:[%s1797 + $0x8] sm:$0xf]
      %v1801 = vld [vmem:[%s1797 + $0xc] sm:$0xf]
      %v1802 = vld [vmem:[%s1797 + $0x10] sm:$0xf]
      %v1803 = vld [vmem:[%s1797 + $0x14] sm:$0xf]
      %v1804 = vld [vmem:[%s1797 + $0x18] sm:$0xf]
      %v1805 = vld [vmem:[%s1797 + $0x1c] sm:$0xf]
      %v1806 = vld [vmem:[%s1797 + $0x20] sm:$0xf]
      %v1807 = vld [vmem:[%s1797 + $0x24] sm:$0xf]
      %v1808 = vld [vmem:[%s1797 + $0x28] sm:$0xf]
      %v1809 = vld [vmem:[%s1797 + $0x2c] sm:$0xf]
      %v1810 = vld [vmem:[%s1797 + $0x30] sm:$0xf]
      %v1811 = vld [vmem:[%s1797 + $0x34] sm:$0xf]
      %v1812 = vld [vmem:[%s1797 + $0x38] sm:$0xf]
      %v1813 = vld [vmem:[%s1797 + $0x3c] sm:$0xf]
      %v1814 = vld [vmem:[%s1797 + $0x40] sm:$0xf]
      %v1815 = vld [vmem:[%s1797 + $0x44] sm:$0xf]
      %v1816 = vld [vmem:[%s1797 + $0x48] sm:$0xf]
      %v1817 = vld [vmem:[%s1797 + $0x4c] sm:$0xf]
      %v1818 = vld [vmem:[%s1797 + $0x50] sm:$0xf]
      %v1819 = vld [vmem:[%s1797 + $0x54] sm:$0xf]
      %v1820 = vld [vmem:[%s1797 + $0x58] sm:$0xf]
      %v1821 = vld [vmem:[%s1797 + $0x5c] sm:$0xf]
      %v1822 = vld [vmem:[%s1797 + $0x60] sm:$0xf]
      %v1823 = vld [vmem:[%s1797 + $0x64] sm:$0xf]
      %v1824 = vld [vmem:[%s1797 + $0x68] sm:$0xf]
      %v1825 = vld [vmem:[%s1797 + $0x6c] sm:$0xf]
      %v1826 = vld [vmem:[%s1797 + $0x70] sm:$0xf]
      %v1827 = vld [vmem:[%s1797 + $0x74] sm:$0xf]
      %v1828 = vld [vmem:[%s1797 + $0x78] sm:$0xf]
      %v1829 = vld [vmem:[%s1797 + $0x7c] sm:$0xf]
      %v1862 = vunpack.c.l.b16 %v1798
      %v1863 = vunpack.c.l.b16 %v1799
      %v1864 = vunpack.c.l.b16 %v1800
      %v1865 = vunpack.c.l.b16 %v1801
      %v1866 = vunpack.c.l.b16 %v1802
      %v1867 = vunpack.c.l.b16 %v1803
      %v1868 = vunpack.c.l.b16 %v1804
      %v1869 = vunpack.c.l.b16 %v1805
      %v1870 = vunpack.c.l.b16 %v1806
      %v1871 = vunpack.c.l.b16 %v1807
      %v1872 = vunpack.c.l.b16 %v1808
      %v1873 = vunpack.c.l.b16 %v1809
      %v1874 = vunpack.c.l.b16 %v1810
      %v1875 = vunpack.c.l.b16 %v1811
      %v1876 = vunpack.c.l.b16 %v1812
      %v1877 = vunpack.c.l.b16 %v1813
      %v1878 = vunpack.c.l.b16 %v1814
      %v1879 = vunpack.c.l.b16 %v1815
      %v1880 = vunpack.c.l.b16 %v1816
      %v1881 = vunpack.c.l.b16 %v1817
      %v1882 = vunpack.c.l.b16 %v1818
      %v1883 = vunpack.c.l.b16 %v1819
      %v1884 = vunpack.c.l.b16 %v1820
      %v1885 = vunpack.c.l.b16 %v1821
      %v1886 = vunpack.c.l.b16 %v1822
      %v1887 = vunpack.c.l.b16 %v1823
      %v1888 = vunpack.c.l.b16 %v1824
      %v1889 = vunpack.c.l.b16 %v1825
      %v1890 = vunpack.c.l.b16 %v1826
      %v1891 = vunpack.c.l.b16 %v1827
      %v1892 = vunpack.c.l.b16 %v1828
      %v1893 = vunpack.c.l.b16 %v1829
      %v1894 = vpack.c.b16 %v1863, %v1862
      %v1895 = vpack.c.b16 %v1865, %v1864
      %v1896 = vpack.c.b16 %v1867, %v1866
      %v1897 = vpack.c.b16 %v1869, %v1868
      %v1898 = vpack.c.b16 %v1871, %v1870
      %v1899 = vpack.c.b16 %v1873, %v1872
      %v1900 = vpack.c.b16 %v1875, %v1874
      %v1901 = vpack.c.b16 %v1877, %v1876
      %v1902 = vpack.c.b16 %v1879, %v1878
      %v1903 = vpack.c.b16 %v1881, %v1880
      %v1904 = vpack.c.b16 %v1883, %v1882
      %v1905 = vpack.c.b16 %v1885, %v1884
      %v1906 = vpack.c.b16 %v1887, %v1886
      %v1907 = vpack.c.b16 %v1889, %v1888
      %v1908 = vpack.c.b16 %v1891, %v1890
      %v1909 = vpack.c.b16 %v1893, %v1892
      %1926 = vmatpush.bf16.msra.mxu0 %v1901
      %1927 = vmatpush.bf16.msra.mxu0 %v1900
      %1928 = vmatpush.bf16.msra.mxu0 %v1899
      %1929 = vmatpush.bf16.msra.mxu0 %v1898
      %1930 = vmatpush.bf16.msra.mxu0 %v1897
      %1931 = vmatpush.bf16.msra.mxu0 %v1896
      %1932 = vmatpush.bf16.msra.mxu0 %v1895
      %1933 = vmatpush.bf16.msra.mxu0 %v1894
      %1934 = vmatmul.bf16.gmra.mxu0 %v1793
      %v1935 = vpop.f32.mrf.mxu0
      %v1936 = vadd.f32 0.0, %v1935
      %v1937 = vpop.f32.mrf.mxu0
      %v1938 = vadd.f32 0.0, %v1937
      %1939 = vmatmul.bf16.gmra.mxu0 %v1795
      %v1940 = vpop.f32.mrf.mxu0
      %v1941 = vadd.f32 0.0, %v1940
      %v1942 = vpop.f32.mrf.mxu0
      %v1943 = vadd.f32 0.0, %v1942
      %1944 = vdwg.mxu0
      %1945 = vmatpush.bf16.msra.mxu0 %v1909
      %1946 = vmatpush.bf16.msra.mxu0 %v1908
      %1947 = vmatpush.bf16.msra.mxu0 %v1907
      %1948 = vmatpush.bf16.msra.mxu0 %v1906
      %1949 = vmatpush.bf16.msra.mxu0 %v1905
      %1950 = vmatpush.bf16.msra.mxu0 %v1904
      %1951 = vmatpush.bf16.msra.mxu0 %v1903
      %1952 = vmatpush.bf16.msra.mxu0 %v1902
      %1953 = vmatmul.bf16.gmra.mxu0 %v1794
      %v1954 = vpop.f32.mrf.mxu0
      %v1955 = vadd.f32 %v1936, %v1954
      %v1956 = vpop.f32.mrf.mxu0
      %v1957 = vadd.f32 %v1938, %v1956
      %1958 = vmatmul.bf16.gmra.mxu0 %v1796
      %v1959 = vpop.f32.mrf.mxu0
      %v1960 = vadd.f32 %v1941, %v1959
      %v1961 = vpop.f32.mrf.mxu0
      %v1962 = vadd.f32 %v1943, %v1961
      %1963 = vdwg.mxu0
      %v1964 = vadd.f32 %v1746, %v1955
      %v1965 = vadd.f32 %v1748, %v1957
      %v1966 = vadd.f32 %v1751, %v1960
      %v1967 = vadd.f32 %v1753, %v1962
      %v1968 = vld [vmem:[%s5] sm:$0x1]
      %v1970 = vperm.slane %v1968, 0
      %v1972 = vadd.f32 %v1964, %v1970
      %v1973 = vadd.f32 %v1965, %v1970
      %v1974 = vadd.f32 %v1966, %v1970
      %v1975 = vadd.f32 %v1967, %v1970
      %1976 = vst [vmem:[%s251] sm:$0xff] %v1972
      %1977 = vst [vmem:[%s251 + $0x8] sm:$0xff] %v1973
      %1978 = vst [vmem:[%s251 + $0x10] sm:$0xff] %v1974
      %1979 = vst [vmem:[%s251 + $0x18] sm:$0xff] %v1975
      %p1980 = scmp.lt.s32.totalorder %s17, 1
      %s1981 = scalar_select %p1980, %s17, 1
      %s1982 = smul.addr %s1981, 4
      %s1983 = smul.addr %s1982, 8
      %s1984 = scalar_lea.vmem %s6, %s1983
      // Predicated region
      $region45: #{decoder_forward.3} parent=43 // pred_check
        %p1985 = pneg %p166
      $region46: #{decoder_forward.3} parent=43 // pred_check_branch
        %1987 = sbr.rel (%p1985) target = $region48
      $region47: #{decoder_forward.3} parent=43 // pred_region
        _
      $region48: #{decoder_forward.3} parent=43 // pred_fallthru
        _
    $region44: #{decoder_forward.3} parent=5 // pred_fallthru
      _
    %p1988 = scmp.le.s32.totalorder 2, %s12
    // Predicated region
    $region49: #{decoder_forward.3} parent=5 // pred_check
      %p1989 = pneg %p1988
    $region50: #{decoder_forward.3} parent=5 // pred_check_branch
      %1991 = sbr.rel (%p1989) target = $region52
    $region51: #{decoder_forward.3} parent=5 // pred_region
      %s1992 = ssub.s32 %s12, 2
      // Predicated region
      $region53: #{decoder_forward.3} parent=51 // pred_check
        %p1993 = pneg %p172
      $region54: #{decoder_forward.3} parent=51 // pred_check_branch
        %1995 = sbr.rel (%p1993) target = $region56
      $region55: #{decoder_forward.3} parent=51 // pred_region
        %p1996 = scmp.lt.s32.totalorder %s18, 1
        %s1997 = scalar_select %p1996, %s18, 1
        %s1998 = smul.addr %s1997, 4
        %s1999 = smul.addr %s1998, 8
        %s2000 = scalar_lea.vmem %s6, %s1999
      $region56: #{decoder_forward.3} parent=51 // pred_fallthru
        _
    $region52: #{decoder_forward.3} parent=5 // pred_fallthru
      _
  $region6: #{decoder_forward.3} parent=0 // loop_footer
    %s16 = sadd.s32 1, %s12
  $region7: #{decoder_forward.3} parent=0 // loop_footer_branch
    %11 = sbr.rel target = $region3
  $region8: #{decoder_forward.3} parent=0 // loop_exit
    _

</llo_original>
